<compile_context>
chip_gen: v7x
topology: tpu7x:2x2x1
jax: 0.10.0
libtpu: 0.0.40
codegen_flags: <defaults>
</compile_context>

<pallas_src>
import jax
import jax.numpy as jnp
from jax import lax
from jax.experimental import pallas as pl
from jax.experimental.pallas import tpu as pltpu

EMB = 128                       # NCF.embedding_size
HIDDEN = (64, 32, 16, 8)        # NCF hidden_layers default


def _ncf_kernel(uid_ref, mid_ref,                       # scalar prefetch (SMEM): (Bp,) int32 each
                utab_hbm, mtab_hbm,                     # fused HBM tables (pl.ANY): (Nu,2D), (Nm,2D)
                gmf_w_ref,                              # (1,128)  GMF head weight row
                w1u_ref, w1m_ref, b1_ref,               # (128,64), (128,64), (1,64)
                w2_ref, b2_ref,                         # (64,32), (1,32)
                w3_ref, b3_ref,                         # (32,16), (1,16)
                w4_ref, b4_ref,                         # (16,8),  (1,8)
                wfm_ref,                                # (1,8)    final_mlp weight row
                scal_ref,                               # SMEM (8,) f32: [gmf_b, fm_b, fin_b, fin_w0, fin_w1, ...]
                o_ref,                                  # (TB,1) output block
                ubuf, mbuf, sems):                      # scratch: 2 x (2,TB,2D) VMEM, DMA sems (2,2)
    c = pl.program_id(0)                                # core-split axis ("parallel")
    j = pl.program_id(1)                                # per-core block axis ("arbitrary")
    npc = pl.num_programs(1)
    TB = ubuf.shape[1]
    D = gmf_w_ref.shape[1]
    slot = j % 2

    # ---- issue all 2*TB fused-row gathers of block `blk` into double-buffer slot `s` ----
    def issue_block(blk, s):
        base = blk * TB

        def body(r, carry):
            u = uid_ref[base + r]
            m = mid_ref[base + r]
            pltpu.make_async_copy(utab_hbm.at[pl.ds(u, 1), :],
                                  ubuf.at[s, pl.ds(r, 1), :],
                                  sems.at[0, s]).start()
            pltpu.make_async_copy(mtab_hbm.at[pl.ds(m, 1), :],
                                  mbuf.at[s, pl.ds(r, 1), :],
                                  sems.at[1, s]).start()
            return carry

        lax.fori_loop(0, TB, body, 0, unroll=8)

    # Prime the pipeline on this core's first block.
    @pl.when(j == 0)
    def _():
        issue_block(c * npc, slot)

    # Issue next block's gathers before computing the current one (cross-step overlap).
    @pl.when(j + 1 < npc)
    def _():
        issue_block(c * npc + j + 1, 1 - slot)

    # ---- aggregate wait: one byte-count-matched wait per semaphore (covers TB rows) ----
    pltpu.make_async_copy(mbuf.at[slot], ubuf.at[slot], sems.at[0, slot]).wait()
    pltpu.make_async_copy(ubuf.at[slot], mbuf.at[slot], sems.at[1, slot]).wait()

    # Split the fused (TB, 2D) rows into GMF / MLP halves (lane slices aligned to 128).
    u_gmf = ubuf[slot, :, :D]
    u_mlp = ubuf[slot, :, D:]
    m_gmf = mbuf[slot, :, :D]
    m_mlp = mbuf[slot, :, D:]

    # ---- GMF head: VPU multiply + lane reduction (no (.,1) MXU matmul) ----
    gmf_out = jnp.sum(u_gmf * m_gmf * gmf_w_ref[...], axis=-1, keepdims=True) + scal_ref[0]

    # ---- MLP tower: cat([u_mlp, m_mlp]) @ W1 split into two matmuls (no concat) ----
    h = jnp.dot(u_mlp, w1u_ref[...], preferred_element_type=jnp.float32)
    h = h + jnp.dot(m_mlp, w1m_ref[...], preferred_element_type=jnp.float32)
    h = jnp.maximum(h + b1_ref[...], 0.0)
    h = jnp.maximum(jnp.dot(h, w2_ref[...], preferred_element_type=jnp.float32) + b2_ref[...], 0.0)
    h = jnp.maximum(jnp.dot(h, w3_ref[...], preferred_element_type=jnp.float32) + b3_ref[...], 0.0)
    h = jnp.maximum(jnp.dot(h, w4_ref[...], preferred_element_type=jnp.float32) + b4_ref[...], 0.0)

    # ---- final_mlp head (8 -> 1): VPU multiply + lane-reduce ----
    mlp_out = jnp.sum(h * wfm_ref[...], axis=-1, keepdims=True) + scal_ref[1]

    # ---- final Linear(2 -> 1), fused with SMEM scalars ----
    o_ref[...] = (scal_ref[3] * gmf_out + scal_ref[4] * mlp_out + scal_ref[2]).astype(o_ref.dtype)


def _round_up(x, m):
    return (x + m - 1) // m * m


def _cdiv(a, b):
    return -(-a // b)


def prepare_params(ue_gmf, me_gmf, ue_mlp, me_mlp,
                   gmf_w, gmf_b, w1, b1, w2, b2, w3, b3, w4, b4,
                   wfm, bfm, wfin, bfin):
    """One-time param prep (model load): fuse tables, lane-dense weight layouts."""
    D = ue_gmf.shape[1]
    H1, H2, H3, H4 = HIDDEN
    # Fused per-entity tables: [gmf || mlp] -> one 1 KiB row gather per id.
    utab = jnp.concatenate([ue_gmf, ue_mlp], axis=1).astype(jnp.float32)   # (Nu, 2D)
    mtab = jnp.concatenate([me_gmf, me_mlp], axis=1).astype(jnp.float32)   # (Nm, 2D)

    gmf_w_row = gmf_w.reshape(1, D).astype(jnp.float32)                    # (1,128)
    w1u = w1[:, :D].T.astype(jnp.float32)                                  # (128,64) user half
    w1m = w1[:, D:].T.astype(jnp.float32)                                  # (128,64) movie half
    b1r = b1.reshape(1, H1).astype(jnp.float32)
    w2t = w2.T.astype(jnp.float32)
    b2r = b2.reshape(1, H2).astype(jnp.float32)
    w3t = w3.T.astype(jnp.float32)
    b3r = b3.reshape(1, H3).astype(jnp.float32)
    w4t = w4.T.astype(jnp.float32)
    b4r = b4.reshape(1, H4).astype(jnp.float32)
    wfm_row = wfm.reshape(1, H4).astype(jnp.float32)                       # (1,8)

    # Scalar params in SMEM: [gmf_b, final_mlp_b, final_b, final_w0, final_w1, pad...]
    wfin_f = wfin.reshape(-1).astype(jnp.float32)
    scal = jnp.stack([
        gmf_b.reshape(()).astype(jnp.float32),
        bfm.reshape(()).astype(jnp.float32),
        bfin.reshape(()).astype(jnp.float32),
        wfin_f[0], wfin_f[1],
        jnp.float32(0.0), jnp.float32(0.0), jnp.float32(0.0),
    ])
    return (utab, mtab, gmf_w_row, w1u, w1m, b1r, w2t, b2r, w3t, b3r, w4t, b4r,
            wfm_row, scal)


@jax.jit
def ncf_forward(X, user_map_table, params):
    """X: (B, 2) int32 with columns [raw_user_id, movie_id]; params from prepare_params."""
    (utab, mtab, gmf_w_row, w1u, w1m, b1r, w2t, b2r, w3t, b3r, w4t, b4r,
     wfm_row, scal) = params

    raw_users = X[:, 0].astype(jnp.int32)
    movies = X[:, 1].astype(jnp.int32)
    uid = user_map_table[raw_users].astype(jnp.int32)   # dict lookup -> dense table

    B = X.shape[0]
    D2 = utab.shape[1]
    D = D2 // 2
    H1 = b1r.shape[1]
    H2 = b2r.shape[1]
    H3 = b3r.shape[1]
    H4 = b4r.shape[1]

    # Batch tiling: TB rows per block (cap 512); pick TB so that there are >= 2
    # blocks whenever possible (v7x megacore on the "parallel" core axis).
    TB = min(_round_up(_cdiv(B, 2), 8), 512)
    nblk = _cdiv(B, TB)
    ncore = 2 if nblk >= 2 else 1            # outer "parallel" axis (both TCs on v7x)
    npc = _cdiv(nblk, ncore)                 # blocks per core (inner "arbitrary" axis)
    Bp = ncore * npc * TB
    uid_p = jnp.pad(uid, (0, Bp - B))
    mid_p = jnp.pad(movies, (0, Bp - B))

    out_p = pl.pallas_call(
        _ncf_kernel,
        out_shape=jax.ShapeDtypeStruct((Bp, 1), jnp.float32),
        grid_spec=pltpu.PrefetchScalarGridSpec(
            num_scalar_prefetch=2,
            grid=(ncore, npc),
            in_specs=[
                pl.BlockSpec(memory_space=pl.ANY),                      # fused user table (HBM)
                pl.BlockSpec(memory_space=pl.ANY),                      # fused movie table (HBM)
                pl.BlockSpec((1, D), lambda c, j, u, m: (0, 0)),        # gmf weight row
                pl.BlockSpec((D, H1), lambda c, j, u, m: (0, 0)),       # W1 user half
                pl.BlockSpec((D, H1), lambda c, j, u, m: (0, 0)),       # W1 movie half
                pl.BlockSpec((1, H1), lambda c, j, u, m: (0, 0)),       # b1
                pl.BlockSpec((H1, H2), lambda c, j, u, m: (0, 0)),      # W2
                pl.BlockSpec((1, H2), lambda c, j, u, m: (0, 0)),       # b2
                pl.BlockSpec((H2, H3), lambda c, j, u, m: (0, 0)),      # W3
                pl.BlockSpec((1, H3), lambda c, j, u, m: (0, 0)),       # b3
                pl.BlockSpec((H3, H4), lambda c, j, u, m: (0, 0)),      # W4
                pl.BlockSpec((1, H4), lambda c, j, u, m: (0, 0)),       # b4
                pl.BlockSpec((1, H4), lambda c, j, u, m: (0, 0)),       # final_mlp weight row
                pl.BlockSpec(memory_space=pltpu.MemorySpace.SMEM),      # scalar params
            ],
            out_specs=pl.BlockSpec((TB, 1), lambda c, j, u, m: (c * npc + j, 0)),
            scratch_shapes=[
                pltpu.VMEM((2, TB, D2), jnp.float32),   # fused user rows, 2 slots
                pltpu.VMEM((2, TB, D2), jnp.float32),   # fused movie rows, 2 slots
                pltpu.SemaphoreType.DMA((2, 2)),        # [entity, slot]
            ]),
        compiler_params=pltpu.CompilerParams(
            dimension_semantics=("parallel", "arbitrary")),
    )(uid_p, mid_p, utab, mtab,
      gmf_w_row, w1u, w1m, b1r, w2t, b2r, w3t, b3r, w4t, b4r, wfm_row, scal)

    return out_p[:B]


def _ref_forward(X, user_map_table, ue_gmf, me_gmf, ue_mlp, me_mlp,
                 gmf_w, gmf_b, w1, b1, w2, b2, w3, b3, w4, b4,
                 wfm, bfm, wfin, bfin):
    """Pure-JAX reference matching the PyTorch forward."""
    uid = user_map_table[X[:, 0].astype(jnp.int32)]
    mid = X[:, 1].astype(jnp.int32)
    gmf_out = (ue_gmf[uid] * me_gmf[mid]) @ gmf_w.T + gmf_b
    h = jnp.concatenate([ue_mlp[uid], me_mlp[mid]], axis=-1)
    h = jax.nn.relu(h @ w1.T + b1)
    h = jax.nn.relu(h @ w2.T + b2)
    h = jax.nn.relu(h @ w3.T + b3)
    h = jax.nn.relu(h @ w4.T + b4)
    mlp_out = h @ wfm.T + bfm
    fin_in = jnp.concatenate([gmf_out, mlp_out], axis=-1)
    return fin_in @ wfin.T + bfin


if __name__ == "__main__":
    key = jax.random.PRNGKey(0)
    ks = jax.random.split(key, 20)

    # Small demo vocabularies (the real NCF uses 480190 users / 17771 movies;
    # the kernel is vocab-size agnostic since the fused tables stay in HBM).
    N_USERS, N_MOVIES, D = 1024, 512, EMB
    H1, H2, H3, H4 = HIDDEN

    ue_gmf = jax.random.normal(ks[0], (N_USERS, D), jnp.float32)
    me_gmf = jax.random.normal(ks[1], (N_MOVIES, D), jnp.float32)
    ue_mlp = jax.random.normal(ks[2], (N_USERS, D), jnp.float32)
    me_mlp = jax.random.normal(ks[3], (N_MOVIES, D), jnp.float32)

    def lin(kw, kb, out_f, in_f):
        bound = 1.0 / (in_f ** 0.5)
        w = jax.random.uniform(kw, (out_f, in_f), jnp.float32, -bound, bound)
        b = jax.random.uniform(kb, (out_f,), jnp.float32, -bound, bound)
        return w, b

    gmf_w, gmf_b = lin(ks[4], ks[5], 1, D)            # gmf: Linear(128,1)
    w1, b1 = lin(ks[6], ks[7], H1, 2 * D)             # mlp[0]: Linear(256,64)
    w2, b2 = lin(ks[8], ks[9], H2, H1)                # Linear(64,32)
    w3, b3 = lin(ks[10], ks[11], H3, H2)              # Linear(32,16)
    w4, b4 = lin(ks[12], ks[13], H4, H3)              # Linear(16,8)
    wfm, bfm = lin(ks[14], ks[15], 1, H4)             # final_mlp: Linear(8,1)
    wfin, bfin = lin(ks[16], ks[17], 1, 2)            # final: Linear(2,1)

    # Synthetic user_id_mapping: raw ids with gaps (raw = 7*compact + 3),
    # materialized as a dense int32 lookup table raw_id -> compact_id.
    raw_of_compact = jnp.arange(N_USERS, dtype=jnp.int32) * 7 + 3
    max_raw = int(N_USERS - 1) * 7 + 3
    user_map_table = jnp.zeros((max_raw + 1,), jnp.int32).at[raw_of_compact].set(
        jnp.arange(N_USERS, dtype=jnp.int32))

    # Example batch: X is (B, 2) = [raw_user_id, movie_id]
    B = 8
    compact_users = jax.random.randint(ks[18], (B,), 0, N_USERS, jnp.int32)
    raw_users = compact_users * 7 + 3
    movies = jax.random.randint(ks[19], (B,), 0, N_MOVIES, jnp.int32)
    X = jnp.stack([raw_users, movies], axis=1)        # (8, 2) int32

    params = prepare_params(ue_gmf, me_gmf, ue_mlp, me_mlp,
                            gmf_w, gmf_b, w1, b1, w2, b2, w3, b3, w4, b4,
                            wfm, bfm, wfin, bfin)

    out = ncf_forward(X, user_map_table, params)
    out = jax.block_until_ready(out)

    ref = _ref_forward(X, user_map_table, ue_gmf, me_gmf, ue_mlp, me_mlp,
                       gmf_w, gmf_b, w1, b1, w2, b2, w3, b3, w4, b4,
                       wfm, bfm, wfin, bfin)

    assert out.shape == (B, 1), out.shape
    assert jnp.allclose(out, ref, atol=2e-3, rtol=2e-3), (out, ref)

    print("KERNEL_OK")
</pallas_src>

<mosaic_0001>
module attributes {stable_mosaic.version = 11 : i64} {
  func.func @_ncf_kernel(%arg0: i32, %arg1: i32, %arg2: memref<8xi32, #tpu.memory_space<smem>>, %arg3: memref<8xi32, #tpu.memory_space<smem>>, %arg4: memref<1024x256xf32, #tpu.memory_space<any>>, %arg5: memref<512x256xf32, #tpu.memory_space<any>>, %arg6: memref<1x128xf32, #tpu.memory_space<vmem>>, %arg7: memref<128x64xf32, #tpu.memory_space<vmem>>, %arg8: memref<128x64xf32, #tpu.memory_space<vmem>>, %arg9: memref<1x64xf32, #tpu.memory_space<vmem>>, %arg10: memref<64x32xf32, #tpu.memory_space<vmem>>, %arg11: memref<1x32xf32, #tpu.memory_space<vmem>>, %arg12: memref<32x16xf32, #tpu.memory_space<vmem>>, %arg13: memref<1x16xf32, #tpu.memory_space<vmem>>, %arg14: memref<16x8xf32, #tpu.memory_space<vmem>>, %arg15: memref<1x8xf32, #tpu.memory_space<vmem>>, %arg16: memref<1x8xf32, #tpu.memory_space<vmem>>, %arg17: memref<8xf32, #tpu.memory_space<smem>>, %arg18: memref<8x1xf32, #tpu.memory_space<vmem>>, %arg19: memref<2x8x256xf32, #tpu.memory_space<vmem>>, %arg20: memref<2x8x256xf32, #tpu.memory_space<vmem>>, %arg21: memref<2x2x!tpu.dma_semaphore, #tpu.memory_space<semaphore_mem>>) attributes {dimension_semantics = [#tpu.dimension_semantics<parallel>, #tpu.dimension_semantics<arbitrary>], iteration_bounds = array<i64: 1, 1>, scalar_prefetch = 2 : i64, scratch_operands = 3 : i64, tpu.core_type = #tpu.core_type<tc>, window_params = [{}, {}, {pipeline_mode = #tpu.pipeline_mode<synchronous>, transform_indices = @transform_2, window_bounds = array<i64: 1, 128>}, {pipeline_mode = #tpu.pipeline_mode<synchronous>, transform_indices = @transform_3, window_bounds = array<i64: 128, 64>}, {pipeline_mode = #tpu.pipeline_mode<synchronous>, transform_indices = @transform_4, window_bounds = array<i64: 128, 64>}, {pipeline_mode = #tpu.pipeline_mode<synchronous>, transform_indices = @transform_5, window_bounds = array<i64: 1, 64>}, {pipeline_mode = #tpu.pipeline_mode<synchronous>, transform_indices = @transform_6, window_bounds = array<i64: 64, 32>}, {pipeline_mode = #tpu.pipeline_mode<synchronous>, transform_indices = @transform_7, window_bounds = array<i64: 1, 32>}, {pipeline_mode = #tpu.pipeline_mode<synchronous>, transform_indices = @transform_8, window_bounds = array<i64: 32, 16>}, {pipeline_mode = #tpu.pipeline_mode<synchronous>, transform_indices = @transform_9, window_bounds = array<i64: 1, 16>}, {pipeline_mode = #tpu.pipeline_mode<synchronous>, transform_indices = @transform_10, window_bounds = array<i64: 16, 8>}, {pipeline_mode = #tpu.pipeline_mode<synchronous>, transform_indices = @transform_11, window_bounds = array<i64: 1, 8>}, {pipeline_mode = #tpu.pipeline_mode<synchronous>, transform_indices = @transform_12, window_bounds = array<i64: 1, 8>}, {transform_indices = @transform_13, window_bounds = array<i64: 8>}, {transform_indices = @transform_14, window_bounds = array<i64: 8, 1>}]} {
    %c2_i32 = arith.constant 2 : i32
    %c0_i32 = arith.constant 0 : i32
    %0 = arith.cmpi eq, %c2_i32, %c0_i32 : i32
    %c1_i32 = arith.constant 1 : i32
    %1 = arith.select %0, %c1_i32, %c2_i32 : i32
    %2 = arith.remsi %arg1, %1 : i32
    %c0_i32_0 = arith.constant 0 : i32
    %3 = arith.cmpi ne, %2, %c0_i32_0 : i32
    %c0_i32_1 = arith.constant 0 : i32
    %4 = arith.cmpi slt, %2, %c0_i32_1 : i32
    %c0_i32_2 = arith.constant 0 : i32
    %5 = arith.cmpi slt, %1, %c0_i32_2 : i32
    %6 = arith.xori %4, %5 : i1
    %7 = arith.andi %6, %3 : i1
    %8 = arith.addi %2, %1 : i32
    %9 = arith.select %7, %8, %2 : i32
    %c0_i32_3 = arith.constant 0 : i32
    %10 = arith.cmpi eq, %arg1, %c0_i32_3 : i32
    %11 = arith.extui %10 : i1 to i32
    %c0_i32_4 = arith.constant 0 : i32
    %12 = arith.cmpi ne, %11, %c0_i32_4 : i32
    scf.if %12 {
      %c1_i32_59 = arith.constant 1 : i32
      %100 = arith.muli %arg0, %c1_i32_59 : i32
      %c8_i32 = arith.constant 8 : i32
      %101 = arith.muli %100, %c8_i32 : i32
      %c0_i32_60 = arith.constant 0 : i32
      %102 = arith.addi %101, %c0_i32_60 : i32
      %103 = arith.index_cast %102 : i32 to index
      %104 = memref.load %arg2[%103] : memref<8xi32, #tpu.memory_space<smem>>
      %105 = arith.addi %101, %c0_i32_60 : i32
      %106 = arith.index_cast %105 : i32 to index
      %107 = memref.load %arg3[%106] : memref<8xi32, #tpu.memory_space<smem>>
      %c0_i32_61 = arith.constant 0 : i32
      %c0_i32_62 = arith.constant 0 : i32
      %108 = tpu.memref_slice %arg4[%104, %c0_i32_62] : memref<1024x256xf32, #tpu.memory_space<any>> -> memref<1x256xf32, #tpu.memory_space<any>>
      %c0_i32_63 = arith.constant 0 : i32
      %109 = tpu.memref_slice %arg19[%9, %c0_i32_60, %c0_i32_63] : memref<2x8x256xf32, #tpu.memory_space<vmem>> -> memref<1x1x256xf32, #tpu.memory_space<vmem>>
      %110 = tpu.memref_squeeze %109 : memref<1x1x256xf32, #tpu.memory_space<vmem>> -> memref<1x256xf32, #tpu.memory_space<vmem>>
      %111 = tpu.memref_slice %arg21[%c0_i32_61, %9] : memref<2x2x!tpu.dma_semaphore, #tpu.memory_space<semaphore_mem>> -> memref<1x1x!tpu.dma_semaphore, #tpu.memory_space<semaphore_mem>>
      %112 = tpu.memref_squeeze %111 : memref<1x1x!tpu.dma_semaphore, #tpu.memory_space<semaphore_mem>> -> memref<!tpu.dma_semaphore, #tpu.memory_space<semaphore_mem>>
      tpu.enqueue_dma source(%108 : memref<1x256xf32, #tpu.memory_space<any>>) target(%110 : memref<1x256xf32, #tpu.memory_space<vmem>>) target_semaphore(%112 : memref<!tpu.dma_semaphore, #tpu.memory_space<semaphore_mem>>)
      %c1_i32_64 = arith.constant 1 : i32
      %c0_i32_65 = arith.constant 0 : i32
      %113 = tpu.memref_slice %arg5[%107, %c0_i32_65] : memref<512x256xf32, #tpu.memory_space<any>> -> memref<1x256xf32, #tpu.memory_space<any>>
      %c0_i32_66 = arith.constant 0 : i32
      %114 = tpu.memref_slice %arg20[%9, %c0_i32_60, %c0_i32_66] : memref<2x8x256xf32, #tpu.memory_space<vmem>> -> memref<1x1x256xf32, #tpu.memory_space<vmem>>
      %115 = tpu.memref_squeeze %114 : memref<1x1x256xf32, #tpu.memory_space<vmem>> -> memref<1x256xf32, #tpu.memory_space<vmem>>
      %116 = tpu.memref_slice %arg21[%c1_i32_64, %9] : memref<2x2x!tpu.dma_semaphore, #tpu.memory_space<semaphore_mem>> -> memref<1x1x!tpu.dma_semaphore, #tpu.memory_space<semaphore_mem>>
      %117 = tpu.memref_squeeze %116 : memref<1x1x!tpu.dma_semaphore, #tpu.memory_space<semaphore_mem>> -> memref<!tpu.dma_semaphore, #tpu.memory_space<semaphore_mem>>
      tpu.enqueue_dma source(%113 : memref<1x256xf32, #tpu.memory_space<any>>) target(%115 : memref<1x256xf32, #tpu.memory_space<vmem>>) target_semaphore(%117 : memref<!tpu.dma_semaphore, #tpu.memory_space<semaphore_mem>>)
      %c1_i32_67 = arith.constant 1 : i32
      %118 = arith.addi %101, %c1_i32_67 : i32
      %119 = arith.index_cast %118 : i32 to index
      %120 = memref.load %arg2[%119] : memref<8xi32, #tpu.memory_space<smem>>
      %121 = arith.addi %101, %c1_i32_67 : i32
      %122 = arith.index_cast %121 : i32 to index
      %123 = memref.load %arg3[%122] : memref<8xi32, #tpu.memory_space<smem>>
      %c0_i32_68 = arith.constant 0 : i32
      %c0_i32_69 = arith.constant 0 : i32
      %124 = tpu.memref_slice %arg4[%120, %c0_i32_69] : memref<1024x256xf32, #tpu.memory_space<any>> -> memref<1x256xf32, #tpu.memory_space<any>>
      %c0_i32_70 = arith.constant 0 : i32
      %125 = tpu.memref_slice %arg19[%9, %c1_i32_67, %c0_i32_70] : memref<2x8x256xf32, #tpu.memory_space<vmem>> -> memref<1x1x256xf32, #tpu.memory_space<vmem>>
      %126 = tpu.memref_squeeze %125 : memref<1x1x256xf32, #tpu.memory_space<vmem>> -> memref<1x256xf32, #tpu.memory_space<vmem>>
      %127 = tpu.memref_slice %arg21[%c0_i32_68, %9] : memref<2x2x!tpu.dma_semaphore, #tpu.memory_space<semaphore_mem>> -> memref<1x1x!tpu.dma_semaphore, #tpu.memory_space<semaphore_mem>>
      %128 = tpu.memref_squeeze %127 : memref<1x1x!tpu.dma_semaphore, #tpu.memory_space<semaphore_mem>> -> memref<!tpu.dma_semaphore, #tpu.memory_space<semaphore_mem>>
      tpu.enqueue_dma source(%124 : memref<1x256xf32, #tpu.memory_space<any>>) target(%126 : memref<1x256xf32, #tpu.memory_space<vmem>>) target_semaphore(%128 : memref<!tpu.dma_semaphore, #tpu.memory_space<semaphore_mem>>)
      %c1_i32_71 = arith.constant 1 : i32
      %c0_i32_72 = arith.constant 0 : i32
      %129 = tpu.memref_slice %arg5[%123, %c0_i32_72] : memref<512x256xf32, #tpu.memory_space<any>> -> memref<1x256xf32, #tpu.memory_space<any>>
      %c0_i32_73 = arith.constant 0 : i32
      %130 = tpu.memref_slice %arg20[%9, %c1_i32_67, %c0_i32_73] : memref<2x8x256xf32, #tpu.memory_space<vmem>> -> memref<1x1x256xf32, #tpu.memory_space<vmem>>
      %131 = tpu.memref_squeeze %130 : memref<1x1x256xf32, #tpu.memory_space<vmem>> -> memref<1x256xf32, #tpu.memory_space<vmem>>
      %132 = tpu.memref_slice %arg21[%c1_i32_71, %9] : memref<2x2x!tpu.dma_semaphore, #tpu.memory_space<semaphore_mem>> -> memref<1x1x!tpu.dma_semaphore, #tpu.memory_space<semaphore_mem>>
      %133 = tpu.memref_squeeze %132 : memref<1x1x!tpu.dma_semaphore, #tpu.memory_space<semaphore_mem>> -> memref<!tpu.dma_semaphore, #tpu.memory_space<semaphore_mem>>
      tpu.enqueue_dma source(%129 : memref<1x256xf32, #tpu.memory_space<any>>) target(%131 : memref<1x256xf32, #tpu.memory_space<vmem>>) target_semaphore(%133 : memref<!tpu.dma_semaphore, #tpu.memory_space<semaphore_mem>>)
      %c2_i32_74 = arith.constant 2 : i32
      %134 = arith.addi %101, %c2_i32_74 : i32
      %135 = arith.index_cast %134 : i32 to index
      %136 = memref.load %arg2[%135] : memref<8xi32, #tpu.memory_space<smem>>
      %137 = arith.addi %101, %c2_i32_74 : i32
      %138 = arith.index_cast %137 : i32 to index
      %139 = memref.load %arg3[%138] : memref<8xi32, #tpu.memory_space<smem>>
      %c0_i32_75 = arith.constant 0 : i32
      %c0_i32_76 = arith.constant 0 : i32
      %140 = tpu.memref_slice %arg4[%136, %c0_i32_76] : memref<1024x256xf32, #tpu.memory_space<any>> -> memref<1x256xf32, #tpu.memory_space<any>>
      %c0_i32_77 = arith.constant 0 : i32
      %141 = tpu.memref_slice %arg19[%9, %c2_i32_74, %c0_i32_77] : memref<2x8x256xf32, #tpu.memory_space<vmem>> -> memref<1x1x256xf32, #tpu.memory_space<vmem>>
      %142 = tpu.memref_squeeze %141 : memref<1x1x256xf32, #tpu.memory_space<vmem>> -> memref<1x256xf32, #tpu.memory_space<vmem>>
      %143 = tpu.memref_slice %arg21[%c0_i32_75, %9] : memref<2x2x!tpu.dma_semaphore, #tpu.memory_space<semaphore_mem>> -> memref<1x1x!tpu.dma_semaphore, #tpu.memory_space<semaphore_mem>>
      %144 = tpu.memref_squeeze %143 : memref<1x1x!tpu.dma_semaphore, #tpu.memory_space<semaphore_mem>> -> memref<!tpu.dma_semaphore, #tpu.memory_space<semaphore_mem>>
      tpu.enqueue_dma source(%140 : memref<1x256xf32, #tpu.memory_space<any>>) target(%142 : memref<1x256xf32, #tpu.memory_space<vmem>>) target_semaphore(%144 : memref<!tpu.dma_semaphore, #tpu.memory_space<semaphore_mem>>)
      %c1_i32_78 = arith.constant 1 : i32
      %c0_i32_79 = arith.constant 0 : i32
      %145 = tpu.memref_slice %arg5[%139, %c0_i32_79] : memref<512x256xf32, #tpu.memory_space<any>> -> memref<1x256xf32, #tpu.memory_space<any>>
      %c0_i32_80 = arith.constant 0 : i32
      %146 = tpu.memref_slice %arg20[%9, %c2_i32_74, %c0_i32_80] : memref<2x8x256xf32, #tpu.memory_space<vmem>> -> memref<1x1x256xf32, #tpu.memory_space<vmem>>
      %147 = tpu.memref_squeeze %146 : memref<1x1x256xf32, #tpu.memory_space<vmem>> -> memref<1x256xf32, #tpu.memory_space<vmem>>
      %148 = tpu.memref_slice %arg21[%c1_i32_78, %9] : memref<2x2x!tpu.dma_semaphore, #tpu.memory_space<semaphore_mem>> -> memref<1x1x!tpu.dma_semaphore, #tpu.memory_space<semaphore_mem>>
      %149 = tpu.memref_squeeze %148 : memref<1x1x!tpu.dma_semaphore, #tpu.memory_space<semaphore_mem>> -> memref<!tpu.dma_semaphore, #tpu.memory_space<semaphore_mem>>
      tpu.enqueue_dma source(%145 : memref<1x256xf32, #tpu.memory_space<any>>) target(%147 : memref<1x256xf32, #tpu.memory_space<vmem>>) target_semaphore(%149 : memref<!tpu.dma_semaphore, #tpu.memory_space<semaphore_mem>>)
      %c3_i32 = arith.constant 3 : i32
      %150 = arith.addi %101, %c3_i32 : i32
      %151 = arith.index_cast %150 : i32 to index
      %152 = memref.load %arg2[%151] : memref<8xi32, #tpu.memory_space<smem>>
      %153 = arith.addi %101, %c3_i32 : i32
      %154 = arith.index_cast %153 : i32 to index
      %155 = memref.load %arg3[%154] : memref<8xi32, #tpu.memory_space<smem>>
      %c0_i32_81 = arith.constant 0 : i32
      %c0_i32_82 = arith.constant 0 : i32
      %156 = tpu.memref_slice %arg4[%152, %c0_i32_82] : memref<1024x256xf32, #tpu.memory_space<any>> -> memref<1x256xf32, #tpu.memory_space<any>>
      %c0_i32_83 = arith.constant 0 : i32
      %157 = tpu.memref_slice %arg19[%9, %c3_i32, %c0_i32_83] : memref<2x8x256xf32, #tpu.memory_space<vmem>> -> memref<1x1x256xf32, #tpu.memory_space<vmem>>
      %158 = tpu.memref_squeeze %157 : memref<1x1x256xf32, #tpu.memory_space<vmem>> -> memref<1x256xf32, #tpu.memory_space<vmem>>
      %159 = tpu.memref_slice %arg21[%c0_i32_81, %9] : memref<2x2x!tpu.dma_semaphore, #tpu.memory_space<semaphore_mem>> -> memref<1x1x!tpu.dma_semaphore, #tpu.memory_space<semaphore_mem>>
      %160 = tpu.memref_squeeze %159 : memref<1x1x!tpu.dma_semaphore, #tpu.memory_space<semaphore_mem>> -> memref<!tpu.dma_semaphore, #tpu.memory_space<semaphore_mem>>
      tpu.enqueue_dma source(%156 : memref<1x256xf32, #tpu.memory_space<any>>) target(%158 : memref<1x256xf32, #tpu.memory_space<vmem>>) target_semaphore(%160 : memref<!tpu.dma_semaphore, #tpu.memory_space<semaphore_mem>>)
      %c1_i32_84 = arith.constant 1 : i32
      %c0_i32_85 = arith.constant 0 : i32
      %161 = tpu.memref_slice %arg5[%155, %c0_i32_85] : memref<512x256xf32, #tpu.memory_space<any>> -> memref<1x256xf32, #tpu.memory_space<any>>
      %c0_i32_86 = arith.constant 0 : i32
      %162 = tpu.memref_slice %arg20[%9, %c3_i32, %c0_i32_86] : memref<2x8x256xf32, #tpu.memory_space<vmem>> -> memref<1x1x256xf32, #tpu.memory_space<vmem>>
      %163 = tpu.memref_squeeze %162 : memref<1x1x256xf32, #tpu.memory_space<vmem>> -> memref<1x256xf32, #tpu.memory_space<vmem>>
      %164 = tpu.memref_slice %arg21[%c1_i32_84, %9] : memref<2x2x!tpu.dma_semaphore, #tpu.memory_space<semaphore_mem>> -> memref<1x1x!tpu.dma_semaphore, #tpu.memory_space<semaphore_mem>>
      %165 = tpu.memref_squeeze %164 : memref<1x1x!tpu.dma_semaphore, #tpu.memory_space<semaphore_mem>> -> memref<!tpu.dma_semaphore, #tpu.memory_space<semaphore_mem>>
      tpu.enqueue_dma source(%161 : memref<1x256xf32, #tpu.memory_space<any>>) target(%163 : memref<1x256xf32, #tpu.memory_space<vmem>>) target_semaphore(%165 : memref<!tpu.dma_semaphore, #tpu.memory_space<semaphore_mem>>)
      %c4_i32 = arith.constant 4 : i32
      %166 = arith.addi %101, %c4_i32 : i32
      %167 = arith.index_cast %166 : i32 to index
      %168 = memref.load %arg2[%167] : memref<8xi32, #tpu.memory_space<smem>>
      %169 = arith.addi %101, %c4_i32 : i32
      %170 = arith.index_cast %169 : i32 to index
      %171 = memref.load %arg3[%170] : memref<8xi32, #tpu.memory_space<smem>>
      %c0_i32_87 = arith.constant 0 : i32
      %c0_i32_88 = arith.constant 0 : i32
      %172 = tpu.memref_slice %arg4[%168, %c0_i32_88] : memref<1024x256xf32, #tpu.memory_space<any>> -> memref<1x256xf32, #tpu.memory_space<any>>
      %c0_i32_89 = arith.constant 0 : i32
      %173 = tpu.memref_slice %arg19[%9, %c4_i32, %c0_i32_89] : memref<2x8x256xf32, #tpu.memory_space<vmem>> -> memref<1x1x256xf32, #tpu.memory_space<vmem>>
      %174 = tpu.memref_squeeze %173 : memref<1x1x256xf32, #tpu.memory_space<vmem>> -> memref<1x256xf32, #tpu.memory_space<vmem>>
      %175 = tpu.memref_slice %arg21[%c0_i32_87, %9] : memref<2x2x!tpu.dma_semaphore, #tpu.memory_space<semaphore_mem>> -> memref<1x1x!tpu.dma_semaphore, #tpu.memory_space<semaphore_mem>>
      %176 = tpu.memref_squeeze %175 : memref<1x1x!tpu.dma_semaphore, #tpu.memory_space<semaphore_mem>> -> memref<!tpu.dma_semaphore, #tpu.memory_space<semaphore_mem>>
      tpu.enqueue_dma source(%172 : memref<1x256xf32, #tpu.memory_space<any>>) target(%174 : memref<1x256xf32, #tpu.memory_space<vmem>>) target_semaphore(%176 : memref<!tpu.dma_semaphore, #tpu.memory_space<semaphore_mem>>)
      %c1_i32_90 = arith.constant 1 : i32
      %c0_i32_91 = arith.constant 0 : i32
      %177 = tpu.memref_slice %arg5[%171, %c0_i32_91] : memref<512x256xf32, #tpu.memory_space<any>> -> memref<1x256xf32, #tpu.memory_space<any>>
      %c0_i32_92 = arith.constant 0 : i32
      %178 = tpu.memref_slice %arg20[%9, %c4_i32, %c0_i32_92] : memref<2x8x256xf32, #tpu.memory_space<vmem>> -> memref<1x1x256xf32, #tpu.memory_space<vmem>>
      %179 = tpu.memref_squeeze %178 : memref<1x1x256xf32, #tpu.memory_space<vmem>> -> memref<1x256xf32, #tpu.memory_space<vmem>>
      %180 = tpu.memref_slice %arg21[%c1_i32_90, %9] : memref<2x2x!tpu.dma_semaphore, #tpu.memory_space<semaphore_mem>> -> memref<1x1x!tpu.dma_semaphore, #tpu.memory_space<semaphore_mem>>
      %181 = tpu.memref_squeeze %180 : memref<1x1x!tpu.dma_semaphore, #tpu.memory_space<semaphore_mem>> -> memref<!tpu.dma_semaphore, #tpu.memory_space<semaphore_mem>>
      tpu.enqueue_dma source(%177 : memref<1x256xf32, #tpu.memory_space<any>>) target(%179 : memref<1x256xf32, #tpu.memory_space<vmem>>) target_semaphore(%181 : memref<!tpu.dma_semaphore, #tpu.memory_space<semaphore_mem>>)
      %c5_i32 = arith.constant 5 : i32
      %182 = arith.addi %101, %c5_i32 : i32
      %183 = arith.index_cast %182 : i32 to index
      %184 = memref.load %arg2[%183] : memref<8xi32, #tpu.memory_space<smem>>
      %185 = arith.addi %101, %c5_i32 : i32
      %186 = arith.index_cast %185 : i32 to index
      %187 = memref.load %arg3[%186] : memref<8xi32, #tpu.memory_space<smem>>
      %c0_i32_93 = arith.constant 0 : i32
      %c0_i32_94 = arith.constant 0 : i32
      %188 = tpu.memref_slice %arg4[%184, %c0_i32_94] : memref<1024x256xf32, #tpu.memory_space<any>> -> memref<1x256xf32, #tpu.memory_space<any>>
      %c0_i32_95 = arith.constant 0 : i32
      %189 = tpu.memref_slice %arg19[%9, %c5_i32, %c0_i32_95] : memref<2x8x256xf32, #tpu.memory_space<vmem>> -> memref<1x1x256xf32, #tpu.memory_space<vmem>>
      %190 = tpu.memref_squeeze %189 : memref<1x1x256xf32, #tpu.memory_space<vmem>> -> memref<1x256xf32, #tpu.memory_space<vmem>>
      %191 = tpu.memref_slice %arg21[%c0_i32_93, %9] : memref<2x2x!tpu.dma_semaphore, #tpu.memory_space<semaphore_mem>> -> memref<1x1x!tpu.dma_semaphore, #tpu.memory_space<semaphore_mem>>
      %192 = tpu.memref_squeeze %191 : memref<1x1x!tpu.dma_semaphore, #tpu.memory_space<semaphore_mem>> -> memref<!tpu.dma_semaphore, #tpu.memory_space<semaphore_mem>>
      tpu.enqueue_dma source(%188 : memref<1x256xf32, #tpu.memory_space<any>>) target(%190 : memref<1x256xf32, #tpu.memory_space<vmem>>) target_semaphore(%192 : memref<!tpu.dma_semaphore, #tpu.memory_space<semaphore_mem>>)
      %c1_i32_96 = arith.constant 1 : i32
      %c0_i32_97 = arith.constant 0 : i32
      %193 = tpu.memref_slice %arg5[%187, %c0_i32_97] : memref<512x256xf32, #tpu.memory_space<any>> -> memref<1x256xf32, #tpu.memory_space<any>>
      %c0_i32_98 = arith.constant 0 : i32
      %194 = tpu.memref_slice %arg20[%9, %c5_i32, %c0_i32_98] : memref<2x8x256xf32, #tpu.memory_space<vmem>> -> memref<1x1x256xf32, #tpu.memory_space<vmem>>
      %195 = tpu.memref_squeeze %194 : memref<1x1x256xf32, #tpu.memory_space<vmem>> -> memref<1x256xf32, #tpu.memory_space<vmem>>
      %196 = tpu.memref_slice %arg21[%c1_i32_96, %9] : memref<2x2x!tpu.dma_semaphore, #tpu.memory_space<semaphore_mem>> -> memref<1x1x!tpu.dma_semaphore, #tpu.memory_space<semaphore_mem>>
      %197 = tpu.memref_squeeze %196 : memref<1x1x!tpu.dma_semaphore, #tpu.memory_space<semaphore_mem>> -> memref<!tpu.dma_semaphore, #tpu.memory_space<semaphore_mem>>
      tpu.enqueue_dma source(%193 : memref<1x256xf32, #tpu.memory_space<any>>) target(%195 : memref<1x256xf32, #tpu.memory_space<vmem>>) target_semaphore(%197 : memref<!tpu.dma_semaphore, #tpu.memory_space<semaphore_mem>>)
      %c6_i32 = arith.constant 6 : i32
      %198 = arith.addi %101, %c6_i32 : i32
      %199 = arith.index_cast %198 : i32 to index
      %200 = memref.load %arg2[%199] : memref<8xi32, #tpu.memory_space<smem>>
      %201 = arith.addi %101, %c6_i32 : i32
      %202 = arith.index_cast %201 : i32 to index
      %203 = memref.load %arg3[%202] : memref<8xi32, #tpu.memory_space<smem>>
      %c0_i32_99 = arith.constant 0 : i32
      %c0_i32_100 = arith.constant 0 : i32
      %204 = tpu.memref_slice %arg4[%200, %c0_i32_100] : memref<1024x256xf32, #tpu.memory_space<any>> -> memref<1x256xf32, #tpu.memory_space<any>>
      %c0_i32_101 = arith.constant 0 : i32
      %205 = tpu.memref_slice %arg19[%9, %c6_i32, %c0_i32_101] : memref<2x8x256xf32, #tpu.memory_space<vmem>> -> memref<1x1x256xf32, #tpu.memory_space<vmem>>
      %206 = tpu.memref_squeeze %205 : memref<1x1x256xf32, #tpu.memory_space<vmem>> -> memref<1x256xf32, #tpu.memory_space<vmem>>
      %207 = tpu.memref_slice %arg21[%c0_i32_99, %9] : memref<2x2x!tpu.dma_semaphore, #tpu.memory_space<semaphore_mem>> -> memref<1x1x!tpu.dma_semaphore, #tpu.memory_space<semaphore_mem>>
      %208 = tpu.memref_squeeze %207 : memref<1x1x!tpu.dma_semaphore, #tpu.memory_space<semaphore_mem>> -> memref<!tpu.dma_semaphore, #tpu.memory_space<semaphore_mem>>
      tpu.enqueue_dma source(%204 : memref<1x256xf32, #tpu.memory_space<any>>) target(%206 : memref<1x256xf32, #tpu.memory_space<vmem>>) target_semaphore(%208 : memref<!tpu.dma_semaphore, #tpu.memory_space<semaphore_mem>>)
      %c1_i32_102 = arith.constant 1 : i32
      %c0_i32_103 = arith.constant 0 : i32
      %209 = tpu.memref_slice %arg5[%203, %c0_i32_103] : memref<512x256xf32, #tpu.memory_space<any>> -> memref<1x256xf32, #tpu.memory_space<any>>
      %c0_i32_104 = arith.constant 0 : i32
      %210 = tpu.memref_slice %arg20[%9, %c6_i32, %c0_i32_104] : memref<2x8x256xf32, #tpu.memory_space<vmem>> -> memref<1x1x256xf32, #tpu.memory_space<vmem>>
      %211 = tpu.memref_squeeze %210 : memref<1x1x256xf32, #tpu.memory_space<vmem>> -> memref<1x256xf32, #tpu.memory_space<vmem>>
      %212 = tpu.memref_slice %arg21[%c1_i32_102, %9] : memref<2x2x!tpu.dma_semaphore, #tpu.memory_space<semaphore_mem>> -> memref<1x1x!tpu.dma_semaphore, #tpu.memory_space<semaphore_mem>>
      %213 = tpu.memref_squeeze %212 : memref<1x1x!tpu.dma_semaphore, #tpu.memory_space<semaphore_mem>> -> memref<!tpu.dma_semaphore, #tpu.memory_space<semaphore_mem>>
      tpu.enqueue_dma source(%209 : memref<1x256xf32, #tpu.memory_space<any>>) target(%211 : memref<1x256xf32, #tpu.memory_space<vmem>>) target_semaphore(%213 : memref<!tpu.dma_semaphore, #tpu.memory_space<semaphore_mem>>)
      %c7_i32 = arith.constant 7 : i32
      %214 = arith.addi %101, %c7_i32 : i32
      %215 = arith.index_cast %214 : i32 to index
      %216 = memref.load %arg2[%215] : memref<8xi32, #tpu.memory_space<smem>>
      %217 = arith.addi %101, %c7_i32 : i32
      %218 = arith.index_cast %217 : i32 to index
      %219 = memref.load %arg3[%218] : memref<8xi32, #tpu.memory_space<smem>>
      %c0_i32_105 = arith.constant 0 : i32
      %c0_i32_106 = arith.constant 0 : i32
      %220 = tpu.memref_slice %arg4[%216, %c0_i32_106] : memref<1024x256xf32, #tpu.memory_space<any>> -> memref<1x256xf32, #tpu.memory_space<any>>
      %c0_i32_107 = arith.constant 0 : i32
      %221 = tpu.memref_slice %arg19[%9, %c7_i32, %c0_i32_107] : memref<2x8x256xf32, #tpu.memory_space<vmem>> -> memref<1x1x256xf32, #tpu.memory_space<vmem>>
      %222 = tpu.memref_squeeze %221 : memref<1x1x256xf32, #tpu.memory_space<vmem>> -> memref<1x256xf32, #tpu.memory_space<vmem>>
      %223 = tpu.memref_slice %arg21[%c0_i32_105, %9] : memref<2x2x!tpu.dma_semaphore, #tpu.memory_space<semaphore_mem>> -> memref<1x1x!tpu.dma_semaphore, #tpu.memory_space<semaphore_mem>>
      %224 = tpu.memref_squeeze %223 : memref<1x1x!tpu.dma_semaphore, #tpu.memory_space<semaphore_mem>> -> memref<!tpu.dma_semaphore, #tpu.memory_space<semaphore_mem>>
      tpu.enqueue_dma source(%220 : memref<1x256xf32, #tpu.memory_space<any>>) target(%222 : memref<1x256xf32, #tpu.memory_space<vmem>>) target_semaphore(%224 : memref<!tpu.dma_semaphore, #tpu.memory_space<semaphore_mem>>)
      %c1_i32_108 = arith.constant 1 : i32
      %c0_i32_109 = arith.constant 0 : i32
      %225 = tpu.memref_slice %arg5[%219, %c0_i32_109] : memref<512x256xf32, #tpu.memory_space<any>> -> memref<1x256xf32, #tpu.memory_space<any>>
      %c0_i32_110 = arith.constant 0 : i32
      %226 = tpu.memref_slice %arg20[%9, %c7_i32, %c0_i32_110] : memref<2x8x256xf32, #tpu.memory_space<vmem>> -> memref<1x1x256xf32, #tpu.memory_space<vmem>>
      %227 = tpu.memref_squeeze %226 : memref<1x1x256xf32, #tpu.memory_space<vmem>> -> memref<1x256xf32, #tpu.memory_space<vmem>>
      %228 = tpu.memref_slice %arg21[%c1_i32_108, %9] : memref<2x2x!tpu.dma_semaphore, #tpu.memory_space<semaphore_mem>> -> memref<1x1x!tpu.dma_semaphore, #tpu.memory_space<semaphore_mem>>
      %229 = tpu.memref_squeeze %228 : memref<1x1x!tpu.dma_semaphore, #tpu.memory_space<semaphore_mem>> -> memref<!tpu.dma_semaphore, #tpu.memory_space<semaphore_mem>>
      tpu.enqueue_dma source(%225 : memref<1x256xf32, #tpu.memory_space<any>>) target(%227 : memref<1x256xf32, #tpu.memory_space<vmem>>) target_semaphore(%229 : memref<!tpu.dma_semaphore, #tpu.memory_space<semaphore_mem>>)
      %c8_i32_111 = arith.constant 8 : i32
    } else {
    }
    %c1_i32_5 = arith.constant 1 : i32
    %13 = arith.addi %arg1, %c1_i32_5 : i32
    %c1_i32_6 = arith.constant 1 : i32
    %14 = arith.cmpi slt, %13, %c1_i32_6 : i32
    %15 = arith.extui %14 : i1 to i32
    %c0_i32_7 = arith.constant 0 : i32
    %16 = arith.cmpi ne, %15, %c0_i32_7 : i32
    scf.if %16 {
      %c1_i32_59 = arith.constant 1 : i32
      %100 = arith.muli %arg0, %c1_i32_59 : i32
      %101 = arith.addi %100, %arg1 : i32
      %c1_i32_60 = arith.constant 1 : i32
      %102 = arith.addi %101, %c1_i32_60 : i32
      %c1_i32_61 = arith.constant 1 : i32
      %103 = arith.subi %c1_i32_61, %9 : i32
      %c8_i32 = arith.constant 8 : i32
      %104 = arith.muli %102, %c8_i32 : i32
      %c0_i32_62 = arith.constant 0 : i32
      %105 = arith.addi %104, %c0_i32_62 : i32
      %106 = arith.index_cast %105 : i32 to index
      %107 = memref.load %arg2[%106] : memref<8xi32, #tpu.memory_space<smem>>
      %108 = arith.addi %104, %c0_i32_62 : i32
      %109 = arith.index_cast %108 : i32 to index
      %110 = memref.load %arg3[%109] : memref<8xi32, #tpu.memory_space<smem>>
      %c0_i32_63 = arith.constant 0 : i32
      %c0_i32_64 = arith.constant 0 : i32
      %111 = tpu.memref_slice %arg4[%107, %c0_i32_64] : memref<1024x256xf32, #tpu.memory_space<any>> -> memref<1x256xf32, #tpu.memory_space<any>>
      %c0_i32_65 = arith.constant 0 : i32
      %112 = tpu.memref_slice %arg19[%103, %c0_i32_62, %c0_i32_65] : memref<2x8x256xf32, #tpu.memory_space<vmem>> -> memref<1x1x256xf32, #tpu.memory_space<vmem>>
      %113 = tpu.memref_squeeze %112 : memref<1x1x256xf32, #tpu.memory_space<vmem>> -> memref<1x256xf32, #tpu.memory_space<vmem>>
      %114 = tpu.memref_slice %arg21[%c0_i32_63, %103] : memref<2x2x!tpu.dma_semaphore, #tpu.memory_space<semaphore_mem>> -> memref<1x1x!tpu.dma_semaphore, #tpu.memory_space<semaphore_mem>>
      %115 = tpu.memref_squeeze %114 : memref<1x1x!tpu.dma_semaphore, #tpu.memory_space<semaphore_mem>> -> memref<!tpu.dma_semaphore, #tpu.memory_space<semaphore_mem>>
      tpu.enqueue_dma source(%111 : memref<1x256xf32, #tpu.memory_space<any>>) target(%113 : memref<1x256xf32, #tpu.memory_space<vmem>>) target_semaphore(%115 : memref<!tpu.dma_semaphore, #tpu.memory_space<semaphore_mem>>)
      %c1_i32_66 = arith.constant 1 : i32
      %c0_i32_67 = arith.constant 0 : i32
      %116 = tpu.memref_slice %arg5[%110, %c0_i32_67] : memref<512x256xf32, #tpu.memory_space<any>> -> memref<1x256xf32, #tpu.memory_space<any>>
      %c0_i32_68 = arith.constant 0 : i32
      %117 = tpu.memref_slice %arg20[%103, %c0_i32_62, %c0_i32_68] : memref<2x8x256xf32, #tpu.memory_space<vmem>> -> memref<1x1x256xf32, #tpu.memory_space<vmem>>
      %118 = tpu.memref_squeeze %117 : memref<1x1x256xf32, #tpu.memory_space<vmem>> -> memref<1x256xf32, #tpu.memory_space<vmem>>
      %119 = tpu.memref_slice %arg21[%c1_i32_66, %103] : memref<2x2x!tpu.dma_semaphore, #tpu.memory_space<semaphore_mem>> -> memref<1x1x!tpu.dma_semaphore, #tpu.memory_space<semaphore_mem>>
      %120 = tpu.memref_squeeze %119 : memref<1x1x!tpu.dma_semaphore, #tpu.memory_space<semaphore_mem>> -> memref<!tpu.dma_semaphore, #tpu.memory_space<semaphore_mem>>
      tpu.enqueue_dma source(%116 : memref<1x256xf32, #tpu.memory_space<any>>) target(%118 : memref<1x256xf32, #tpu.memory_space<vmem>>) target_semaphore(%120 : memref<!tpu.dma_semaphore, #tpu.memory_space<semaphore_mem>>)
      %c1_i32_69 = arith.constant 1 : i32
      %121 = arith.addi %104, %c1_i32_69 : i32
      %122 = arith.index_cast %121 : i32 to index
      %123 = memref.load %arg2[%122] : memref<8xi32, #tpu.memory_space<smem>>
      %124 = arith.addi %104, %c1_i32_69 : i32
      %125 = arith.index_cast %124 : i32 to index
      %126 = memref.load %arg3[%125] : memref<8xi32, #tpu.memory_space<smem>>
      %c0_i32_70 = arith.constant 0 : i32
      %c0_i32_71 = arith.constant 0 : i32
      %127 = tpu.memref_slice %arg4[%123, %c0_i32_71] : memref<1024x256xf32, #tpu.memory_space<any>> -> memref<1x256xf32, #tpu.memory_space<any>>
      %c0_i32_72 = arith.constant 0 : i32
      %128 = tpu.memref_slice %arg19[%103, %c1_i32_69, %c0_i32_72] : memref<2x8x256xf32, #tpu.memory_space<vmem>> -> memref<1x1x256xf32, #tpu.memory_space<vmem>>
      %129 = tpu.memref_squeeze %128 : memref<1x1x256xf32, #tpu.memory_space<vmem>> -> memref<1x256xf32, #tpu.memory_space<vmem>>
      %130 = tpu.memref_slice %arg21[%c0_i32_70, %103] : memref<2x2x!tpu.dma_semaphore, #tpu.memory_space<semaphore_mem>> -> memref<1x1x!tpu.dma_semaphore, #tpu.memory_space<semaphore_mem>>
      %131 = tpu.memref_squeeze %130 : memref<1x1x!tpu.dma_semaphore, #tpu.memory_space<semaphore_mem>> -> memref<!tpu.dma_semaphore, #tpu.memory_space<semaphore_mem>>
      tpu.enqueue_dma source(%127 : memref<1x256xf32, #tpu.memory_space<any>>) target(%129 : memref<1x256xf32, #tpu.memory_space<vmem>>) target_semaphore(%131 : memref<!tpu.dma_semaphore, #tpu.memory_space<semaphore_mem>>)
      %c1_i32_73 = arith.constant 1 : i32
      %c0_i32_74 = arith.constant 0 : i32
      %132 = tpu.memref_slice %arg5[%126, %c0_i32_74] : memref<512x256xf32, #tpu.memory_space<any>> -> memref<1x256xf32, #tpu.memory_space<any>>
      %c0_i32_75 = arith.constant 0 : i32
      %133 = tpu.memref_slice %arg20[%103, %c1_i32_69, %c0_i32_75] : memref<2x8x256xf32, #tpu.memory_space<vmem>> -> memref<1x1x256xf32, #tpu.memory_space<vmem>>
      %134 = tpu.memref_squeeze %133 : memref<1x1x256xf32, #tpu.memory_space<vmem>> -> memref<1x256xf32, #tpu.memory_space<vmem>>
      %135 = tpu.memref_slice %arg21[%c1_i32_73, %103] : memref<2x2x!tpu.dma_semaphore, #tpu.memory_space<semaphore_mem>> -> memref<1x1x!tpu.dma_semaphore, #tpu.memory_space<semaphore_mem>>
      %136 = tpu.memref_squeeze %135 : memref<1x1x!tpu.dma_semaphore, #tpu.memory_space<semaphore_mem>> -> memref<!tpu.dma_semaphore, #tpu.memory_space<semaphore_mem>>
      tpu.enqueue_dma source(%132 : memref<1x256xf32, #tpu.memory_space<any>>) target(%134 : memref<1x256xf32, #tpu.memory_space<vmem>>) target_semaphore(%136 : memref<!tpu.dma_semaphore, #tpu.memory_space<semaphore_mem>>)
      %c2_i32_76 = arith.constant 2 : i32
      %137 = arith.addi %104, %c2_i32_76 : i32
      %138 = arith.index_cast %137 : i32 to index
      %139 = memref.load %arg2[%138] : memref<8xi32, #tpu.memory_space<smem>>
      %140 = arith.addi %104, %c2_i32_76 : i32
      %141 = arith.index_cast %140 : i32 to index
      %142 = memref.load %arg3[%141] : memref<8xi32, #tpu.memory_space<smem>>
      %c0_i32_77 = arith.constant 0 : i32
      %c0_i32_78 = arith.constant 0 : i32
      %143 = tpu.memref_slice %arg4[%139, %c0_i32_78] : memref<1024x256xf32, #tpu.memory_space<any>> -> memref<1x256xf32, #tpu.memory_space<any>>
      %c0_i32_79 = arith.constant 0 : i32
      %144 = tpu.memref_slice %arg19[%103, %c2_i32_76, %c0_i32_79] : memref<2x8x256xf32, #tpu.memory_space<vmem>> -> memref<1x1x256xf32, #tpu.memory_space<vmem>>
      %145 = tpu.memref_squeeze %144 : memref<1x1x256xf32, #tpu.memory_space<vmem>> -> memref<1x256xf32, #tpu.memory_space<vmem>>
      %146 = tpu.memref_slice %arg21[%c0_i32_77, %103] : memref<2x2x!tpu.dma_semaphore, #tpu.memory_space<semaphore_mem>> -> memref<1x1x!tpu.dma_semaphore, #tpu.memory_space<semaphore_mem>>
      %147 = tpu.memref_squeeze %146 : memref<1x1x!tpu.dma_semaphore, #tpu.memory_space<semaphore_mem>> -> memref<!tpu.dma_semaphore, #tpu.memory_space<semaphore_mem>>
      tpu.enqueue_dma source(%143 : memref<1x256xf32, #tpu.memory_space<any>>) target(%145 : memref<1x256xf32, #tpu.memory_space<vmem>>) target_semaphore(%147 : memref<!tpu.dma_semaphore, #tpu.memory_space<semaphore_mem>>)
      %c1_i32_80 = arith.constant 1 : i32
      %c0_i32_81 = arith.constant 0 : i32
      %148 = tpu.memref_slice %arg5[%142, %c0_i32_81] : memref<512x256xf32, #tpu.memory_space<any>> -> memref<1x256xf32, #tpu.memory_space<any>>
      %c0_i32_82 = arith.constant 0 : i32
      %149 = tpu.memref_slice %arg20[%103, %c2_i32_76, %c0_i32_82] : memref<2x8x256xf32, #tpu.memory_space<vmem>> -> memref<1x1x256xf32, #tpu.memory_space<vmem>>
      %150 = tpu.memref_squeeze %149 : memref<1x1x256xf32, #tpu.memory_space<vmem>> -> memref<1x256xf32, #tpu.memory_space<vmem>>
      %151 = tpu.memref_slice %arg21[%c1_i32_80, %103] : memref<2x2x!tpu.dma_semaphore, #tpu.memory_space<semaphore_mem>> -> memref<1x1x!tpu.dma_semaphore, #tpu.memory_space<semaphore_mem>>
      %152 = tpu.memref_squeeze %151 : memref<1x1x!tpu.dma_semaphore, #tpu.memory_space<semaphore_mem>> -> memref<!tpu.dma_semaphore, #tpu.memory_space<semaphore_mem>>
      tpu.enqueue_dma source(%148 : memref<1x256xf32, #tpu.memory_space<any>>) target(%150 : memref<1x256xf32, #tpu.memory_space<vmem>>) target_semaphore(%152 : memref<!tpu.dma_semaphore, #tpu.memory_space<semaphore_mem>>)
      %c3_i32 = arith.constant 3 : i32
      %153 = arith.addi %104, %c3_i32 : i32
      %154 = arith.index_cast %153 : i32 to index
      %155 = memref.load %arg2[%154] : memref<8xi32, #tpu.memory_space<smem>>
      %156 = arith.addi %104, %c3_i32 : i32
      %157 = arith.index_cast %156 : i32 to index
      %158 = memref.load %arg3[%157] : memref<8xi32, #tpu.memory_space<smem>>
      %c0_i32_83 = arith.constant 0 : i32
      %c0_i32_84 = arith.constant 0 : i32
      %159 = tpu.memref_slice %arg4[%155, %c0_i32_84] : memref<1024x256xf32, #tpu.memory_space<any>> -> memref<1x256xf32, #tpu.memory_space<any>>
      %c0_i32_85 = arith.constant 0 : i32
      %160 = tpu.memref_slice %arg19[%103, %c3_i32, %c0_i32_85] : memref<2x8x256xf32, #tpu.memory_space<vmem>> -> memref<1x1x256xf32, #tpu.memory_space<vmem>>
      %161 = tpu.memref_squeeze %160 : memref<1x1x256xf32, #tpu.memory_space<vmem>> -> memref<1x256xf32, #tpu.memory_space<vmem>>
      %162 = tpu.memref_slice %arg21[%c0_i32_83, %103] : memref<2x2x!tpu.dma_semaphore, #tpu.memory_space<semaphore_mem>> -> memref<1x1x!tpu.dma_semaphore, #tpu.memory_space<semaphore_mem>>
      %163 = tpu.memref_squeeze %162 : memref<1x1x!tpu.dma_semaphore, #tpu.memory_space<semaphore_mem>> -> memref<!tpu.dma_semaphore, #tpu.memory_space<semaphore_mem>>
      tpu.enqueue_dma source(%159 : memref<1x256xf32, #tpu.memory_space<any>>) target(%161 : memref<1x256xf32, #tpu.memory_space<vmem>>) target_semaphore(%163 : memref<!tpu.dma_semaphore, #tpu.memory_space<semaphore_mem>>)
      %c1_i32_86 = arith.constant 1 : i32
      %c0_i32_87 = arith.constant 0 : i32
      %164 = tpu.memref_slice %arg5[%158, %c0_i32_87] : memref<512x256xf32, #tpu.memory_space<any>> -> memref<1x256xf32, #tpu.memory_space<any>>
      %c0_i32_88 = arith.constant 0 : i32
      %165 = tpu.memref_slice %arg20[%103, %c3_i32, %c0_i32_88] : memref<2x8x256xf32, #tpu.memory_space<vmem>> -> memref<1x1x256xf32, #tpu.memory_space<vmem>>
      %166 = tpu.memref_squeeze %165 : memref<1x1x256xf32, #tpu.memory_space<vmem>> -> memref<1x256xf32, #tpu.memory_space<vmem>>
      %167 = tpu.memref_slice %arg21[%c1_i32_86, %103] : memref<2x2x!tpu.dma_semaphore, #tpu.memory_space<semaphore_mem>> -> memref<1x1x!tpu.dma_semaphore, #tpu.memory_space<semaphore_mem>>
      %168 = tpu.memref_squeeze %167 : memref<1x1x!tpu.dma_semaphore, #tpu.memory_space<semaphore_mem>> -> memref<!tpu.dma_semaphore, #tpu.memory_space<semaphore_mem>>
      tpu.enqueue_dma source(%164 : memref<1x256xf32, #tpu.memory_space<any>>) target(%166 : memref<1x256xf32, #tpu.memory_space<vmem>>) target_semaphore(%168 : memref<!tpu.dma_semaphore, #tpu.memory_space<semaphore_mem>>)
      %c4_i32 = arith.constant 4 : i32
      %169 = arith.addi %104, %c4_i32 : i32
      %170 = arith.index_cast %169 : i32 to index
      %171 = memref.load %arg2[%170] : memref<8xi32, #tpu.memory_space<smem>>
      %172 = arith.addi %104, %c4_i32 : i32
      %173 = arith.index_cast %172 : i32 to index
      %174 = memref.load %arg3[%173] : memref<8xi32, #tpu.memory_space<smem>>
      %c0_i32_89 = arith.constant 0 : i32
      %c0_i32_90 = arith.constant 0 : i32
      %175 = tpu.memref_slice %arg4[%171, %c0_i32_90] : memref<1024x256xf32, #tpu.memory_space<any>> -> memref<1x256xf32, #tpu.memory_space<any>>
      %c0_i32_91 = arith.constant 0 : i32
      %176 = tpu.memref_slice %arg19[%103, %c4_i32, %c0_i32_91] : memref<2x8x256xf32, #tpu.memory_space<vmem>> -> memref<1x1x256xf32, #tpu.memory_space<vmem>>
      %177 = tpu.memref_squeeze %176 : memref<1x1x256xf32, #tpu.memory_space<vmem>> -> memref<1x256xf32, #tpu.memory_space<vmem>>
      %178 = tpu.memref_slice %arg21[%c0_i32_89, %103] : memref<2x2x!tpu.dma_semaphore, #tpu.memory_space<semaphore_mem>> -> memref<1x1x!tpu.dma_semaphore, #tpu.memory_space<semaphore_mem>>
      %179 = tpu.memref_squeeze %178 : memref<1x1x!tpu.dma_semaphore, #tpu.memory_space<semaphore_mem>> -> memref<!tpu.dma_semaphore, #tpu.memory_space<semaphore_mem>>
      tpu.enqueue_dma source(%175 : memref<1x256xf32, #tpu.memory_space<any>>) target(%177 : memref<1x256xf32, #tpu.memory_space<vmem>>) target_semaphore(%179 : memref<!tpu.dma_semaphore, #tpu.memory_space<semaphore_mem>>)
      %c1_i32_92 = arith.constant 1 : i32
      %c0_i32_93 = arith.constant 0 : i32
      %180 = tpu.memref_slice %arg5[%174, %c0_i32_93] : memref<512x256xf32, #tpu.memory_space<any>> -> memref<1x256xf32, #tpu.memory_space<any>>
      %c0_i32_94 = arith.constant 0 : i32
      %181 = tpu.memref_slice %arg20[%103, %c4_i32, %c0_i32_94] : memref<2x8x256xf32, #tpu.memory_space<vmem>> -> memref<1x1x256xf32, #tpu.memory_space<vmem>>
      %182 = tpu.memref_squeeze %181 : memref<1x1x256xf32, #tpu.memory_space<vmem>> -> memref<1x256xf32, #tpu.memory_space<vmem>>
      %183 = tpu.memref_slice %arg21[%c1_i32_92, %103] : memref<2x2x!tpu.dma_semaphore, #tpu.memory_space<semaphore_mem>> -> memref<1x1x!tpu.dma_semaphore, #tpu.memory_space<semaphore_mem>>
      %184 = tpu.memref_squeeze %183 : memref<1x1x!tpu.dma_semaphore, #tpu.memory_space<semaphore_mem>> -> memref<!tpu.dma_semaphore, #tpu.memory_space<semaphore_mem>>
      tpu.enqueue_dma source(%180 : memref<1x256xf32, #tpu.memory_space<any>>) target(%182 : memref<1x256xf32, #tpu.memory_space<vmem>>) target_semaphore(%184 : memref<!tpu.dma_semaphore, #tpu.memory_space<semaphore_mem>>)
      %c5_i32 = arith.constant 5 : i32
      %185 = arith.addi %104, %c5_i32 : i32
      %186 = arith.index_cast %185 : i32 to index
      %187 = memref.load %arg2[%186] : memref<8xi32, #tpu.memory_space<smem>>
      %188 = arith.addi %104, %c5_i32 : i32
      %189 = arith.index_cast %188 : i32 to index
      %190 = memref.load %arg3[%189] : memref<8xi32, #tpu.memory_space<smem>>
      %c0_i32_95 = arith.constant 0 : i32
      %c0_i32_96 = arith.constant 0 : i32
      %191 = tpu.memref_slice %arg4[%187, %c0_i32_96] : memref<1024x256xf32, #tpu.memory_space<any>> -> memref<1x256xf32, #tpu.memory_space<any>>
      %c0_i32_97 = arith.constant 0 : i32
      %192 = tpu.memref_slice %arg19[%103, %c5_i32, %c0_i32_97] : memref<2x8x256xf32, #tpu.memory_space<vmem>> -> memref<1x1x256xf32, #tpu.memory_space<vmem>>
      %193 = tpu.memref_squeeze %192 : memref<1x1x256xf32, #tpu.memory_space<vmem>> -> memref<1x256xf32, #tpu.memory_space<vmem>>
      %194 = tpu.memref_slice %arg21[%c0_i32_95, %103] : memref<2x2x!tpu.dma_semaphore, #tpu.memory_space<semaphore_mem>> -> memref<1x1x!tpu.dma_semaphore, #tpu.memory_space<semaphore_mem>>
      %195 = tpu.memref_squeeze %194 : memref<1x1x!tpu.dma_semaphore, #tpu.memory_space<semaphore_mem>> -> memref<!tpu.dma_semaphore, #tpu.memory_space<semaphore_mem>>
      tpu.enqueue_dma source(%191 : memref<1x256xf32, #tpu.memory_space<any>>) target(%193 : memref<1x256xf32, #tpu.memory_space<vmem>>) target_semaphore(%195 : memref<!tpu.dma_semaphore, #tpu.memory_space<semaphore_mem>>)
      %c1_i32_98 = arith.constant 1 : i32
      %c0_i32_99 = arith.constant 0 : i32
      %196 = tpu.memref_slice %arg5[%190, %c0_i32_99] : memref<512x256xf32, #tpu.memory_space<any>> -> memref<1x256xf32, #tpu.memory_space<any>>
      %c0_i32_100 = arith.constant 0 : i32
      %197 = tpu.memref_slice %arg20[%103, %c5_i32, %c0_i32_100] : memref<2x8x256xf32, #tpu.memory_space<vmem>> -> memref<1x1x256xf32, #tpu.memory_space<vmem>>
      %198 = tpu.memref_squeeze %197 : memref<1x1x256xf32, #tpu.memory_space<vmem>> -> memref<1x256xf32, #tpu.memory_space<vmem>>
      %199 = tpu.memref_slice %arg21[%c1_i32_98, %103] : memref<2x2x!tpu.dma_semaphore, #tpu.memory_space<semaphore_mem>> -> memref<1x1x!tpu.dma_semaphore, #tpu.memory_space<semaphore_mem>>
      %200 = tpu.memref_squeeze %199 : memref<1x1x!tpu.dma_semaphore, #tpu.memory_space<semaphore_mem>> -> memref<!tpu.dma_semaphore, #tpu.memory_space<semaphore_mem>>
      tpu.enqueue_dma source(%196 : memref<1x256xf32, #tpu.memory_space<any>>) target(%198 : memref<1x256xf32, #tpu.memory_space<vmem>>) target_semaphore(%200 : memref<!tpu.dma_semaphore, #tpu.memory_space<semaphore_mem>>)
      %c6_i32 = arith.constant 6 : i32
      %201 = arith.addi %104, %c6_i32 : i32
      %202 = arith.index_cast %201 : i32 to index
      %203 = memref.load %arg2[%202] : memref<8xi32, #tpu.memory_space<smem>>
      %204 = arith.addi %104, %c6_i32 : i32
      %205 = arith.index_cast %204 : i32 to index
      %206 = memref.load %arg3[%205] : memref<8xi32, #tpu.memory_space<smem>>
      %c0_i32_101 = arith.constant 0 : i32
      %c0_i32_102 = arith.constant 0 : i32
      %207 = tpu.memref_slice %arg4[%203, %c0_i32_102] : memref<1024x256xf32, #tpu.memory_space<any>> -> memref<1x256xf32, #tpu.memory_space<any>>
      %c0_i32_103 = arith.constant 0 : i32
      %208 = tpu.memref_slice %arg19[%103, %c6_i32, %c0_i32_103] : memref<2x8x256xf32, #tpu.memory_space<vmem>> -> memref<1x1x256xf32, #tpu.memory_space<vmem>>
      %209 = tpu.memref_squeeze %208 : memref<1x1x256xf32, #tpu.memory_space<vmem>> -> memref<1x256xf32, #tpu.memory_space<vmem>>
      %210 = tpu.memref_slice %arg21[%c0_i32_101, %103] : memref<2x2x!tpu.dma_semaphore, #tpu.memory_space<semaphore_mem>> -> memref<1x1x!tpu.dma_semaphore, #tpu.memory_space<semaphore_mem>>
      %211 = tpu.memref_squeeze %210 : memref<1x1x!tpu.dma_semaphore, #tpu.memory_space<semaphore_mem>> -> memref<!tpu.dma_semaphore, #tpu.memory_space<semaphore_mem>>
      tpu.enqueue_dma source(%207 : memref<1x256xf32, #tpu.memory_space<any>>) target(%209 : memref<1x256xf32, #tpu.memory_space<vmem>>) target_semaphore(%211 : memref<!tpu.dma_semaphore, #tpu.memory_space<semaphore_mem>>)
      %c1_i32_104 = arith.constant 1 : i32
      %c0_i32_105 = arith.constant 0 : i32
      %212 = tpu.memref_slice %arg5[%206, %c0_i32_105] : memref<512x256xf32, #tpu.memory_space<any>> -> memref<1x256xf32, #tpu.memory_space<any>>
      %c0_i32_106 = arith.constant 0 : i32
      %213 = tpu.memref_slice %arg20[%103, %c6_i32, %c0_i32_106] : memref<2x8x256xf32, #tpu.memory_space<vmem>> -> memref<1x1x256xf32, #tpu.memory_space<vmem>>
      %214 = tpu.memref_squeeze %213 : memref<1x1x256xf32, #tpu.memory_space<vmem>> -> memref<1x256xf32, #tpu.memory_space<vmem>>
      %215 = tpu.memref_slice %arg21[%c1_i32_104, %103] : memref<2x2x!tpu.dma_semaphore, #tpu.memory_space<semaphore_mem>> -> memref<1x1x!tpu.dma_semaphore, #tpu.memory_space<semaphore_mem>>
      %216 = tpu.memref_squeeze %215 : memref<1x1x!tpu.dma_semaphore, #tpu.memory_space<semaphore_mem>> -> memref<!tpu.dma_semaphore, #tpu.memory_space<semaphore_mem>>
      tpu.enqueue_dma source(%212 : memref<1x256xf32, #tpu.memory_space<any>>) target(%214 : memref<1x256xf32, #tpu.memory_space<vmem>>) target_semaphore(%216 : memref<!tpu.dma_semaphore, #tpu.memory_space<semaphore_mem>>)
      %c7_i32 = arith.constant 7 : i32
      %217 = arith.addi %104, %c7_i32 : i32
      %218 = arith.index_cast %217 : i32 to index
      %219 = memref.load %arg2[%218] : memref<8xi32, #tpu.memory_space<smem>>
      %220 = arith.addi %104, %c7_i32 : i32
      %221 = arith.index_cast %220 : i32 to index
      %222 = memref.load %arg3[%221] : memref<8xi32, #tpu.memory_space<smem>>
      %c0_i32_107 = arith.constant 0 : i32
      %c0_i32_108 = arith.constant 0 : i32
      %223 = tpu.memref_slice %arg4[%219, %c0_i32_108] : memref<1024x256xf32, #tpu.memory_space<any>> -> memref<1x256xf32, #tpu.memory_space<any>>
      %c0_i32_109 = arith.constant 0 : i32
      %224 = tpu.memref_slice %arg19[%103, %c7_i32, %c0_i32_109] : memref<2x8x256xf32, #tpu.memory_space<vmem>> -> memref<1x1x256xf32, #tpu.memory_space<vmem>>
      %225 = tpu.memref_squeeze %224 : memref<1x1x256xf32, #tpu.memory_space<vmem>> -> memref<1x256xf32, #tpu.memory_space<vmem>>
      %226 = tpu.memref_slice %arg21[%c0_i32_107, %103] : memref<2x2x!tpu.dma_semaphore, #tpu.memory_space<semaphore_mem>> -> memref<1x1x!tpu.dma_semaphore, #tpu.memory_space<semaphore_mem>>
      %227 = tpu.memref_squeeze %226 : memref<1x1x!tpu.dma_semaphore, #tpu.memory_space<semaphore_mem>> -> memref<!tpu.dma_semaphore, #tpu.memory_space<semaphore_mem>>
      tpu.enqueue_dma source(%223 : memref<1x256xf32, #tpu.memory_space<any>>) target(%225 : memref<1x256xf32, #tpu.memory_space<vmem>>) target_semaphore(%227 : memref<!tpu.dma_semaphore, #tpu.memory_space<semaphore_mem>>)
      %c1_i32_110 = arith.constant 1 : i32
      %c0_i32_111 = arith.constant 0 : i32
      %228 = tpu.memref_slice %arg5[%222, %c0_i32_111] : memref<512x256xf32, #tpu.memory_space<any>> -> memref<1x256xf32, #tpu.memory_space<any>>
      %c0_i32_112 = arith.constant 0 : i32
      %229 = tpu.memref_slice %arg20[%103, %c7_i32, %c0_i32_112] : memref<2x8x256xf32, #tpu.memory_space<vmem>> -> memref<1x1x256xf32, #tpu.memory_space<vmem>>
      %230 = tpu.memref_squeeze %229 : memref<1x1x256xf32, #tpu.memory_space<vmem>> -> memref<1x256xf32, #tpu.memory_space<vmem>>
      %231 = tpu.memref_slice %arg21[%c1_i32_110, %103] : memref<2x2x!tpu.dma_semaphore, #tpu.memory_space<semaphore_mem>> -> memref<1x1x!tpu.dma_semaphore, #tpu.memory_space<semaphore_mem>>
      %232 = tpu.memref_squeeze %231 : memref<1x1x!tpu.dma_semaphore, #tpu.memory_space<semaphore_mem>> -> memref<!tpu.dma_semaphore, #tpu.memory_space<semaphore_mem>>
      tpu.enqueue_dma source(%228 : memref<1x256xf32, #tpu.memory_space<any>>) target(%230 : memref<1x256xf32, #tpu.memory_space<vmem>>) target_semaphore(%232 : memref<!tpu.dma_semaphore, #tpu.memory_space<semaphore_mem>>)
      %c8_i32_113 = arith.constant 8 : i32
    } else {
    }
    %c0_i32_8 = arith.constant 0 : i32
    %c0_i32_9 = arith.constant 0 : i32
    %c0_i32_10 = arith.constant 0 : i32
    %17 = tpu.memref_slice %arg20[%9, %c0_i32_9, %c0_i32_10] : memref<2x8x256xf32, #tpu.memory_space<vmem>> -> memref<1x8x256xf32, #tpu.memory_space<vmem>>
    %18 = tpu.memref_squeeze %17 : memref<1x8x256xf32, #tpu.memory_space<vmem>> -> memref<8x256xf32, #tpu.memory_space<vmem>>
    %c0_i32_11 = arith.constant 0 : i32
    %c0_i32_12 = arith.constant 0 : i32
    %19 = tpu.memref_slice %arg19[%9, %c0_i32_11, %c0_i32_12] : memref<2x8x256xf32, #tpu.memory_space<vmem>> -> memref<1x8x256xf32, #tpu.memory_space<vmem>>
    %20 = tpu.memref_squeeze %19 : memref<1x8x256xf32, #tpu.memory_space<vmem>> -> memref<8x256xf32, #tpu.memory_space<vmem>>
    %21 = tpu.memref_slice %arg21[%c0_i32_8, %9] : memref<2x2x!tpu.dma_semaphore, #tpu.memory_space<semaphore_mem>> -> memref<1x1x!tpu.dma_semaphore, #tpu.memory_space<semaphore_mem>>
    %22 = tpu.memref_squeeze %21 : memref<1x1x!tpu.dma_semaphore, #tpu.memory_space<semaphore_mem>> -> memref<!tpu.dma_semaphore, #tpu.memory_space<semaphore_mem>>
    tpu.wait_dma2 semaphore(%22 : memref<!tpu.dma_semaphore, #tpu.memory_space<semaphore_mem>>) src(%18 : memref<8x256xf32, #tpu.memory_space<vmem>>) dst(%20 : memref<8x256xf32, #tpu.memory_space<vmem>>)
    %c1_i32_13 = arith.constant 1 : i32
    %c0_i32_14 = arith.constant 0 : i32
    %c0_i32_15 = arith.constant 0 : i32
    %23 = tpu.memref_slice %arg19[%9, %c0_i32_14, %c0_i32_15] : memref<2x8x256xf32, #tpu.memory_space<vmem>> -> memref<1x8x256xf32, #tpu.memory_space<vmem>>
    %24 = tpu.memref_squeeze %23 : memref<1x8x256xf32, #tpu.memory_space<vmem>> -> memref<8x256xf32, #tpu.memory_space<vmem>>
    %c0_i32_16 = arith.constant 0 : i32
    %c0_i32_17 = arith.constant 0 : i32
    %25 = tpu.memref_slice %arg20[%9, %c0_i32_16, %c0_i32_17] : memref<2x8x256xf32, #tpu.memory_space<vmem>> -> memref<1x8x256xf32, #tpu.memory_space<vmem>>
    %26 = tpu.memref_squeeze %25 : memref<1x8x256xf32, #tpu.memory_space<vmem>> -> memref<8x256xf32, #tpu.memory_space<vmem>>
    %27 = tpu.memref_slice %arg21[%c1_i32_13, %9] : memref<2x2x!tpu.dma_semaphore, #tpu.memory_space<semaphore_mem>> -> memref<1x1x!tpu.dma_semaphore, #tpu.memory_space<semaphore_mem>>
    %28 = tpu.memref_squeeze %27 : memref<1x1x!tpu.dma_semaphore, #tpu.memory_space<semaphore_mem>> -> memref<!tpu.dma_semaphore, #tpu.memory_space<semaphore_mem>>
    tpu.wait_dma2 semaphore(%28 : memref<!tpu.dma_semaphore, #tpu.memory_space<semaphore_mem>>) src(%24 : memref<8x256xf32, #tpu.memory_space<vmem>>) dst(%26 : memref<8x256xf32, #tpu.memory_space<vmem>>)
    %29 = arith.index_cast %9 : i32 to index
    %c0 = arith.constant 0 : index
    %c0_18 = arith.constant 0 : index
    %30 = vector.load %arg19[%29, %c0, %c0_18] : memref<2x8x256xf32, #tpu.memory_space<vmem>>, vector<1x8x128xf32>
    %31 = vector.shape_cast %30 : vector<1x8x128xf32> to vector<8x128xf32>
    %32 = arith.index_cast %9 : i32 to index
    %c0_19 = arith.constant 0 : index
    %c128 = arith.constant 128 : index
    %33 = vector.load %arg19[%32, %c0_19, %c128] : memref<2x8x256xf32, #tpu.memory_space<vmem>>, vector<1x8x128xf32>
    %34 = vector.shape_cast %33 : vector<1x8x128xf32> to vector<8x128xf32>
    %35 = arith.index_cast %9 : i32 to index
    %c0_20 = arith.constant 0 : index
    %c0_21 = arith.constant 0 : index
    %36 = vector.load %arg20[%35, %c0_20, %c0_21] : memref<2x8x256xf32, #tpu.memory_space<vmem>>, vector<1x8x128xf32>
    %37 = vector.shape_cast %36 : vector<1x8x128xf32> to vector<8x128xf32>
    %38 = arith.index_cast %9 : i32 to index
    %c0_22 = arith.constant 0 : index
    %c128_23 = arith.constant 128 : index
    %39 = vector.load %arg20[%38, %c0_22, %c128_23] : memref<2x8x256xf32, #tpu.memory_space<vmem>>, vector<1x8x128xf32>
    %40 = vector.shape_cast %39 : vector<1x8x128xf32> to vector<8x128xf32>
    %41 = arith.mulf %31, %37 : vector<8x128xf32>
    %c0_24 = arith.constant 0 : index
    %c0_25 = arith.constant 0 : index
    %42 = vector.load %arg6[%c0_24, %c0_25] : memref<1x128xf32, #tpu.memory_space<vmem>>, vector<1x128xf32>
    %43 = vector.broadcast %42 : vector<1x128xf32> to vector<8x128xf32>
    %44 = arith.mulf %41, %43 : vector<8x128xf32>
    %cst = arith.constant dense<0.000000e+00> : vector<8xf32>
    %45 = vector.multi_reduction <add>, %44, %cst [1] : vector<8x128xf32> to vector<8xf32>
    %46 = vector.shape_cast %45 : vector<8xf32> to vector<8x1xf32>
    %c0_26 = arith.constant 0 : index
    %47 = memref.load %arg17[%c0_26] : memref<8xf32, #tpu.memory_space<smem>>
    %48 = vector.broadcast %47 : f32 to vector<8x1xf32>
    %49 = arith.addf %46, %48 : vector<8x1xf32>
    %c0_27 = arith.constant 0 : index
    %c0_28 = arith.constant 0 : index
    %50 = vector.load %arg7[%c0_27, %c0_28] : memref<128x64xf32, #tpu.memory_space<vmem>>, vector<128x64xf32>
    %cst_29 = arith.constant dense<0.000000e+00> : vector<8x64xf32>
    %51 = tpu.matmul %34, %50, %cst_29 {dimension_numbers = #tpu.dot_dimension_numbers<[1], [0], [0], [1], [0, 0, 1, 1], [], []>} : vector<8x128xf32>, vector<128x64xf32>, vector<8x64xf32> -> vector<8x64xf32>
    %c0_30 = arith.constant 0 : index
    %c0_31 = arith.constant 0 : index
    %52 = vector.load %arg8[%c0_30, %c0_31] : memref<128x64xf32, #tpu.memory_space<vmem>>, vector<128x64xf32>
    %cst_32 = arith.constant dense<0.000000e+00> : vector<8x64xf32>
    %53 = tpu.matmul %40, %52, %cst_32 {dimension_numbers = #tpu.dot_dimension_numbers<[1], [0], [0], [1], [0, 0, 1, 1], [], []>} : vector<8x128xf32>, vector<128x64xf32>, vector<8x64xf32> -> vector<8x64xf32>
    %54 = arith.addf %51, %53 : vector<8x64xf32>
    %c0_33 = arith.constant 0 : index
    %c0_34 = arith.constant 0 : index
    %55 = vector.load %arg9[%c0_33, %c0_34] : memref<1x64xf32, #tpu.memory_space<vmem>>, vector<1x64xf32>
    %56 = vector.broadcast %55 : vector<1x64xf32> to vector<8x64xf32>
    %57 = arith.addf %54, %56 : vector<8x64xf32>
    %cst_35 = arith.constant 0.000000e+00 : f32
    %58 = vector.broadcast %cst_35 : f32 to vector<8x64xf32>
    %59 = arith.maximumf %57, %58 : vector<8x64xf32>
    %c0_36 = arith.constant 0 : index
    %c0_37 = arith.constant 0 : index
    %60 = vector.load %arg10[%c0_36, %c0_37] : memref<64x32xf32, #tpu.memory_space<vmem>>, vector<64x32xf32>
    %cst_38 = arith.constant dense<0.000000e+00> : vector<8x32xf32>
    %61 = tpu.matmul %59, %60, %cst_38 {dimension_numbers = #tpu.dot_dimension_numbers<[1], [0], [0], [1], [0, 0, 1, 1], [], []>} : vector<8x64xf32>, vector<64x32xf32>, vector<8x32xf32> -> vector<8x32xf32>
    %c0_39 = arith.constant 0 : index
    %c0_40 = arith.constant 0 : index
    %62 = vector.load %arg11[%c0_39, %c0_40] : memref<1x32xf32, #tpu.memory_space<vmem>>, vector<1x32xf32>
    %63 = vector.broadcast %62 : vector<1x32xf32> to vector<8x32xf32>
    %64 = arith.addf %61, %63 : vector<8x32xf32>
    %cst_41 = arith.constant 0.000000e+00 : f32
    %65 = vector.broadcast %cst_41 : f32 to vector<8x32xf32>
    %66 = arith.maximumf %64, %65 : vector<8x32xf32>
    %c0_42 = arith.constant 0 : index
    %c0_43 = arith.constant 0 : index
    %67 = vector.load %arg12[%c0_42, %c0_43] : memref<32x16xf32, #tpu.memory_space<vmem>>, vector<32x16xf32>
    %cst_44 = arith.constant dense<0.000000e+00> : vector<8x16xf32>
    %68 = tpu.matmul %66, %67, %cst_44 {dimension_numbers = #tpu.dot_dimension_numbers<[1], [0], [0], [1], [0, 0, 1, 1], [], []>} : vector<8x32xf32>, vector<32x16xf32>, vector<8x16xf32> -> vector<8x16xf32>
    %c0_45 = arith.constant 0 : index
    %c0_46 = arith.constant 0 : index
    %69 = vector.load %arg13[%c0_45, %c0_46] : memref<1x16xf32, #tpu.memory_space<vmem>>, vector<1x16xf32>
    %70 = vector.broadcast %69 : vector<1x16xf32> to vector<8x16xf32>
    %71 = arith.addf %68, %70 : vector<8x16xf32>
    %cst_47 = arith.constant 0.000000e+00 : f32
    %72 = vector.broadcast %cst_47 : f32 to vector<8x16xf32>
    %73 = arith.maximumf %71, %72 : vector<8x16xf32>
    %c0_48 = arith.constant 0 : index
    %c0_49 = arith.constant 0 : index
    %74 = vector.load %arg14[%c0_48, %c0_49] : memref<16x8xf32, #tpu.memory_space<vmem>>, vector<16x8xf32>
    %cst_50 = arith.constant dense<0.000000e+00> : vector<8x8xf32>
    %75 = tpu.matmul %73, %74, %cst_50 {dimension_numbers = #tpu.dot_dimension_numbers<[1], [0], [0], [1], [0, 0, 1, 1], [], []>} : vector<8x16xf32>, vector<16x8xf32>, vector<8x8xf32> -> vector<8x8xf32>
    %c0_51 = arith.constant 0 : index
    %c0_52 = arith.constant 0 : index
    %76 = vector.load %arg15[%c0_51, %c0_52] : memref<1x8xf32, #tpu.memory_space<vmem>>, vector<1x8xf32>
    %77 = vector.broadcast %76 : vector<1x8xf32> to vector<8x8xf32>
    %78 = arith.addf %75, %77 : vector<8x8xf32>
    %cst_53 = arith.constant 0.000000e+00 : f32
    %79 = vector.broadcast %cst_53 : f32 to vector<8x8xf32>
    %80 = arith.maximumf %78, %79 : vector<8x8xf32>
    %c0_54 = arith.constant 0 : index
    %c0_55 = arith.constant 0 : index
    %81 = vector.load %arg16[%c0_54, %c0_55] : memref<1x8xf32, #tpu.memory_space<vmem>>, vector<1x8xf32>
    %82 = vector.broadcast %81 : vector<1x8xf32> to vector<8x8xf32>
    %83 = arith.mulf %80, %82 : vector<8x8xf32>
    %cst_56 = arith.constant dense<0.000000e+00> : vector<8xf32>
    %84 = vector.multi_reduction <add>, %83, %cst_56 [1] : vector<8x8xf32> to vector<8xf32>
    %85 = vector.shape_cast %84 : vector<8xf32> to vector<8x1xf32>
    %c1 = arith.constant 1 : index
    %86 = memref.load %arg17[%c1] : memref<8xf32, #tpu.memory_space<smem>>
    %87 = vector.broadcast %86 : f32 to vector<8x1xf32>
    %88 = arith.addf %85, %87 : vector<8x1xf32>
    %c3 = arith.constant 3 : index
    %89 = memref.load %arg17[%c3] : memref<8xf32, #tpu.memory_space<smem>>
    %90 = vector.broadcast %89 : f32 to vector<8x1xf32>
    %91 = arith.mulf %90, %49 : vector<8x1xf32>
    %c4 = arith.constant 4 : index
    %92 = memref.load %arg17[%c4] : memref<8xf32, #tpu.memory_space<smem>>
    %93 = vector.broadcast %92 : f32 to vector<8x1xf32>
    %94 = arith.mulf %93, %88 : vector<8x1xf32>
    %95 = arith.addf %91, %94 : vector<8x1xf32>
    %c2 = arith.constant 2 : index
    %96 = memref.load %arg17[%c2] : memref<8xf32, #tpu.memory_space<smem>>
    %97 = vector.broadcast %96 : f32 to vector<8x1xf32>
    %98 = arith.addf %95, %97 : vector<8x1xf32>
    %c0_57 = arith.constant 0 : index
    %c0_58 = arith.constant 0 : index
    %99 = vector.load %arg18[%c0_57, %c0_58] : memref<8x1xf32, #tpu.memory_space<vmem>>, vector<8x1xf32>
    tpu.vector_store %arg18[%c0_57, %c0_58], %98 {strides = array<i32>} : memref<8x1xf32, #tpu.memory_space<vmem>>, vector<8x1xf32>,
    return
  }
  func.func @transform_2(%arg0: i32, %arg1: i32, %arg2: memref<8xi32, #tpu.memory_space<smem>>, %arg3: memref<8xi32, #tpu.memory_space<smem>>) -> (i32, i32) {
    %c0_i32 = arith.constant 0 : i32
    %c0_i32_0 = arith.constant 0 : i32
    %c0_i32_1 = arith.constant 0 : i32
    return %c0_i32, %c0_i32_0 : i32, i32
  }
  func.func @transform_3(%arg0: i32, %arg1: i32, %arg2: memref<8xi32, #tpu.memory_space<smem>>, %arg3: memref<8xi32, #tpu.memory_space<smem>>) -> (i32, i32) {
    %c0_i32 = arith.constant 0 : i32
    %c0_i32_0 = arith.constant 0 : i32
    %c0_i32_1 = arith.constant 0 : i32
    return %c0_i32, %c0_i32_0 : i32, i32
  }
  func.func @transform_4(%arg0: i32, %arg1: i32, %arg2: memref<8xi32, #tpu.memory_space<smem>>, %arg3: memref<8xi32, #tpu.memory_space<smem>>) -> (i32, i32) {
    %c0_i32 = arith.constant 0 : i32
    %c0_i32_0 = arith.constant 0 : i32
    %c0_i32_1 = arith.constant 0 : i32
    return %c0_i32, %c0_i32_0 : i32, i32
  }
  func.func @transform_5(%arg0: i32, %arg1: i32, %arg2: memref<8xi32, #tpu.memory_space<smem>>, %arg3: memref<8xi32, #tpu.memory_space<smem>>) -> (i32, i32) {
    %c0_i32 = arith.constant 0 : i32
    %c0_i32_0 = arith.constant 0 : i32
    %c0_i32_1 = arith.constant 0 : i32
    return %c0_i32, %c0_i32_0 : i32, i32
  }
  func.func @transform_6(%arg0: i32, %arg1: i32, %arg2: memref<8xi32, #tpu.memory_space<smem>>, %arg3: memref<8xi32, #tpu.memory_space<smem>>) -> (i32, i32) {
    %c0_i32 = arith.constant 0 : i32
    %c0_i32_0 = arith.constant 0 : i32
    %c0_i32_1 = arith.constant 0 : i32
    return %c0_i32, %c0_i32_0 : i32, i32
  }
  func.func @transform_7(%arg0: i32, %arg1: i32, %arg2: memref<8xi32, #tpu.memory_space<smem>>, %arg3: memref<8xi32, #tpu.memory_space<smem>>) -> (i32, i32) {
    %c0_i32 = arith.constant 0 : i32
    %c0_i32_0 = arith.constant 0 : i32
    %c0_i32_1 = arith.constant 0 : i32
    return %c0_i32, %c0_i32_0 : i32, i32
  }
  func.func @transform_8(%arg0: i32, %arg1: i32, %arg2: memref<8xi32, #tpu.memory_space<smem>>, %arg3: memref<8xi32, #tpu.memory_space<smem>>) -> (i32, i32) {
    %c0_i32 = arith.constant 0 : i32
    %c0_i32_0 = arith.constant 0 : i32
    %c0_i32_1 = arith.constant 0 : i32
    return %c0_i32, %c0_i32_0 : i32, i32
  }
  func.func @transform_9(%arg0: i32, %arg1: i32, %arg2: memref<8xi32, #tpu.memory_space<smem>>, %arg3: memref<8xi32, #tpu.memory_space<smem>>) -> (i32, i32) {
    %c0_i32 = arith.constant 0 : i32
    %c0_i32_0 = arith.constant 0 : i32
    %c0_i32_1 = arith.constant 0 : i32
    return %c0_i32, %c0_i32_0 : i32, i32
  }
  func.func @transform_10(%arg0: i32, %arg1: i32, %arg2: memref<8xi32, #tpu.memory_space<smem>>, %arg3: memref<8xi32, #tpu.memory_space<smem>>) -> (i32, i32) {
    %c0_i32 = arith.constant 0 : i32
    %c0_i32_0 = arith.constant 0 : i32
    %c0_i32_1 = arith.constant 0 : i32
    return %c0_i32, %c0_i32_0 : i32, i32
  }
  func.func @transform_11(%arg0: i32, %arg1: i32, %arg2: memref<8xi32, #tpu.memory_space<smem>>, %arg3: memref<8xi32, #tpu.memory_space<smem>>) -> (i32, i32) {
    %c0_i32 = arith.constant 0 : i32
    %c0_i32_0 = arith.constant 0 : i32
    %c0_i32_1 = arith.constant 0 : i32
    return %c0_i32, %c0_i32_0 : i32, i32
  }
  func.func @transform_12(%arg0: i32, %arg1: i32, %arg2: memref<8xi32, #tpu.memory_space<smem>>, %arg3: memref<8xi32, #tpu.memory_space<smem>>) -> (i32, i32) {
    %c0_i32 = arith.constant 0 : i32
    %c0_i32_0 = arith.constant 0 : i32
    %c0_i32_1 = arith.constant 0 : i32
    return %c0_i32, %c0_i32_0 : i32, i32
  }
  func.func @transform_13(%arg0: i32, %arg1: i32, %arg2: memref<8xi32, #tpu.memory_space<smem>>, %arg3: memref<8xi32, #tpu.memory_space<smem>>) -> i32 {
    %c0_i32 = arith.constant 0 : i32
    %c0_i32_0 = arith.constant 0 : i32
    return %c0_i32 : i32
  }
  func.func @transform_14(%arg0: i32, %arg1: i32, %arg2: memref<8xi32, #tpu.memory_space<smem>>, %arg3: memref<8xi32, #tpu.memory_space<smem>>) -> (i32, i32) {
    %c1_i32 = arith.constant 1 : i32
    %0 = arith.muli %arg0, %c1_i32 : i32
    %1 = arith.addi %0, %arg1 : i32
    %c0_i32 = arith.constant 0 : i32
    %c0_i32_0 = arith.constant 0 : i32
    return %1, %c0_i32 : i32, i32
  }
}

</mosaic_0001>

<llo_original>
// kernel: ncf_forward.1
$region0: #{ncf_forward.1}
  #allocation0 [shape = 'u32[]', space=smem, size = 0x4, offset = 0x4, fixed_abs, tag = 'smem constant byte address 0x4 - core index']
  #allocation1 [shape = 'u32[144,128]{1,0:T(1,128)}', space=vmem, size = 0x12000, scoped, tag = 'internal scratch']
  #allocation2 [shape = 'f32[2,8,256]{2,1,0:T(8,128)}', space=vmem, size = 0x4000, scoped, tag = 'scratch operand']
  #allocation3 [shape = 'f32[2,8,256]{2,1,0:T(8,128)}', space=vmem, size = 0x4000, scoped, tag = 'scratch operand']
  #allocation4 [shape = 's32[4]{0}', space=sflag, size = 0x10, scoped, tag = 'scratch operand']
  #allocation5 [shape = 's32[1]{0}', space=sflag, size = 0x4, scoped, tag = 'scoped memory for ncf_forward.1']
  #allocation6 [shape = 'u8[512]{0}', space=smem, size = 0x200, scoped, tag = 'prefetched SMEM operand 0']
  #allocation7 [shape = 'u8[512]{0}', space=smem, size = 0x200, scoped, tag = 'prefetched SMEM operand 1']
  #allocation10 [shape = 's32[]', space=sflag, size = 0x4, offset = 0, fixed_abs, tag = 'sflag constant byte address 0x0 - dummy sync flag']
  #allocation11 [shape = 's32[]', space=sflag, size = 0x4, offset = 0, fixed_abs, tag = 'sflag constant byte address 0x0 - dummy sync flag']
  #allocation12 [shape = 's32[]', space=sflag, size = 0x4, offset = 0, fixed_abs, tag = 'sflag constant byte address 0x0 - dummy sync flag']
  #allocation13 [shape = 's32[]', space=sflag, size = 0x4, offset = 0, fixed_abs, tag = 'sflag constant byte address 0x0 - dummy sync flag']
  #allocation14 [shape = 's32[]', space=sflag, size = 0x4, offset = 0, fixed_abs, tag = 'sflag constant byte address 0x0 - dummy sync flag']
  #allocation15 [shape = 's32[]', space=sflag, size = 0x4, offset = 0, fixed_abs, tag = 'sflag constant byte address 0x0 - dummy sync flag']
  #allocation16 [shape = 's32[]', space=sflag, size = 0x4, offset = 0, fixed_abs, tag = 'sflag constant byte address 0x0 - dummy sync flag']
  #allocation17 [shape = 's32[]', space=sflag, size = 0x4, offset = 0, fixed_abs, tag = 'sflag constant byte address 0x0 - dummy sync flag']
  #allocation18 [shape = 's32[]', space=sflag, size = 0x4, offset = 0, fixed_abs, tag = 'sflag constant byte address 0x0 - dummy sync flag']
  #allocation19 [shape = 's32[]', space=sflag, size = 0x4, offset = 0, fixed_abs, tag = 'sflag constant byte address 0x0 - dummy sync flag']
  #allocation20 [shape = 's32[]', space=sflag, size = 0x4, offset = 0, fixed_abs, tag = 'sflag constant byte address 0x0 - dummy sync flag']
  #allocation21 [shape = 's32[]', space=sflag, size = 0x4, offset = 0, fixed_abs, tag = 'sflag constant byte address 0x0 - dummy sync flag']
  #allocation22 [shape = 's32[]', space=sflag, size = 0x4, offset = 0, fixed_abs, tag = 'sflag constant byte address 0x0 - dummy sync flag']
  #allocation23 [shape = 's32[]', space=sflag, size = 0x4, offset = 0, fixed_abs, tag = 'sflag constant byte address 0x0 - dummy sync flag']
  #allocation24 [shape = 's32[]', space=sflag, size = 0x4, offset = 0, fixed_abs, tag = 'sflag constant byte address 0x0 - dummy sync flag']
  #allocation25 [shape = 's32[]', space=sflag, size = 0x4, offset = 0, fixed_abs, tag = 'sflag constant byte address 0x0 - dummy sync flag']
  #allocation26 [shape = 's32[]', space=sflag, size = 0x4, offset = 0, fixed_abs, tag = 'sflag constant byte address 0x0 - dummy sync flag']
  #allocation27 [shape = 's32[]', space=sflag, size = 0x4, offset = 0, fixed_abs, tag = 'sflag constant byte address 0x0 - dummy sync flag']
  #allocation28 [shape = 's32[]', space=sflag, size = 0x4, offset = 0, fixed_abs, tag = 'sflag constant byte address 0x0 - dummy sync flag']
  #allocation29 [shape = 's32[]', space=sflag, size = 0x4, offset = 0, fixed_abs, tag = 'sflag constant byte address 0x0 - dummy sync flag']
  #allocation30 [shape = 's32[]', space=sflag, size = 0x4, offset = 0, fixed_abs, tag = 'sflag constant byte address 0x0 - dummy sync flag']
  #allocation31 [shape = 's32[]', space=sflag, size = 0x4, offset = 0, fixed_abs, tag = 'sflag constant byte address 0x0 - dummy sync flag']
  #allocation32 [shape = 's32[]', space=sflag, size = 0x4, offset = 0, fixed_abs, tag = 'sflag constant byte address 0x0 - dummy sync flag']
  #allocation33 [shape = 's32[]', space=sflag, size = 0x4, offset = 0, fixed_abs, tag = 'sflag constant byte address 0x0 - dummy sync flag']
  #allocation34 [shape = 's32[]', space=sflag, size = 0x4, offset = 0, fixed_abs, tag = 'sflag constant byte address 0x0 - dummy sync flag']
  #allocation35 [shape = 's32[]', space=sflag, size = 0x4, offset = 0, fixed_abs, tag = 'sflag constant byte address 0x0 - dummy sync flag']
  #allocation36 [shape = 's32[]', space=sflag, size = 0x4, offset = 0, fixed_abs, tag = 'sflag constant byte address 0x0 - dummy sync flag']
  #allocation37 [shape = 's32[]', space=sflag, size = 0x4, offset = 0, fixed_abs, tag = 'sflag constant byte address 0x0 - dummy sync flag']
  #allocation38 [shape = 's32[]', space=sflag, size = 0x4, offset = 0, fixed_abs, tag = 'sflag constant byte address 0x0 - dummy sync flag']
  #allocation39 [shape = 's32[]', space=sflag, size = 0x4, offset = 0, fixed_abs, tag = 'sflag constant byte address 0x0 - dummy sync flag']
  #allocation40 [shape = 's32[]', space=sflag, size = 0x4, offset = 0, fixed_abs, tag = 'sflag constant byte address 0x0 - dummy sync flag']
  #allocation41 [shape = 's32[]', space=sflag, size = 0x4, offset = 0, fixed_abs, tag = 'sflag constant byte address 0x0 - dummy sync flag']
  %s0 = inlined_call_operand.vmem [shape: s32[8], index: 0, kind: input, shape index: {}]
  %s1 = inlined_call_operand.vmem [shape: s32[8], index: 1, kind: input, shape index: {}]
  %s2 = inlined_call_operand.hbm [shape: f32[1024,256], index: 2, kind: input, shape index: {}]
  %s3 = inlined_call_operand.vmem [shape: f32[512,256], index: 3, kind: input, shape index: {}]
  %s4 = inlined_call_operand.vmem [shape: f32[1,128], index: 4, kind: input, shape index: {}]
  %s5 = inlined_call_operand.vmem [shape: f32[128,64], index: 5, kind: input, shape index: {}]
  %s6 = inlined_call_operand.vmem [shape: f32[128,64], index: 6, kind: input, shape index: {}]
  %s7 = inlined_call_operand.vmem [shape: f32[1,64], index: 7, kind: input, shape index: {}]
  %s8 = inlined_call_operand.vmem [shape: f32[64,32], index: 8, kind: input, shape index: {}]
  %s9 = inlined_call_operand.vmem [shape: f32[1,32], index: 9, kind: input, shape index: {}]
  %s10 = inlined_call_operand.vmem [shape: f32[32,16], index: 10, kind: input, shape index: {}]
  %s11 = inlined_call_operand.vmem [shape: f32[1,16], index: 11, kind: input, shape index: {}]
  %s12 = inlined_call_operand.vmem [shape: f32[16,8], index: 12, kind: input, shape index: {}]
  %s13 = inlined_call_operand.vmem [shape: f32[1,8], index: 13, kind: input, shape index: {}]
  %s14 = inlined_call_operand.vmem [shape: f32[1,8], index: 14, kind: input, shape index: {}]
  %s15 = inlined_call_operand.vmem [shape: f32[8], index: 15, kind: input, shape index: {}]
  %s16 = inlined_call_operand.vmem [shape: f32[8,1], index: 16, kind: output, shape index: {}]
  %s17 = sld [smem:[#allocation0]]
  $region550: #{ncf_forward.1} parent=0
    _
  %s19 = ssub.s32 1, %s17
  %s20 = scalar_select 0, %s19, %s17
  %s21 = sshll.u32 %s0, 4
  %s22 = int_to_ptr.vmem [resolvable:$true] %s21
  %24 = dma.vmem_to_smem %s22, 16, [#allocation6], [#allocation5]
  %s25 = sshll.u32 %s1, 4
  %s26 = int_to_ptr.vmem [resolvable:$true] %s25
  %28 = dma.vmem_to_smem %s26, 16, [#allocation7], [#allocation5]
  %29 = dma.done [#allocation5], 32
  %30 = sfence
  $region1: #{ncf_forward.1} parent=0
    #allocation8 [shape = 'u8[512]{0}', space=smem, size = 0x200, scoped, tag = 'input window, operand 15, single buffered']
    #allocation9 [shape = 's32[1]{0}', space=sflag, size = 0x4, scoped, tag = 'scoped memory for ncf_forward.1']
    %31 = vsyncpa [#allocation9], 0
    // Predicated region
    $region2: #{ncf_forward.1} parent=1 // pred_check
      _
    $region3: #{ncf_forward.1} parent=1 // pred_check_branch
      %33 = sbr.rel (0) target = $region5
    $region4: #{ncf_forward.1} parent=1 // pred_region
      _
    $region5: #{ncf_forward.1} parent=1 // pred_fallthru
      _
    // Predicated region
    $region6: #{ncf_forward.1} parent=1 // pred_check
      _
    $region7: #{ncf_forward.1} parent=1 // pred_check_branch
      %35 = sbr.rel (0) target = $region9
    $region8: #{ncf_forward.1} parent=1 // pred_region
      _
    $region9: #{ncf_forward.1} parent=1 // pred_fallthru
      _
    // Predicated region
    $region10: #{ncf_forward.1} parent=1 // pred_check
      _
    $region11: #{ncf_forward.1} parent=1 // pred_check_branch
      %37 = sbr.rel (0) target = $region13
    $region12: #{ncf_forward.1} parent=1 // pred_region
      _
    $region13: #{ncf_forward.1} parent=1 // pred_fallthru
      _
    // Predicated region
    $region14: #{ncf_forward.1} parent=1 // pred_check
      _
    $region15: #{ncf_forward.1} parent=1 // pred_check_branch
      %39 = sbr.rel (0) target = $region17
    $region16: #{ncf_forward.1} parent=1 // pred_region
      _
    $region17: #{ncf_forward.1} parent=1 // pred_fallthru
      _
    // Predicated region
    $region18: #{ncf_forward.1} parent=1 // pred_check
      _
    $region19: #{ncf_forward.1} parent=1 // pred_check_branch
      %41 = sbr.rel (0) target = $region21
    $region20: #{ncf_forward.1} parent=1 // pred_region
      _
    $region21: #{ncf_forward.1} parent=1 // pred_fallthru
      _
    // Predicated region
    $region22: #{ncf_forward.1} parent=1 // pred_check
      _
    $region23: #{ncf_forward.1} parent=1 // pred_check_branch
      %43 = sbr.rel (0) target = $region25
    $region24: #{ncf_forward.1} parent=1 // pred_region
      _
    $region25: #{ncf_forward.1} parent=1 // pred_fallthru
      _
    // Predicated region
    $region26: #{ncf_forward.1} parent=1 // pred_check
      _
    $region27: #{ncf_forward.1} parent=1 // pred_check_branch
      %45 = sbr.rel (0) target = $region29
    $region28: #{ncf_forward.1} parent=1 // pred_region
      _
    $region29: #{ncf_forward.1} parent=1 // pred_fallthru
      _
    // Predicated region
    $region30: #{ncf_forward.1} parent=1 // pred_check
      _
    $region31: #{ncf_forward.1} parent=1 // pred_check_branch
      %47 = sbr.rel (0) target = $region33
    $region32: #{ncf_forward.1} parent=1 // pred_region
      _
    $region33: #{ncf_forward.1} parent=1 // pred_fallthru
      _
    // Predicated region
    $region34: #{ncf_forward.1} parent=1 // pred_check
      _
    $region35: #{ncf_forward.1} parent=1 // pred_check_branch
      %49 = sbr.rel (0) target = $region37
    $region36: #{ncf_forward.1} parent=1 // pred_region
      _
    $region37: #{ncf_forward.1} parent=1 // pred_fallthru
      _
    // Predicated region
    $region38: #{ncf_forward.1} parent=1 // pred_check
      _
    $region39: #{ncf_forward.1} parent=1 // pred_check_branch
      %51 = sbr.rel (0) target = $region41
    $region40: #{ncf_forward.1} parent=1 // pred_region
      _
    $region41: #{ncf_forward.1} parent=1 // pred_fallthru
      _
    // Predicated region
    $region42: #{ncf_forward.1} parent=1 // pred_check
      _
    $region43: #{ncf_forward.1} parent=1 // pred_check_branch
      %53 = sbr.rel (0) target = $region45
    $region44: #{ncf_forward.1} parent=1 // pred_region
      _
    $region45: #{ncf_forward.1} parent=1 // pred_fallthru
      _
    // Predicated region
    $region46: #{ncf_forward.1} parent=1 // pred_check
      _
    $region47: #{ncf_forward.1} parent=1 // pred_check_branch
      %55 = sbr.rel (0) target = $region49
    $region48: #{ncf_forward.1} parent=1 // pred_region
      %s57 = ssub.s32 16, 16
      %58 = vsyncadd [#allocation9], %s57
      %s60 = sshll.u32 %s15, 4
      %s61 = int_to_ptr.vmem [resolvable:$true] %s60
      %63 = dma.vmem_to_smem %s61, 16, [#allocation8], [#allocation9]
    $region49: #{ncf_forward.1} parent=1 // pred_fallthru
      _
    // Predicated region
    $region50: #{ncf_forward.1} parent=1 // pred_check
      _
    $region51: #{ncf_forward.1} parent=1 // pred_check_branch
      %65 = sbr.rel (0) target = $region53
    $region52: #{ncf_forward.1} parent=1 // pred_region
      %66 = dma.done [#allocation9], 16
    $region53: #{ncf_forward.1} parent=1 // pred_fallthru
      _
    %67 = sfence
    %s68 = sadd.s32 0, 0
    %p69 = scmp.lt.s32.totalorder %s68, 0
    %s70 = scalar_select %p69, %s68, 0
    %s71 = smul.addr %s70, 8
    %s72 = scalar_lea.vmem %s16, %s71
    %s73 = sadd.s32 0, 0
    %p74 = scmp.lt.s32.totalorder %s73, 0
    %s75 = scalar_select %p74, %s73, 0
    %s76 = smul.addr %s75, 8
    %s77 = scalar_lea.vmem %s16, %s76
    %s78 = sadd.s32 0, 0
    %s79 = ssub.s32 0, 0
    %s80 = ssub.s32 0, 0
    %p81 = scmp.ne.s32.totalorder 0, 0
    %p82 = scmp.lt.s32.totalorder 0, 0
    %p83 = pnand %p82, %p81
    %p84 = pneg %p83
    %s85 = sadd.s32 0, 2
    %s86 = scalar_select %p84, %s85, 0
    %p87 = scmp.eq.s32.totalorder 0, 0
    // Predicated region
    $region54: #{ncf_forward.1} parent=1 // pred_check
      %p88 = pneg %p87
    $region55: #{ncf_forward.1} parent=1 // pred_check_branch
      %90 = sbr.rel (%p88) target = $region57
    $region56: #{ncf_forward.1} parent=1 // pred_region
      %s91 = smul.u32 0, 8
      %s92 = sld [smem:[#allocation6 + %s91]]
      %s93 = sld [smem:[#allocation7 + %s91]]
      %s94 = sshrl.u32 %s92, 3
      %s95 = sand.u32 %s92, 7
      %s96 = smul.u32 %s94, 16
      %s97 = sadd.s32 %s95, %s96
      %s98 = smul.addr %s97, 16
      %s99 = scalar_lea.hbm %s2, %s98
      %s100 = smul.u32 %s86, 16
      %s101 = scalar_lea.vmem [#allocation2], %s100
      %s102 = scalar_lea.sflag [#allocation4], %s86
      %s104 = sshll.u32 %s101, 4
      %s105 = int_to_ptr.vmem [resolvable:$true] %s104
      %107 = dma.hbm_to_vmem [thread:$0]  %s99, 32, %s105, %s102, 128, 128, 1
      %s108 = sshrl.u32 %s93, 3
      %s109 = sand.u32 %s93, 7
      %s110 = smul.u32 %s108, 16
      %s111 = sadd.s32 %s109, %s110
      %s112 = scalar_lea.vmem %s3, %s111
      %s113 = scalar_lea.vmem [#allocation3], %s100
      %s114 = sadd.s32 %s86, 2
      %s115 = scalar_lea.sflag [#allocation4], %s114
      %p117 = scmp.lt.u32.totalorder 1, 8
      %p118 = pneg %p117
      // Predicated region
      $region58: #{ncf_forward.1} parent=56 // pred_check
        _
      $region59: #{ncf_forward.1} parent=56 // pred_check_branch
        %120 = sbr.rel (%p117) target = $region61
      $region60: #{ncf_forward.1} parent=56 // pred_region
        %s137 = sand.u32 1, 7
        %p138 = scmp.eq.s32.totalorder %s137, 0
        %p139 = pneg %p138
        // Predicated region
        $region73: #{ncf_forward.1} parent=60 // pred_check
          _
        $region74: #{ncf_forward.1} parent=60 // pred_check_branch
          %141 = sbr.rel (%p138) target = $region76
        $region75: #{ncf_forward.1} parent=60 // pred_region
          %s142 = sand.u32 1, 7
          %s143 = ssub.s32 1, %s142
          %s144 = scalar_lea.vmem %s112, %s143
          %s145 = ssub.s32 1, %s142
          %s146 = scalar_lea.vmem %s113, %s145 [#allocation3]
          %s147 = sshllo.u32 0, %s142
          loop: start=0, step=1, limit=1
          $region77: #{ncf_forward.1} parent=75 // loop_pre_header
            _
          $region78: #{ncf_forward.1} parent=75 // loop_header
            %s149 = sphi 0, %s153
            %p150 = scmp.ge.s32.totalorder %s149, 1
            %s154 = sphi %s144, %s144
            %s155 = sphi %s146, %s146
          $region79: #{ncf_forward.1} parent=75 // loop_header_branch
            %152 = sbr.rel (%p150) target = $region83
          $region80: #{ncf_forward.1} parent=75 // loop_body
            %v156 = vld [vmem:[%s154] sm:%s147]
            %157 = vst [vmem:[%s155] sm:%s147] %v156
            %v158 = vld [vmem:[%s154 + $0x8] sm:%s147]
            %159 = vst [vmem:[%s155 + $0x8] sm:%s147] %v158
          $region81: #{ncf_forward.1} parent=75 // loop_footer
            %s153 = sadd.s32 1, %s149
          $region82: #{ncf_forward.1} parent=75 // loop_footer_branch
            %148 = sbr.rel target = $region78
          $region83: #{ncf_forward.1} parent=75 // loop_exit
            _
        $region76: #{ncf_forward.1} parent=60 // pred_fallthru
          _
      $region61: #{ncf_forward.1} parent=56 // pred_fallthru
        _
      // Predicated region
      $region62: #{ncf_forward.1} parent=56 // pred_check
        %p121 = pneg %p117
      $region63: #{ncf_forward.1} parent=56 // pred_check_branch
        %123 = sbr.rel (%p121) target = $region65
      $region64: #{ncf_forward.1} parent=56 // pred_region
        %s124 = sshllo.u32 0, 1
        loop: start=0, step=1, limit=1
        $region66: #{ncf_forward.1} parent=64 // loop_pre_header
          _
        $region67: #{ncf_forward.1} parent=64 // loop_header
          %s126 = sphi 0, %s130
          %p127 = scmp.ge.s32.totalorder %s126, 1
          %s131 = sphi %s112, %s112
          %s132 = sphi %s113, %s113
        $region68: #{ncf_forward.1} parent=64 // loop_header_branch
          %129 = sbr.rel (%p127) target = $region72
        $region69: #{ncf_forward.1} parent=64 // loop_body
          %v133 = vld [vmem:[%s131] sm:%s124]
          %134 = vst [vmem:[%s132] sm:%s124] %v133
          %v135 = vld [vmem:[%s131 + $0x8] sm:%s124]
          %136 = vst [vmem:[%s132 + $0x8] sm:%s124] %v135
        $region70: #{ncf_forward.1} parent=64 // loop_footer
          %s130 = sadd.s32 1, %s126
        $region71: #{ncf_forward.1} parent=64 // loop_footer_branch
          %125 = sbr.rel target = $region67
        $region72: #{ncf_forward.1} parent=64 // loop_exit
          _
      $region65: #{ncf_forward.1} parent=56 // pred_fallthru
        _
      // Predicated region
      $region84: #{ncf_forward.1} parent=56 // pred_check
        _
      $region85: #{ncf_forward.1} parent=56 // pred_check_branch
        %162 = sbr.rel (0) target = $region87
      $region86: #{ncf_forward.1} parent=56 // pred_region
        %163 = vsyncadd %s115, 32
      $region87: #{ncf_forward.1} parent=56 // pred_fallthru
        _
      %s164 = sadd.s32 %s91, 1
      %s165 = sld [smem:[#allocation6 + %s164]]
      %s166 = sld [smem:[#allocation7 + %s164]]
      %s167 = sshrl.u32 %s165, 3
      %s168 = sand.u32 %s165, 7
      %s169 = smul.u32 %s167, 16
      %s170 = sadd.s32 %s168, %s169
      %s171 = smul.addr %s170, 16
      %s172 = scalar_lea.hbm %s2, %s171
      %s173 = sadd.s32 1, %s100
      %s174 = scalar_lea.vmem [#allocation2], %s173
      %s176 = sshll.u32 %s174, 4
      %s177 = int_to_ptr.vmem [resolvable:$true] %s176
      %179 = dma.hbm_to_vmem [thread:$0]  %s172, 32, %s177, %s102, 128, 128, 1
      %s180 = sshrl.u32 %s166, 3
      %s181 = sand.u32 %s166, 7
      %s182 = smul.u32 %s180, 16
      %s183 = sadd.s32 %s181, %s182
      %s184 = scalar_lea.vmem %s3, %s183
      %s185 = scalar_lea.vmem [#allocation3], %s173
      %p187 = scmp.lt.u32.totalorder 1, 8
      %p188 = pneg %p187
      // Predicated region
      $region88: #{ncf_forward.1} parent=56 // pred_check
        _
      $region89: #{ncf_forward.1} parent=56 // pred_check_branch
        %190 = sbr.rel (%p187) target = $region91
      $region90: #{ncf_forward.1} parent=56 // pred_region
        %s207 = sand.u32 1, 7
        %p208 = scmp.eq.s32.totalorder %s207, 0
        %p209 = pneg %p208
        // Predicated region
        $region103: #{ncf_forward.1} parent=90 // pred_check
          _
        $region104: #{ncf_forward.1} parent=90 // pred_check_branch
          %211 = sbr.rel (%p208) target = $region106
        $region105: #{ncf_forward.1} parent=90 // pred_region
          %s212 = sand.u32 1, 7
          %s213 = ssub.s32 1, %s212
          %s214 = scalar_lea.vmem %s184, %s213
          %s215 = ssub.s32 1, %s212
          %s216 = scalar_lea.vmem %s185, %s215 [#allocation3]
          %s217 = sshllo.u32 0, %s212
          loop: start=0, step=1, limit=1
          $region107: #{ncf_forward.1} parent=105 // loop_pre_header
            _
          $region108: #{ncf_forward.1} parent=105 // loop_header
            %s219 = sphi 0, %s223
            %p220 = scmp.ge.s32.totalorder %s219, 1
            %s224 = sphi %s214, %s214
            %s225 = sphi %s216, %s216
          $region109: #{ncf_forward.1} parent=105 // loop_header_branch
            %222 = sbr.rel (%p220) target = $region113
          $region110: #{ncf_forward.1} parent=105 // loop_body
            %v226 = vld [vmem:[%s224] sm:%s217]
            %227 = vst [vmem:[%s225] sm:%s217] %v226
            %v228 = vld [vmem:[%s224 + $0x8] sm:%s217]
            %229 = vst [vmem:[%s225 + $0x8] sm:%s217] %v228
          $region111: #{ncf_forward.1} parent=105 // loop_footer
            %s223 = sadd.s32 1, %s219
          $region112: #{ncf_forward.1} parent=105 // loop_footer_branch
            %218 = sbr.rel target = $region108
          $region113: #{ncf_forward.1} parent=105 // loop_exit
            _
        $region106: #{ncf_forward.1} parent=90 // pred_fallthru
          _
      $region91: #{ncf_forward.1} parent=56 // pred_fallthru
        _
      // Predicated region
      $region92: #{ncf_forward.1} parent=56 // pred_check
        %p191 = pneg %p187
      $region93: #{ncf_forward.1} parent=56 // pred_check_branch
        %193 = sbr.rel (%p191) target = $region95
      $region94: #{ncf_forward.1} parent=56 // pred_region
        %s194 = sshllo.u32 0, 1
        loop: start=0, step=1, limit=1
        $region96: #{ncf_forward.1} parent=94 // loop_pre_header
          _
        $region97: #{ncf_forward.1} parent=94 // loop_header
          %s196 = sphi 0, %s200
          %p197 = scmp.ge.s32.totalorder %s196, 1
          %s201 = sphi %s184, %s184
          %s202 = sphi %s185, %s185
        $region98: #{ncf_forward.1} parent=94 // loop_header_branch
          %199 = sbr.rel (%p197) target = $region102
        $region99: #{ncf_forward.1} parent=94 // loop_body
          %v203 = vld [vmem:[%s201] sm:%s194]
          %204 = vst [vmem:[%s202] sm:%s194] %v203
          %v205 = vld [vmem:[%s201 + $0x8] sm:%s194]
          %206 = vst [vmem:[%s202 + $0x8] sm:%s194] %v205
        $region100: #{ncf_forward.1} parent=94 // loop_footer
          %s200 = sadd.s32 1, %s196
        $region101: #{ncf_forward.1} parent=94 // loop_footer_branch
          %195 = sbr.rel target = $region97
        $region102: #{ncf_forward.1} parent=94 // loop_exit
          _
      $region95: #{ncf_forward.1} parent=56 // pred_fallthru
        _
      // Predicated region
      $region114: #{ncf_forward.1} parent=56 // pred_check
        _
      $region115: #{ncf_forward.1} parent=56 // pred_check_branch
        %232 = sbr.rel (0) target = $region117
      $region116: #{ncf_forward.1} parent=56 // pred_region
        %233 = vsyncadd %s115, 32
      $region117: #{ncf_forward.1} parent=56 // pred_fallthru
        _
      %s234 = sadd.s32 %s91, 2
      %s235 = sld [smem:[#allocation6 + %s234]]
      %s236 = sld [smem:[#allocation7 + %s234]]
      %s237 = sshrl.u32 %s235, 3
      %s238 = sand.u32 %s235, 7
      %s239 = smul.u32 %s237, 16
      %s240 = sadd.s32 %s238, %s239
      %s241 = smul.addr %s240, 16
      %s242 = scalar_lea.hbm %s2, %s241
      %s243 = sadd.s32 2, %s100
      %s244 = scalar_lea.vmem [#allocation2], %s243
      %s246 = sshll.u32 %s244, 4
      %s247 = int_to_ptr.vmem [resolvable:$true] %s246
      %249 = dma.hbm_to_vmem [thread:$0]  %s242, 32, %s247, %s102, 128, 128, 1
      %s250 = sshrl.u32 %s236, 3
      %s251 = sand.u32 %s236, 7
      %s252 = smul.u32 %s250, 16
      %s253 = sadd.s32 %s251, %s252
      %s254 = scalar_lea.vmem %s3, %s253
      %s255 = scalar_lea.vmem [#allocation3], %s243
      %p257 = scmp.lt.u32.totalorder 1, 8
      %p258 = pneg %p257
      // Predicated region
      $region118: #{ncf_forward.1} parent=56 // pred_check
        _
      $region119: #{ncf_forward.1} parent=56 // pred_check_branch
        %260 = sbr.rel (%p257) target = $region121
      $region120: #{ncf_forward.1} parent=56 // pred_region
        %s277 = sand.u32 1, 7
        %p278 = scmp.eq.s32.totalorder %s277, 0
        %p279 = pneg %p278
        // Predicated region
        $region133: #{ncf_forward.1} parent=120 // pred_check
          _
        $region134: #{ncf_forward.1} parent=120 // pred_check_branch
          %281 = sbr.rel (%p278) target = $region136
        $region135: #{ncf_forward.1} parent=120 // pred_region
          %s282 = sand.u32 1, 7
          %s283 = ssub.s32 1, %s282
          %s284 = scalar_lea.vmem %s254, %s283
          %s285 = ssub.s32 1, %s282
          %s286 = scalar_lea.vmem %s255, %s285 [#allocation3]
          %s287 = sshllo.u32 0, %s282
          loop: start=0, step=1, limit=1
          $region137: #{ncf_forward.1} parent=135 // loop_pre_header
            _
          $region138: #{ncf_forward.1} parent=135 // loop_header
            %s289 = sphi 0, %s293
            %p290 = scmp.ge.s32.totalorder %s289, 1
            %s294 = sphi %s284, %s284
            %s295 = sphi %s286, %s286
          $region139: #{ncf_forward.1} parent=135 // loop_header_branch
            %292 = sbr.rel (%p290) target = $region143
          $region140: #{ncf_forward.1} parent=135 // loop_body
            %v296 = vld [vmem:[%s294] sm:%s287]
            %297 = vst [vmem:[%s295] sm:%s287] %v296
            %v298 = vld [vmem:[%s294 + $0x8] sm:%s287]
            %299 = vst [vmem:[%s295 + $0x8] sm:%s287] %v298
          $region141: #{ncf_forward.1} parent=135 // loop_footer
            %s293 = sadd.s32 1, %s289
          $region142: #{ncf_forward.1} parent=135 // loop_footer_branch
            %288 = sbr.rel target = $region138
          $region143: #{ncf_forward.1} parent=135 // loop_exit
            _
        $region136: #{ncf_forward.1} parent=120 // pred_fallthru
          _
      $region121: #{ncf_forward.1} parent=56 // pred_fallthru
        _
      // Predicated region
      $region122: #{ncf_forward.1} parent=56 // pred_check
        %p261 = pneg %p257
      $region123: #{ncf_forward.1} parent=56 // pred_check_branch
        %263 = sbr.rel (%p261) target = $region125
      $region124: #{ncf_forward.1} parent=56 // pred_region
        %s264 = sshllo.u32 0, 1
        loop: start=0, step=1, limit=1
        $region126: #{ncf_forward.1} parent=124 // loop_pre_header
          _
        $region127: #{ncf_forward.1} parent=124 // loop_header
          %s266 = sphi 0, %s270
          %p267 = scmp.ge.s32.totalorder %s266, 1
          %s271 = sphi %s254, %s254
          %s272 = sphi %s255, %s255
        $region128: #{ncf_forward.1} parent=124 // loop_header_branch
          %269 = sbr.rel (%p267) target = $region132
        $region129: #{ncf_forward.1} parent=124 // loop_body
          %v273 = vld [vmem:[%s271] sm:%s264]
          %274 = vst [vmem:[%s272] sm:%s264] %v273
          %v275 = vld [vmem:[%s271 + $0x8] sm:%s264]
          %276 = vst [vmem:[%s272 + $0x8] sm:%s264] %v275
        $region130: #{ncf_forward.1} parent=124 // loop_footer
          %s270 = sadd.s32 1, %s266
        $region131: #{ncf_forward.1} parent=124 // loop_footer_branch
          %265 = sbr.rel target = $region127
        $region132: #{ncf_forward.1} parent=124 // loop_exit
          _
      $region125: #{ncf_forward.1} parent=56 // pred_fallthru
        _
      // Predicated region
      $region144: #{ncf_forward.1} parent=56 // pred_check
        _
      $region145: #{ncf_forward.1} parent=56 // pred_check_branch
        %302 = sbr.rel (0) target = $region147
      $region146: #{ncf_forward.1} parent=56 // pred_region
        %303 = vsyncadd %s115, 32
      $region147: #{ncf_forward.1} parent=56 // pred_fallthru
        _
      %s304 = sadd.s32 %s91, 3
      %s305 = sld [smem:[#allocation6 + %s304]]
      %s306 = sld [smem:[#allocation7 + %s304]]
      %s307 = sshrl.u32 %s305, 3
      %s308 = sand.u32 %s305, 7
      %s309 = smul.u32 %s307, 16
      %s310 = sadd.s32 %s308, %s309
      %s311 = smul.addr %s310, 16
      %s312 = scalar_lea.hbm %s2, %s311
      %s313 = sadd.s32 3, %s100
      %s314 = scalar_lea.vmem [#allocation2], %s313
      %s316 = sshll.u32 %s314, 4
      %s317 = int_to_ptr.vmem [resolvable:$true] %s316
      %319 = dma.hbm_to_vmem [thread:$0]  %s312, 32, %s317, %s102, 128, 128, 1
      %s320 = sshrl.u32 %s306, 3
      %s321 = sand.u32 %s306, 7
      %s322 = smul.u32 %s320, 16
      %s323 = sadd.s32 %s321, %s322
      %s324 = scalar_lea.vmem %s3, %s323
      %s325 = scalar_lea.vmem [#allocation3], %s313
      %p327 = scmp.lt.u32.totalorder 1, 8
      %p328 = pneg %p327
      // Predicated region
      $region148: #{ncf_forward.1} parent=56 // pred_check
        _
      $region149: #{ncf_forward.1} parent=56 // pred_check_branch
        %330 = sbr.rel (%p327) target = $region151
      $region150: #{ncf_forward.1} parent=56 // pred_region
        %s347 = sand.u32 1, 7
        %p348 = scmp.eq.s32.totalorder %s347, 0
        %p349 = pneg %p348
        // Predicated region
        $region163: #{ncf_forward.1} parent=150 // pred_check
          _
        $region164: #{ncf_forward.1} parent=150 // pred_check_branch
          %351 = sbr.rel (%p348) target = $region166
        $region165: #{ncf_forward.1} parent=150 // pred_region
          %s352 = sand.u32 1, 7
          %s353 = ssub.s32 1, %s352
          %s354 = scalar_lea.vmem %s324, %s353
          %s355 = ssub.s32 1, %s352
          %s356 = scalar_lea.vmem %s325, %s355 [#allocation3]
          %s357 = sshllo.u32 0, %s352
          loop: start=0, step=1, limit=1
          $region167: #{ncf_forward.1} parent=165 // loop_pre_header
            _
          $region168: #{ncf_forward.1} parent=165 // loop_header
            %s359 = sphi 0, %s363
            %p360 = scmp.ge.s32.totalorder %s359, 1
            %s364 = sphi %s354, %s354
            %s365 = sphi %s356, %s356
          $region169: #{ncf_forward.1} parent=165 // loop_header_branch
            %362 = sbr.rel (%p360) target = $region173
          $region170: #{ncf_forward.1} parent=165 // loop_body
            %v366 = vld [vmem:[%s364] sm:%s357]
            %367 = vst [vmem:[%s365] sm:%s357] %v366
            %v368 = vld [vmem:[%s364 + $0x8] sm:%s357]
            %369 = vst [vmem:[%s365 + $0x8] sm:%s357] %v368
          $region171: #{ncf_forward.1} parent=165 // loop_footer
            %s363 = sadd.s32 1, %s359
          $region172: #{ncf_forward.1} parent=165 // loop_footer_branch
            %358 = sbr.rel target = $region168
          $region173: #{ncf_forward.1} parent=165 // loop_exit
            _
        $region166: #{ncf_forward.1} parent=150 // pred_fallthru
          _
      $region151: #{ncf_forward.1} parent=56 // pred_fallthru
        _
      // Predicated region
      $region152: #{ncf_forward.1} parent=56 // pred_check
        %p331 = pneg %p327
      $region153: #{ncf_forward.1} parent=56 // pred_check_branch
        %333 = sbr.rel (%p331) target = $region155
      $region154: #{ncf_forward.1} parent=56 // pred_region
        %s334 = sshllo.u32 0, 1
        loop: start=0, step=1, limit=1
        $region156: #{ncf_forward.1} parent=154 // loop_pre_header
          _
        $region157: #{ncf_forward.1} parent=154 // loop_header
          %s336 = sphi 0, %s340
          %p337 = scmp.ge.s32.totalorder %s336, 1
          %s341 = sphi %s324, %s324
          %s342 = sphi %s325, %s325
        $region158: #{ncf_forward.1} parent=154 // loop_header_branch
          %339 = sbr.rel (%p337) target = $region162
        $region159: #{ncf_forward.1} parent=154 // loop_body
          %v343 = vld [vmem:[%s341] sm:%s334]
          %344 = vst [vmem:[%s342] sm:%s334] %v343
          %v345 = vld [vmem:[%s341 + $0x8] sm:%s334]
          %346 = vst [vmem:[%s342 + $0x8] sm:%s334] %v345
        $region160: #{ncf_forward.1} parent=154 // loop_footer
          %s340 = sadd.s32 1, %s336
        $region161: #{ncf_forward.1} parent=154 // loop_footer_branch
          %335 = sbr.rel target = $region157
        $region162: #{ncf_forward.1} parent=154 // loop_exit
          _
      $region155: #{ncf_forward.1} parent=56 // pred_fallthru
        _
      // Predicated region
      $region174: #{ncf_forward.1} parent=56 // pred_check
        _
      $region175: #{ncf_forward.1} parent=56 // pred_check_branch
        %372 = sbr.rel (0) target = $region177
      $region176: #{ncf_forward.1} parent=56 // pred_region
        %373 = vsyncadd %s115, 32
      $region177: #{ncf_forward.1} parent=56 // pred_fallthru
        _
      %s374 = sadd.s32 %s91, 4
      %s375 = sld [smem:[#allocation6 + %s374]]
      %s376 = sld [smem:[#allocation7 + %s374]]
      %s377 = sshrl.u32 %s375, 3
      %s378 = sand.u32 %s375, 7
      %s379 = smul.u32 %s377, 16
      %s380 = sadd.s32 %s378, %s379
      %s381 = smul.addr %s380, 16
      %s382 = scalar_lea.hbm %s2, %s381
      %s383 = sadd.s32 4, %s100
      %s384 = scalar_lea.vmem [#allocation2], %s383
      %s386 = sshll.u32 %s384, 4
      %s387 = int_to_ptr.vmem [resolvable:$true] %s386
      %389 = dma.hbm_to_vmem [thread:$0]  %s382, 32, %s387, %s102, 128, 128, 1
      %s390 = sshrl.u32 %s376, 3
      %s391 = sand.u32 %s376, 7
      %s392 = smul.u32 %s390, 16
      %s393 = sadd.s32 %s391, %s392
      %s394 = scalar_lea.vmem %s3, %s393
      %s395 = scalar_lea.vmem [#allocation3], %s383
      %p397 = scmp.lt.u32.totalorder 1, 8
      %p398 = pneg %p397
      // Predicated region
      $region178: #{ncf_forward.1} parent=56 // pred_check
        _
      $region179: #{ncf_forward.1} parent=56 // pred_check_branch
        %400 = sbr.rel (%p397) target = $region181
      $region180: #{ncf_forward.1} parent=56 // pred_region
        %s417 = sand.u32 1, 7
        %p418 = scmp.eq.s32.totalorder %s417, 0
        %p419 = pneg %p418
        // Predicated region
        $region193: #{ncf_forward.1} parent=180 // pred_check
          _
        $region194: #{ncf_forward.1} parent=180 // pred_check_branch
          %421 = sbr.rel (%p418) target = $region196
        $region195: #{ncf_forward.1} parent=180 // pred_region
          %s422 = sand.u32 1, 7
          %s423 = ssub.s32 1, %s422
          %s424 = scalar_lea.vmem %s394, %s423
          %s425 = ssub.s32 1, %s422
          %s426 = scalar_lea.vmem %s395, %s425 [#allocation3]
          %s427 = sshllo.u32 0, %s422
          loop: start=0, step=1, limit=1
          $region197: #{ncf_forward.1} parent=195 // loop_pre_header
            _
          $region198: #{ncf_forward.1} parent=195 // loop_header
            %s429 = sphi 0, %s433
            %p430 = scmp.ge.s32.totalorder %s429, 1
            %s434 = sphi %s424, %s424
            %s435 = sphi %s426, %s426
          $region199: #{ncf_forward.1} parent=195 // loop_header_branch
            %432 = sbr.rel (%p430) target = $region203
          $region200: #{ncf_forward.1} parent=195 // loop_body
            %v436 = vld [vmem:[%s434] sm:%s427]
            %437 = vst [vmem:[%s435] sm:%s427] %v436
            %v438 = vld [vmem:[%s434 + $0x8] sm:%s427]
            %439 = vst [vmem:[%s435 + $0x8] sm:%s427] %v438
          $region201: #{ncf_forward.1} parent=195 // loop_footer
            %s433 = sadd.s32 1, %s429
          $region202: #{ncf_forward.1} parent=195 // loop_footer_branch
            %428 = sbr.rel target = $region198
          $region203: #{ncf_forward.1} parent=195 // loop_exit
            _
        $region196: #{ncf_forward.1} parent=180 // pred_fallthru
          _
      $region181: #{ncf_forward.1} parent=56 // pred_fallthru
        _
      // Predicated region
      $region182: #{ncf_forward.1} parent=56 // pred_check
        %p401 = pneg %p397
      $region183: #{ncf_forward.1} parent=56 // pred_check_branch
        %403 = sbr.rel (%p401) target = $region185
      $region184: #{ncf_forward.1} parent=56 // pred_region
        %s404 = sshllo.u32 0, 1
        loop: start=0, step=1, limit=1
        $region186: #{ncf_forward.1} parent=184 // loop_pre_header
          _
        $region187: #{ncf_forward.1} parent=184 // loop_header
          %s406 = sphi 0, %s410
          %p407 = scmp.ge.s32.totalorder %s406, 1
          %s411 = sphi %s394, %s394
          %s412 = sphi %s395, %s395
        $region188: #{ncf_forward.1} parent=184 // loop_header_branch
          %409 = sbr.rel (%p407) target = $region192
        $region189: #{ncf_forward.1} parent=184 // loop_body
          %v413 = vld [vmem:[%s411] sm:%s404]
          %414 = vst [vmem:[%s412] sm:%s404] %v413
          %v415 = vld [vmem:[%s411 + $0x8] sm:%s404]
          %416 = vst [vmem:[%s412 + $0x8] sm:%s404] %v415
        $region190: #{ncf_forward.1} parent=184 // loop_footer
          %s410 = sadd.s32 1, %s406
        $region191: #{ncf_forward.1} parent=184 // loop_footer_branch
          %405 = sbr.rel target = $region187
        $region192: #{ncf_forward.1} parent=184 // loop_exit
          _
      $region185: #{ncf_forward.1} parent=56 // pred_fallthru
        _
      // Predicated region
      $region204: #{ncf_forward.1} parent=56 // pred_check
        _
      $region205: #{ncf_forward.1} parent=56 // pred_check_branch
        %442 = sbr.rel (0) target = $region207
      $region206: #{ncf_forward.1} parent=56 // pred_region
        %443 = vsyncadd %s115, 32
      $region207: #{ncf_forward.1} parent=56 // pred_fallthru
        _
      %s444 = sadd.s32 %s91, 5
      %s445 = sld [smem:[#allocation6 + %s444]]
      %s446 = sld [smem:[#allocation7 + %s444]]
      %s447 = sshrl.u32 %s445, 3
      %s448 = sand.u32 %s445, 7
      %s449 = smul.u32 %s447, 16
      %s450 = sadd.s32 %s448, %s449
      %s451 = smul.addr %s450, 16
      %s452 = scalar_lea.hbm %s2, %s451
      %s453 = sadd.s32 5, %s100
      %s454 = scalar_lea.vmem [#allocation2], %s453
      %s456 = sshll.u32 %s454, 4
      %s457 = int_to_ptr.vmem [resolvable:$true] %s456
      %459 = dma.hbm_to_vmem [thread:$0]  %s452, 32, %s457, %s102, 128, 128, 1
      %s460 = sshrl.u32 %s446, 3
      %s461 = sand.u32 %s446, 7
      %s462 = smul.u32 %s460, 16
      %s463 = sadd.s32 %s461, %s462
      %s464 = scalar_lea.vmem %s3, %s463
      %s465 = scalar_lea.vmem [#allocation3], %s453
      %p467 = scmp.lt.u32.totalorder 1, 8
      %p468 = pneg %p467
      // Predicated region
      $region208: #{ncf_forward.1} parent=56 // pred_check
        _
      $region209: #{ncf_forward.1} parent=56 // pred_check_branch
        %470 = sbr.rel (%p467) target = $region211
      $region210: #{ncf_forward.1} parent=56 // pred_region
        %s487 = sand.u32 1, 7
        %p488 = scmp.eq.s32.totalorder %s487, 0
        %p489 = pneg %p488
        // Predicated region
        $region223: #{ncf_forward.1} parent=210 // pred_check
          _
        $region224: #{ncf_forward.1} parent=210 // pred_check_branch
          %491 = sbr.rel (%p488) target = $region226
        $region225: #{ncf_forward.1} parent=210 // pred_region
          %s492 = sand.u32 1, 7
          %s493 = ssub.s32 1, %s492
          %s494 = scalar_lea.vmem %s464, %s493
          %s495 = ssub.s32 1, %s492
          %s496 = scalar_lea.vmem %s465, %s495 [#allocation3]
          %s497 = sshllo.u32 0, %s492
          loop: start=0, step=1, limit=1
          $region227: #{ncf_forward.1} parent=225 // loop_pre_header
            _
          $region228: #{ncf_forward.1} parent=225 // loop_header
            %s499 = sphi 0, %s503
            %p500 = scmp.ge.s32.totalorder %s499, 1
            %s504 = sphi %s494, %s494
            %s505 = sphi %s496, %s496
          $region229: #{ncf_forward.1} parent=225 // loop_header_branch
            %502 = sbr.rel (%p500) target = $region233
          $region230: #{ncf_forward.1} parent=225 // loop_body
            %v506 = vld [vmem:[%s504] sm:%s497]
            %507 = vst [vmem:[%s505] sm:%s497] %v506
            %v508 = vld [vmem:[%s504 + $0x8] sm:%s497]
            %509 = vst [vmem:[%s505 + $0x8] sm:%s497] %v508
          $region231: #{ncf_forward.1} parent=225 // loop_footer
            %s503 = sadd.s32 1, %s499
          $region232: #{ncf_forward.1} parent=225 // loop_footer_branch
            %498 = sbr.rel target = $region228
          $region233: #{ncf_forward.1} parent=225 // loop_exit
            _
        $region226: #{ncf_forward.1} parent=210 // pred_fallthru
          _
      $region211: #{ncf_forward.1} parent=56 // pred_fallthru
        _
      // Predicated region
      $region212: #{ncf_forward.1} parent=56 // pred_check
        %p471 = pneg %p467
      $region213: #{ncf_forward.1} parent=56 // pred_check_branch
        %473 = sbr.rel (%p471) target = $region215
      $region214: #{ncf_forward.1} parent=56 // pred_region
        %s474 = sshllo.u32 0, 1
        loop: start=0, step=1, limit=1
        $region216: #{ncf_forward.1} parent=214 // loop_pre_header
          _
        $region217: #{ncf_forward.1} parent=214 // loop_header
          %s476 = sphi 0, %s480
          %p477 = scmp.ge.s32.totalorder %s476, 1
          %s481 = sphi %s464, %s464
          %s482 = sphi %s465, %s465
        $region218: #{ncf_forward.1} parent=214 // loop_header_branch
          %479 = sbr.rel (%p477) target = $region222
        $region219: #{ncf_forward.1} parent=214 // loop_body
          %v483 = vld [vmem:[%s481] sm:%s474]
          %484 = vst [vmem:[%s482] sm:%s474] %v483
          %v485 = vld [vmem:[%s481 + $0x8] sm:%s474]
          %486 = vst [vmem:[%s482 + $0x8] sm:%s474] %v485
        $region220: #{ncf_forward.1} parent=214 // loop_footer
          %s480 = sadd.s32 1, %s476
        $region221: #{ncf_forward.1} parent=214 // loop_footer_branch
          %475 = sbr.rel target = $region217
        $region222: #{ncf_forward.1} parent=214 // loop_exit
          _
      $region215: #{ncf_forward.1} parent=56 // pred_fallthru
        _
      // Predicated region
      $region234: #{ncf_forward.1} parent=56 // pred_check
        _
      $region235: #{ncf_forward.1} parent=56 // pred_check_branch
        %512 = sbr.rel (0) target = $region237
      $region236: #{ncf_forward.1} parent=56 // pred_region
        %513 = vsyncadd %s115, 32
      $region237: #{ncf_forward.1} parent=56 // pred_fallthru
        _
      %s514 = sadd.s32 %s91, 6
      %s515 = sld [smem:[#allocation6 + %s514]]
      %s516 = sld [smem:[#allocation7 + %s514]]
      %s517 = sshrl.u32 %s515, 3
      %s518 = sand.u32 %s515, 7
      %s519 = smul.u32 %s517, 16
      %s520 = sadd.s32 %s518, %s519
      %s521 = smul.addr %s520, 16
      %s522 = scalar_lea.hbm %s2, %s521
      %s523 = sadd.s32 6, %s100
      %s524 = scalar_lea.vmem [#allocation2], %s523
      %s526 = sshll.u32 %s524, 4
      %s527 = int_to_ptr.vmem [resolvable:$true] %s526
      %529 = dma.hbm_to_vmem [thread:$0]  %s522, 32, %s527, %s102, 128, 128, 1
      %s530 = sshrl.u32 %s516, 3
      %s531 = sand.u32 %s516, 7
      %s532 = smul.u32 %s530, 16
      %s533 = sadd.s32 %s531, %s532
      %s534 = scalar_lea.vmem %s3, %s533
      %s535 = scalar_lea.vmem [#allocation3], %s523
      %p537 = scmp.lt.u32.totalorder 1, 8
      %p538 = pneg %p537
      // Predicated region
      $region238: #{ncf_forward.1} parent=56 // pred_check
        _
      $region239: #{ncf_forward.1} parent=56 // pred_check_branch
        %540 = sbr.rel (%p537) target = $region241
      $region240: #{ncf_forward.1} parent=56 // pred_region
        %s557 = sand.u32 1, 7
        %p558 = scmp.eq.s32.totalorder %s557, 0
        %p559 = pneg %p558
        // Predicated region
        $region253: #{ncf_forward.1} parent=240 // pred_check
          _
        $region254: #{ncf_forward.1} parent=240 // pred_check_branch
          %561 = sbr.rel (%p558) target = $region256
        $region255: #{ncf_forward.1} parent=240 // pred_region
          %s562 = sand.u32 1, 7
          %s563 = ssub.s32 1, %s562
          %s564 = scalar_lea.vmem %s534, %s563
          %s565 = ssub.s32 1, %s562
          %s566 = scalar_lea.vmem %s535, %s565 [#allocation3]
          %s567 = sshllo.u32 0, %s562
          loop: start=0, step=1, limit=1
          $region257: #{ncf_forward.1} parent=255 // loop_pre_header
            _
          $region258: #{ncf_forward.1} parent=255 // loop_header
            %s569 = sphi 0, %s573
            %p570 = scmp.ge.s32.totalorder %s569, 1
            %s574 = sphi %s564, %s564
            %s575 = sphi %s566, %s566
          $region259: #{ncf_forward.1} parent=255 // loop_header_branch
            %572 = sbr.rel (%p570) target = $region263
          $region260: #{ncf_forward.1} parent=255 // loop_body
            %v576 = vld [vmem:[%s574] sm:%s567]
            %577 = vst [vmem:[%s575] sm:%s567] %v576
            %v578 = vld [vmem:[%s574 + $0x8] sm:%s567]
            %579 = vst [vmem:[%s575 + $0x8] sm:%s567] %v578
          $region261: #{ncf_forward.1} parent=255 // loop_footer
            %s573 = sadd.s32 1, %s569
          $region262: #{ncf_forward.1} parent=255 // loop_footer_branch
            %568 = sbr.rel target = $region258
          $region263: #{ncf_forward.1} parent=255 // loop_exit
            _
        $region256: #{ncf_forward.1} parent=240 // pred_fallthru
          _
      $region241: #{ncf_forward.1} parent=56 // pred_fallthru
        _
      // Predicated region
      $region242: #{ncf_forward.1} parent=56 // pred_check
        %p541 = pneg %p537
      $region243: #{ncf_forward.1} parent=56 // pred_check_branch
        %543 = sbr.rel (%p541) target = $region245
      $region244: #{ncf_forward.1} parent=56 // pred_region
        %s544 = sshllo.u32 0, 1
        loop: start=0, step=1, limit=1
        $region246: #{ncf_forward.1} parent=244 // loop_pre_header
          _
        $region247: #{ncf_forward.1} parent=244 // loop_header
          %s546 = sphi 0, %s550
          %p547 = scmp.ge.s32.totalorder %s546, 1
          %s551 = sphi %s534, %s534
          %s552 = sphi %s535, %s535
        $region248: #{ncf_forward.1} parent=244 // loop_header_branch
          %549 = sbr.rel (%p547) target = $region252
        $region249: #{ncf_forward.1} parent=244 // loop_body
          %v553 = vld [vmem:[%s551] sm:%s544]
          %554 = vst [vmem:[%s552] sm:%s544] %v553
          %v555 = vld [vmem:[%s551 + $0x8] sm:%s544]
          %556 = vst [vmem:[%s552 + $0x8] sm:%s544] %v555
        $region250: #{ncf_forward.1} parent=244 // loop_footer
          %s550 = sadd.s32 1, %s546
        $region251: #{ncf_forward.1} parent=244 // loop_footer_branch
          %545 = sbr.rel target = $region247
        $region252: #{ncf_forward.1} parent=244 // loop_exit
          _
      $region245: #{ncf_forward.1} parent=56 // pred_fallthru
        _
      // Predicated region
      $region264: #{ncf_forward.1} parent=56 // pred_check
        _
      $region265: #{ncf_forward.1} parent=56 // pred_check_branch
        %582 = sbr.rel (0) target = $region267
      $region266: #{ncf_forward.1} parent=56 // pred_region
        %583 = vsyncadd %s115, 32
      $region267: #{ncf_forward.1} parent=56 // pred_fallthru
        _
      %s584 = sadd.s32 %s91, 7
      %s585 = sld [smem:[#allocation6 + %s584]]
      %s586 = sld [smem:[#allocation7 + %s584]]
      %s587 = sshrl.u32 %s585, 3
      %s588 = sand.u32 %s585, 7
      %s589 = smul.u32 %s587, 16
      %s590 = sadd.s32 %s588, %s589
      %s591 = smul.addr %s590, 16
      %s592 = scalar_lea.hbm %s2, %s591
      %s593 = sadd.s32 7, %s100
      %s594 = scalar_lea.vmem [#allocation2], %s593
      %s596 = sshll.u32 %s594, 4
      %s597 = int_to_ptr.vmem [resolvable:$true] %s596
      %599 = dma.hbm_to_vmem [thread:$0]  %s592, 32, %s597, %s102, 128, 128, 1
      %s600 = sshrl.u32 %s586, 3
      %s601 = sand.u32 %s586, 7
      %s602 = smul.u32 %s600, 16
      %s603 = sadd.s32 %s601, %s602
      %s604 = scalar_lea.vmem %s3, %s603
      %s605 = scalar_lea.vmem [#allocation3], %s593
      %p607 = scmp.lt.u32.totalorder 1, 8
      %p608 = pneg %p607
      // Predicated region
      $region268: #{ncf_forward.1} parent=56 // pred_check
        _
      $region269: #{ncf_forward.1} parent=56 // pred_check_branch
        %610 = sbr.rel (%p607) target = $region271
      $region270: #{ncf_forward.1} parent=56 // pred_region
        %s627 = sand.u32 1, 7
        %p628 = scmp.eq.s32.totalorder %s627, 0
        %p629 = pneg %p628
        // Predicated region
        $region283: #{ncf_forward.1} parent=270 // pred_check
          _
        $region284: #{ncf_forward.1} parent=270 // pred_check_branch
          %631 = sbr.rel (%p628) target = $region286
        $region285: #{ncf_forward.1} parent=270 // pred_region
          %s632 = sand.u32 1, 7
          %s633 = ssub.s32 1, %s632
          %s634 = scalar_lea.vmem %s604, %s633
          %s635 = ssub.s32 1, %s632
          %s636 = scalar_lea.vmem %s605, %s635 [#allocation3]
          %s637 = sshllo.u32 0, %s632
          loop: start=0, step=1, limit=1
          $region287: #{ncf_forward.1} parent=285 // loop_pre_header
            _
          $region288: #{ncf_forward.1} parent=285 // loop_header
            %s639 = sphi 0, %s643
            %p640 = scmp.ge.s32.totalorder %s639, 1
            %s644 = sphi %s634, %s634
            %s645 = sphi %s636, %s636
          $region289: #{ncf_forward.1} parent=285 // loop_header_branch
            %642 = sbr.rel (%p640) target = $region293
          $region290: #{ncf_forward.1} parent=285 // loop_body
            %v646 = vld [vmem:[%s644] sm:%s637]
            %647 = vst [vmem:[%s645] sm:%s637] %v646
            %v648 = vld [vmem:[%s644 + $0x8] sm:%s637]
            %649 = vst [vmem:[%s645 + $0x8] sm:%s637] %v648
          $region291: #{ncf_forward.1} parent=285 // loop_footer
            %s643 = sadd.s32 1, %s639
          $region292: #{ncf_forward.1} parent=285 // loop_footer_branch
            %638 = sbr.rel target = $region288
          $region293: #{ncf_forward.1} parent=285 // loop_exit
            _
        $region286: #{ncf_forward.1} parent=270 // pred_fallthru
          _
      $region271: #{ncf_forward.1} parent=56 // pred_fallthru
        _
      // Predicated region
      $region272: #{ncf_forward.1} parent=56 // pred_check
        %p611 = pneg %p607
      $region273: #{ncf_forward.1} parent=56 // pred_check_branch
        %613 = sbr.rel (%p611) target = $region275
      $region274: #{ncf_forward.1} parent=56 // pred_region
        %s614 = sshllo.u32 0, 1
        loop: start=0, step=1, limit=1
        $region276: #{ncf_forward.1} parent=274 // loop_pre_header
          _
        $region277: #{ncf_forward.1} parent=274 // loop_header
          %s616 = sphi 0, %s620
          %p617 = scmp.ge.s32.totalorder %s616, 1
          %s621 = sphi %s604, %s604
          %s622 = sphi %s605, %s605
        $region278: #{ncf_forward.1} parent=274 // loop_header_branch
          %619 = sbr.rel (%p617) target = $region282
        $region279: #{ncf_forward.1} parent=274 // loop_body
          %v623 = vld [vmem:[%s621] sm:%s614]
          %624 = vst [vmem:[%s622] sm:%s614] %v623
          %v625 = vld [vmem:[%s621 + $0x8] sm:%s614]
          %626 = vst [vmem:[%s622 + $0x8] sm:%s614] %v625
        $region280: #{ncf_forward.1} parent=274 // loop_footer
          %s620 = sadd.s32 1, %s616
        $region281: #{ncf_forward.1} parent=274 // loop_footer_branch
          %615 = sbr.rel target = $region277
        $region282: #{ncf_forward.1} parent=274 // loop_exit
          _
      $region275: #{ncf_forward.1} parent=56 // pred_fallthru
        _
      // Predicated region
      $region294: #{ncf_forward.1} parent=56 // pred_check
        _
      $region295: #{ncf_forward.1} parent=56 // pred_check_branch
        %652 = sbr.rel (0) target = $region297
      $region296: #{ncf_forward.1} parent=56 // pred_region
        %653 = vsyncadd %s115, 32
      $region297: #{ncf_forward.1} parent=56 // pred_fallthru
        _
    $region57: #{ncf_forward.1} parent=1 // pred_fallthru
      _
    %s654 = sadd.s32 0, 1
    %p655 = scmp.lt.s32.totalorder %s654, 1
    // Predicated region
    $region298: #{ncf_forward.1} parent=1 // pred_check
      %p656 = pneg %p655
    $region299: #{ncf_forward.1} parent=1 // pred_check_branch
      %658 = sbr.rel (%p656) target = $region301
    $region300: #{ncf_forward.1} parent=1 // pred_region
      %s659 = sadd.s32 0, 0
      %s660 = sadd.s32 %s659, 1
      %s661 = ssub.s32 1, %s86
      %s662 = smul.u32 %s660, 8
      %s663 = sld [smem:[#allocation6 + %s662]]
      %s664 = sld [smem:[#allocation7 + %s662]]
      %s665 = sshrl.u32 %s663, 3
      %s666 = sand.u32 %s663, 7
      %s667 = smul.u32 %s665, 16
      %s668 = sadd.s32 %s666, %s667
      %s669 = smul.addr %s668, 16
      %s670 = scalar_lea.hbm %s2, %s669
      %s671 = smul.u32 %s661, 16
      %s672 = scalar_lea.vmem [#allocation2], %s671
      %s673 = scalar_lea.sflag [#allocation4], %s661
      %s675 = sshll.u32 %s672, 4
      %s676 = int_to_ptr.vmem [resolvable:$true] %s675
      %678 = dma.hbm_to_vmem [thread:$0]  %s670, 32, %s676, %s673, 128, 128, 1
      %s679 = sshrl.u32 %s664, 3
      %s680 = sand.u32 %s664, 7
      %s681 = smul.u32 %s679, 16
      %s682 = sadd.s32 %s680, %s681
      %s683 = scalar_lea.vmem %s3, %s682
      %s684 = scalar_lea.vmem [#allocation3], %s671
      %s685 = sadd.s32 %s661, 2
      %s686 = scalar_lea.sflag [#allocation4], %s685
      %p688 = scmp.lt.u32.totalorder 1, 8
      %p689 = pneg %p688
      // Predicated region
      $region302: #{ncf_forward.1} parent=300 // pred_check
        _
      $region303: #{ncf_forward.1} parent=300 // pred_check_branch
        %691 = sbr.rel (%p688) target = $region305
      $region304: #{ncf_forward.1} parent=300 // pred_region
        %s708 = sand.u32 1, 7
        %p709 = scmp.eq.s32.totalorder %s708, 0
        %p710 = pneg %p709
        // Predicated region
        $region317: #{ncf_forward.1} parent=304 // pred_check
          _
        $region318: #{ncf_forward.1} parent=304 // pred_check_branch
          %712 = sbr.rel (%p709) target = $region320
        $region319: #{ncf_forward.1} parent=304 // pred_region
          %s713 = sand.u32 1, 7
          %s714 = ssub.s32 1, %s713
          %s715 = scalar_lea.vmem %s683, %s714
          %s716 = ssub.s32 1, %s713
          %s717 = scalar_lea.vmem %s684, %s716 [#allocation3]
          %s718 = sshllo.u32 0, %s713
          loop: start=0, step=1, limit=1
          $region321: #{ncf_forward.1} parent=319 // loop_pre_header
            _
          $region322: #{ncf_forward.1} parent=319 // loop_header
            %s720 = sphi 0, %s724
            %p721 = scmp.ge.s32.totalorder %s720, 1
            %s725 = sphi %s715, %s715
            %s726 = sphi %s717, %s717
          $region323: #{ncf_forward.1} parent=319 // loop_header_branch
            %723 = sbr.rel (%p721) target = $region327
          $region324: #{ncf_forward.1} parent=319 // loop_body
            %v727 = vld [vmem:[%s725] sm:%s718]
            %728 = vst [vmem:[%s726] sm:%s718] %v727
            %v729 = vld [vmem:[%s725 + $0x8] sm:%s718]
            %730 = vst [vmem:[%s726 + $0x8] sm:%s718] %v729
          $region325: #{ncf_forward.1} parent=319 // loop_footer
            %s724 = sadd.s32 1, %s720
          $region326: #{ncf_forward.1} parent=319 // loop_footer_branch
            %719 = sbr.rel target = $region322
          $region327: #{ncf_forward.1} parent=319 // loop_exit
            _
        $region320: #{ncf_forward.1} parent=304 // pred_fallthru
          _
      $region305: #{ncf_forward.1} parent=300 // pred_fallthru
        _
      // Predicated region
      $region306: #{ncf_forward.1} parent=300 // pred_check
        %p692 = pneg %p688
      $region307: #{ncf_forward.1} parent=300 // pred_check_branch
        %694 = sbr.rel (%p692) target = $region309
      $region308: #{ncf_forward.1} parent=300 // pred_region
        %s695 = sshllo.u32 0, 1
        loop: start=0, step=1, limit=1
        $region310: #{ncf_forward.1} parent=308 // loop_pre_header
          _
        $region311: #{ncf_forward.1} parent=308 // loop_header
          %s697 = sphi 0, %s701
          %p698 = scmp.ge.s32.totalorder %s697, 1
          %s702 = sphi %s683, %s683
          %s703 = sphi %s684, %s684
        $region312: #{ncf_forward.1} parent=308 // loop_header_branch
          %700 = sbr.rel (%p698) target = $region316
        $region313: #{ncf_forward.1} parent=308 // loop_body
          %v704 = vld [vmem:[%s702] sm:%s695]
          %705 = vst [vmem:[%s703] sm:%s695] %v704
          %v706 = vld [vmem:[%s702 + $0x8] sm:%s695]
          %707 = vst [vmem:[%s703 + $0x8] sm:%s695] %v706
        $region314: #{ncf_forward.1} parent=308 // loop_footer
          %s701 = sadd.s32 1, %s697
        $region315: #{ncf_forward.1} parent=308 // loop_footer_branch
          %696 = sbr.rel target = $region311
        $region316: #{ncf_forward.1} parent=308 // loop_exit
          _
      $region309: #{ncf_forward.1} parent=300 // pred_fallthru
        _
      // Predicated region
      $region328: #{ncf_forward.1} parent=300 // pred_check
        _
      $region329: #{ncf_forward.1} parent=300 // pred_check_branch
        %733 = sbr.rel (0) target = $region331
      $region330: #{ncf_forward.1} parent=300 // pred_region
        %734 = vsyncadd %s686, 32
      $region331: #{ncf_forward.1} parent=300 // pred_fallthru
        _
      %s735 = sadd.s32 %s662, 1
      %s736 = sld [smem:[#allocation6 + %s735]]
      %s737 = sld [smem:[#allocation7 + %s735]]
      %s738 = sshrl.u32 %s736, 3
      %s739 = sand.u32 %s736, 7
      %s740 = smul.u32 %s738, 16
      %s741 = sadd.s32 %s739, %s740
      %s742 = smul.addr %s741, 16
      %s743 = scalar_lea.hbm %s2, %s742
      %s744 = sadd.s32 1, %s671
      %s745 = scalar_lea.vmem [#allocation2], %s744
      %s747 = sshll.u32 %s745, 4
      %s748 = int_to_ptr.vmem [resolvable:$true] %s747
      %750 = dma.hbm_to_vmem [thread:$0]  %s743, 32, %s748, %s673, 128, 128, 1
      %s751 = sshrl.u32 %s737, 3
      %s752 = sand.u32 %s737, 7
      %s753 = smul.u32 %s751, 16
      %s754 = sadd.s32 %s752, %s753
      %s755 = scalar_lea.vmem %s3, %s754
      %s756 = scalar_lea.vmem [#allocation3], %s744
      %p758 = scmp.lt.u32.totalorder 1, 8
      %p759 = pneg %p758
      // Predicated region
      $region332: #{ncf_forward.1} parent=300 // pred_check
        _
      $region333: #{ncf_forward.1} parent=300 // pred_check_branch
        %761 = sbr.rel (%p758) target = $region335
      $region334: #{ncf_forward.1} parent=300 // pred_region
        %s778 = sand.u32 1, 7
        %p779 = scmp.eq.s32.totalorder %s778, 0
        %p780 = pneg %p779
        // Predicated region
        $region347: #{ncf_forward.1} parent=334 // pred_check
          _
        $region348: #{ncf_forward.1} parent=334 // pred_check_branch
          %782 = sbr.rel (%p779) target = $region350
        $region349: #{ncf_forward.1} parent=334 // pred_region
          %s783 = sand.u32 1, 7
          %s784 = ssub.s32 1, %s783
          %s785 = scalar_lea.vmem %s755, %s784
          %s786 = ssub.s32 1, %s783
          %s787 = scalar_lea.vmem %s756, %s786 [#allocation3]
          %s788 = sshllo.u32 0, %s783
          loop: start=0, step=1, limit=1
          $region351: #{ncf_forward.1} parent=349 // loop_pre_header
            _
          $region352: #{ncf_forward.1} parent=349 // loop_header
            %s790 = sphi 0, %s794
            %p791 = scmp.ge.s32.totalorder %s790, 1
            %s795 = sphi %s785, %s785
            %s796 = sphi %s787, %s787
          $region353: #{ncf_forward.1} parent=349 // loop_header_branch
            %793 = sbr.rel (%p791) target = $region357
          $region354: #{ncf_forward.1} parent=349 // loop_body
            %v797 = vld [vmem:[%s795] sm:%s788]
            %798 = vst [vmem:[%s796] sm:%s788] %v797
            %v799 = vld [vmem:[%s795 + $0x8] sm:%s788]
            %800 = vst [vmem:[%s796 + $0x8] sm:%s788] %v799
          $region355: #{ncf_forward.1} parent=349 // loop_footer
            %s794 = sadd.s32 1, %s790
          $region356: #{ncf_forward.1} parent=349 // loop_footer_branch
            %789 = sbr.rel target = $region352
          $region357: #{ncf_forward.1} parent=349 // loop_exit
            _
        $region350: #{ncf_forward.1} parent=334 // pred_fallthru
          _
      $region335: #{ncf_forward.1} parent=300 // pred_fallthru
        _
      // Predicated region
      $region336: #{ncf_forward.1} parent=300 // pred_check
        %p762 = pneg %p758
      $region337: #{ncf_forward.1} parent=300 // pred_check_branch
        %764 = sbr.rel (%p762) target = $region339
      $region338: #{ncf_forward.1} parent=300 // pred_region
        %s765 = sshllo.u32 0, 1
        loop: start=0, step=1, limit=1
        $region340: #{ncf_forward.1} parent=338 // loop_pre_header
          _
        $region341: #{ncf_forward.1} parent=338 // loop_header
          %s767 = sphi 0, %s771
          %p768 = scmp.ge.s32.totalorder %s767, 1
          %s772 = sphi %s755, %s755
          %s773 = sphi %s756, %s756
        $region342: #{ncf_forward.1} parent=338 // loop_header_branch
          %770 = sbr.rel (%p768) target = $region346
        $region343: #{ncf_forward.1} parent=338 // loop_body
          %v774 = vld [vmem:[%s772] sm:%s765]
          %775 = vst [vmem:[%s773] sm:%s765] %v774
          %v776 = vld [vmem:[%s772 + $0x8] sm:%s765]
          %777 = vst [vmem:[%s773 + $0x8] sm:%s765] %v776
        $region344: #{ncf_forward.1} parent=338 // loop_footer
          %s771 = sadd.s32 1, %s767
        $region345: #{ncf_forward.1} parent=338 // loop_footer_branch
          %766 = sbr.rel target = $region341
        $region346: #{ncf_forward.1} parent=338 // loop_exit
          _
      $region339: #{ncf_forward.1} parent=300 // pred_fallthru
        _
      // Predicated region
      $region358: #{ncf_forward.1} parent=300 // pred_check
        _
      $region359: #{ncf_forward.1} parent=300 // pred_check_branch
        %803 = sbr.rel (0) target = $region361
      $region360: #{ncf_forward.1} parent=300 // pred_region
        %804 = vsyncadd %s686, 32
      $region361: #{ncf_forward.1} parent=300 // pred_fallthru
        _
      %s805 = sadd.s32 %s662, 2
      %s806 = sld [smem:[#allocation6 + %s805]]
      %s807 = sld [smem:[#allocation7 + %s805]]
      %s808 = sshrl.u32 %s806, 3
      %s809 = sand.u32 %s806, 7
      %s810 = smul.u32 %s808, 16
      %s811 = sadd.s32 %s809, %s810
      %s812 = smul.addr %s811, 16
      %s813 = scalar_lea.hbm %s2, %s812
      %s814 = sadd.s32 2, %s671
      %s815 = scalar_lea.vmem [#allocation2], %s814
      %s817 = sshll.u32 %s815, 4
      %s818 = int_to_ptr.vmem [resolvable:$true] %s817
      %820 = dma.hbm_to_vmem [thread:$0]  %s813, 32, %s818, %s673, 128, 128, 1
      %s821 = sshrl.u32 %s807, 3
      %s822 = sand.u32 %s807, 7
      %s823 = smul.u32 %s821, 16
      %s824 = sadd.s32 %s822, %s823
      %s825 = scalar_lea.vmem %s3, %s824
      %s826 = scalar_lea.vmem [#allocation3], %s814
      %p828 = scmp.lt.u32.totalorder 1, 8
      %p829 = pneg %p828
      // Predicated region
      $region362: #{ncf_forward.1} parent=300 // pred_check
        _
      $region363: #{ncf_forward.1} parent=300 // pred_check_branch
        %831 = sbr.rel (%p828) target = $region365
      $region364: #{ncf_forward.1} parent=300 // pred_region
        %s848 = sand.u32 1, 7
        %p849 = scmp.eq.s32.totalorder %s848, 0
        %p850 = pneg %p849
        // Predicated region
        $region377: #{ncf_forward.1} parent=364 // pred_check
          _
        $region378: #{ncf_forward.1} parent=364 // pred_check_branch
          %852 = sbr.rel (%p849) target = $region380
        $region379: #{ncf_forward.1} parent=364 // pred_region
          %s853 = sand.u32 1, 7
          %s854 = ssub.s32 1, %s853
          %s855 = scalar_lea.vmem %s825, %s854
          %s856 = ssub.s32 1, %s853
          %s857 = scalar_lea.vmem %s826, %s856 [#allocation3]
          %s858 = sshllo.u32 0, %s853
          loop: start=0, step=1, limit=1
          $region381: #{ncf_forward.1} parent=379 // loop_pre_header
            _
          $region382: #{ncf_forward.1} parent=379 // loop_header
            %s860 = sphi 0, %s864
            %p861 = scmp.ge.s32.totalorder %s860, 1
            %s865 = sphi %s855, %s855
            %s866 = sphi %s857, %s857
          $region383: #{ncf_forward.1} parent=379 // loop_header_branch
            %863 = sbr.rel (%p861) target = $region387
          $region384: #{ncf_forward.1} parent=379 // loop_body
            %v867 = vld [vmem:[%s865] sm:%s858]
            %868 = vst [vmem:[%s866] sm:%s858] %v867
            %v869 = vld [vmem:[%s865 + $0x8] sm:%s858]
            %870 = vst [vmem:[%s866 + $0x8] sm:%s858] %v869
          $region385: #{ncf_forward.1} parent=379 // loop_footer
            %s864 = sadd.s32 1, %s860
          $region386: #{ncf_forward.1} parent=379 // loop_footer_branch
            %859 = sbr.rel target = $region382
          $region387: #{ncf_forward.1} parent=379 // loop_exit
            _
        $region380: #{ncf_forward.1} parent=364 // pred_fallthru
          _
      $region365: #{ncf_forward.1} parent=300 // pred_fallthru
        _
      // Predicated region
      $region366: #{ncf_forward.1} parent=300 // pred_check
        %p832 = pneg %p828
      $region367: #{ncf_forward.1} parent=300 // pred_check_branch
        %834 = sbr.rel (%p832) target = $region369
      $region368: #{ncf_forward.1} parent=300 // pred_region
        %s835 = sshllo.u32 0, 1
        loop: start=0, step=1, limit=1
        $region370: #{ncf_forward.1} parent=368 // loop_pre_header
          _
        $region371: #{ncf_forward.1} parent=368 // loop_header
          %s837 = sphi 0, %s841
          %p838 = scmp.ge.s32.totalorder %s837, 1
          %s842 = sphi %s825, %s825
          %s843 = sphi %s826, %s826
        $region372: #{ncf_forward.1} parent=368 // loop_header_branch
          %840 = sbr.rel (%p838) target = $region376
        $region373: #{ncf_forward.1} parent=368 // loop_body
          %v844 = vld [vmem:[%s842] sm:%s835]
          %845 = vst [vmem:[%s843] sm:%s835] %v844
          %v846 = vld [vmem:[%s842 + $0x8] sm:%s835]
          %847 = vst [vmem:[%s843 + $0x8] sm:%s835] %v846
        $region374: #{ncf_forward.1} parent=368 // loop_footer
          %s841 = sadd.s32 1, %s837
        $region375: #{ncf_forward.1} parent=368 // loop_footer_branch
          %836 = sbr.rel target = $region371
        $region376: #{ncf_forward.1} parent=368 // loop_exit
          _
      $region369: #{ncf_forward.1} parent=300 // pred_fallthru
        _
      // Predicated region
      $region388: #{ncf_forward.1} parent=300 // pred_check
        _
      $region389: #{ncf_forward.1} parent=300 // pred_check_branch
        %873 = sbr.rel (0) target = $region391
      $region390: #{ncf_forward.1} parent=300 // pred_region
        %874 = vsyncadd %s686, 32
      $region391: #{ncf_forward.1} parent=300 // pred_fallthru
        _
      %s875 = sadd.s32 %s662, 3
      %s876 = sld [smem:[#allocation6 + %s875]]
      %s877 = sld [smem:[#allocation7 + %s875]]
      %s878 = sshrl.u32 %s876, 3
      %s879 = sand.u32 %s876, 7
      %s880 = smul.u32 %s878, 16
      %s881 = sadd.s32 %s879, %s880
      %s882 = smul.addr %s881, 16
      %s883 = scalar_lea.hbm %s2, %s882
      %s884 = sadd.s32 3, %s671
      %s885 = scalar_lea.vmem [#allocation2], %s884
      %s887 = sshll.u32 %s885, 4
      %s888 = int_to_ptr.vmem [resolvable:$true] %s887
      %890 = dma.hbm_to_vmem [thread:$0]  %s883, 32, %s888, %s673, 128, 128, 1
      %s891 = sshrl.u32 %s877, 3
      %s892 = sand.u32 %s877, 7
      %s893 = smul.u32 %s891, 16
      %s894 = sadd.s32 %s892, %s893
      %s895 = scalar_lea.vmem %s3, %s894
      %s896 = scalar_lea.vmem [#allocation3], %s884
      %p898 = scmp.lt.u32.totalorder 1, 8
      %p899 = pneg %p898
      // Predicated region
      $region392: #{ncf_forward.1} parent=300 // pred_check
        _
      $region393: #{ncf_forward.1} parent=300 // pred_check_branch
        %901 = sbr.rel (%p898) target = $region395
      $region394: #{ncf_forward.1} parent=300 // pred_region
        %s918 = sand.u32 1, 7
        %p919 = scmp.eq.s32.totalorder %s918, 0
        %p920 = pneg %p919
        // Predicated region
        $region407: #{ncf_forward.1} parent=394 // pred_check
          _
        $region408: #{ncf_forward.1} parent=394 // pred_check_branch
          %922 = sbr.rel (%p919) target = $region410
        $region409: #{ncf_forward.1} parent=394 // pred_region
          %s923 = sand.u32 1, 7
          %s924 = ssub.s32 1, %s923
          %s925 = scalar_lea.vmem %s895, %s924
          %s926 = ssub.s32 1, %s923
          %s927 = scalar_lea.vmem %s896, %s926 [#allocation3]
          %s928 = sshllo.u32 0, %s923
          loop: start=0, step=1, limit=1
          $region411: #{ncf_forward.1} parent=409 // loop_pre_header
            _
          $region412: #{ncf_forward.1} parent=409 // loop_header
            %s930 = sphi 0, %s934
            %p931 = scmp.ge.s32.totalorder %s930, 1
            %s935 = sphi %s925, %s925
            %s936 = sphi %s927, %s927
          $region413: #{ncf_forward.1} parent=409 // loop_header_branch
            %933 = sbr.rel (%p931) target = $region417
          $region414: #{ncf_forward.1} parent=409 // loop_body
            %v937 = vld [vmem:[%s935] sm:%s928]
            %938 = vst [vmem:[%s936] sm:%s928] %v937
            %v939 = vld [vmem:[%s935 + $0x8] sm:%s928]
            %940 = vst [vmem:[%s936 + $0x8] sm:%s928] %v939
          $region415: #{ncf_forward.1} parent=409 // loop_footer
            %s934 = sadd.s32 1, %s930
          $region416: #{ncf_forward.1} parent=409 // loop_footer_branch
            %929 = sbr.rel target = $region412
          $region417: #{ncf_forward.1} parent=409 // loop_exit
            _
        $region410: #{ncf_forward.1} parent=394 // pred_fallthru
          _
      $region395: #{ncf_forward.1} parent=300 // pred_fallthru
        _
      // Predicated region
      $region396: #{ncf_forward.1} parent=300 // pred_check
        %p902 = pneg %p898
      $region397: #{ncf_forward.1} parent=300 // pred_check_branch
        %904 = sbr.rel (%p902) target = $region399
      $region398: #{ncf_forward.1} parent=300 // pred_region
        %s905 = sshllo.u32 0, 1
        loop: start=0, step=1, limit=1
        $region400: #{ncf_forward.1} parent=398 // loop_pre_header
          _
        $region401: #{ncf_forward.1} parent=398 // loop_header
          %s907 = sphi 0, %s911
          %p908 = scmp.ge.s32.totalorder %s907, 1
          %s912 = sphi %s895, %s895
          %s913 = sphi %s896, %s896
        $region402: #{ncf_forward.1} parent=398 // loop_header_branch
          %910 = sbr.rel (%p908) target = $region406
        $region403: #{ncf_forward.1} parent=398 // loop_body
          %v914 = vld [vmem:[%s912] sm:%s905]
          %915 = vst [vmem:[%s913] sm:%s905] %v914
          %v916 = vld [vmem:[%s912 + $0x8] sm:%s905]
          %917 = vst [vmem:[%s913 + $0x8] sm:%s905] %v916
        $region404: #{ncf_forward.1} parent=398 // loop_footer
          %s911 = sadd.s32 1, %s907
        $region405: #{ncf_forward.1} parent=398 // loop_footer_branch
          %906 = sbr.rel target = $region401
        $region406: #{ncf_forward.1} parent=398 // loop_exit
          _
      $region399: #{ncf_forward.1} parent=300 // pred_fallthru
        _
      // Predicated region
      $region418: #{ncf_forward.1} parent=300 // pred_check
        _
      $region419: #{ncf_forward.1} parent=300 // pred_check_branch
        %943 = sbr.rel (0) target = $region421
      $region420: #{ncf_forward.1} parent=300 // pred_region
        %944 = vsyncadd %s686, 32
      $region421: #{ncf_forward.1} parent=300 // pred_fallthru
        _
      %s945 = sadd.s32 %s662, 4
      %s946 = sld [smem:[#allocation6 + %s945]]
      %s947 = sld [smem:[#allocation7 + %s945]]
      %s948 = sshrl.u32 %s946, 3
      %s949 = sand.u32 %s946, 7
      %s950 = smul.u32 %s948, 16
      %s951 = sadd.s32 %s949, %s950
      %s952 = smul.addr %s951, 16
      %s953 = scalar_lea.hbm %s2, %s952
      %s954 = sadd.s32 4, %s671
      %s955 = scalar_lea.vmem [#allocation2], %s954
      %s957 = sshll.u32 %s955, 4
      %s958 = int_to_ptr.vmem [resolvable:$true] %s957
      %960 = dma.hbm_to_vmem [thread:$0]  %s953, 32, %s958, %s673, 128, 128, 1
      %s961 = sshrl.u32 %s947, 3
      %s962 = sand.u32 %s947, 7
      %s963 = smul.u32 %s961, 16
      %s964 = sadd.s32 %s962, %s963
      %s965 = scalar_lea.vmem %s3, %s964
      %s966 = scalar_lea.vmem [#allocation3], %s954
      %p968 = scmp.lt.u32.totalorder 1, 8
      %p969 = pneg %p968
      // Predicated region
      $region422: #{ncf_forward.1} parent=300 // pred_check
        _
      $region423: #{ncf_forward.1} parent=300 // pred_check_branch
        %971 = sbr.rel (%p968) target = $region425
      $region424: #{ncf_forward.1} parent=300 // pred_region
        %s988 = sand.u32 1, 7
        %p989 = scmp.eq.s32.totalorder %s988, 0
        %p990 = pneg %p989
        // Predicated region
        $region437: #{ncf_forward.1} parent=424 // pred_check
          _
        $region438: #{ncf_forward.1} parent=424 // pred_check_branch
          %992 = sbr.rel (%p989) target = $region440
        $region439: #{ncf_forward.1} parent=424 // pred_region
          %s993 = sand.u32 1, 7
          %s994 = ssub.s32 1, %s993
          %s995 = scalar_lea.vmem %s965, %s994
          %s996 = ssub.s32 1, %s993
          %s997 = scalar_lea.vmem %s966, %s996 [#allocation3]
          %s998 = sshllo.u32 0, %s993
          loop: start=0, step=1, limit=1
          $region441: #{ncf_forward.1} parent=439 // loop_pre_header
            _
          $region442: #{ncf_forward.1} parent=439 // loop_header
            %s1000 = sphi 0, %s1004
            %p1001 = scmp.ge.s32.totalorder %s1000, 1
            %s1005 = sphi %s995, %s995
            %s1006 = sphi %s997, %s997
          $region443: #{ncf_forward.1} parent=439 // loop_header_branch
            %1003 = sbr.rel (%p1001) target = $region447
          $region444: #{ncf_forward.1} parent=439 // loop_body
            %v1007 = vld [vmem:[%s1005] sm:%s998]
            %1008 = vst [vmem:[%s1006] sm:%s998] %v1007
            %v1009 = vld [vmem:[%s1005 + $0x8] sm:%s998]
            %1010 = vst [vmem:[%s1006 + $0x8] sm:%s998] %v1009
          $region445: #{ncf_forward.1} parent=439 // loop_footer
            %s1004 = sadd.s32 1, %s1000
          $region446: #{ncf_forward.1} parent=439 // loop_footer_branch
            %999 = sbr.rel target = $region442
          $region447: #{ncf_forward.1} parent=439 // loop_exit
            _
        $region440: #{ncf_forward.1} parent=424 // pred_fallthru
          _
      $region425: #{ncf_forward.1} parent=300 // pred_fallthru
        _
      // Predicated region
      $region426: #{ncf_forward.1} parent=300 // pred_check
        %p972 = pneg %p968
      $region427: #{ncf_forward.1} parent=300 // pred_check_branch
        %974 = sbr.rel (%p972) target = $region429
      $region428: #{ncf_forward.1} parent=300 // pred_region
        %s975 = sshllo.u32 0, 1
        loop: start=0, step=1, limit=1
        $region430: #{ncf_forward.1} parent=428 // loop_pre_header
          _
        $region431: #{ncf_forward.1} parent=428 // loop_header
          %s977 = sphi 0, %s981
          %p978 = scmp.ge.s32.totalorder %s977, 1
          %s982 = sphi %s965, %s965
          %s983 = sphi %s966, %s966
        $region432: #{ncf_forward.1} parent=428 // loop_header_branch
          %980 = sbr.rel (%p978) target = $region436
        $region433: #{ncf_forward.1} parent=428 // loop_body
          %v984 = vld [vmem:[%s982] sm:%s975]
          %985 = vst [vmem:[%s983] sm:%s975] %v984
          %v986 = vld [vmem:[%s982 + $0x8] sm:%s975]
          %987 = vst [vmem:[%s983 + $0x8] sm:%s975] %v986
        $region434: #{ncf_forward.1} parent=428 // loop_footer
          %s981 = sadd.s32 1, %s977
        $region435: #{ncf_forward.1} parent=428 // loop_footer_branch
          %976 = sbr.rel target = $region431
        $region436: #{ncf_forward.1} parent=428 // loop_exit
          _
      $region429: #{ncf_forward.1} parent=300 // pred_fallthru
        _
      // Predicated region
      $region448: #{ncf_forward.1} parent=300 // pred_check
        _
      $region449: #{ncf_forward.1} parent=300 // pred_check_branch
        %1013 = sbr.rel (0) target = $region451
      $region450: #{ncf_forward.1} parent=300 // pred_region
        %1014 = vsyncadd %s686, 32
      $region451: #{ncf_forward.1} parent=300 // pred_fallthru
        _
      %s1015 = sadd.s32 %s662, 5
      %s1016 = sld [smem:[#allocation6 + %s1015]]
      %s1017 = sld [smem:[#allocation7 + %s1015]]
      %s1018 = sshrl.u32 %s1016, 3
      %s1019 = sand.u32 %s1016, 7
      %s1020 = smul.u32 %s1018, 16
      %s1021 = sadd.s32 %s1019, %s1020
      %s1022 = smul.addr %s1021, 16
      %s1023 = scalar_lea.hbm %s2, %s1022
      %s1024 = sadd.s32 5, %s671
      %s1025 = scalar_lea.vmem [#allocation2], %s1024
      %s1027 = sshll.u32 %s1025, 4
      %s1028 = int_to_ptr.vmem [resolvable:$true] %s1027
      %1030 = dma.hbm_to_vmem [thread:$0]  %s1023, 32, %s1028, %s673, 128, 128, 1
      %s1031 = sshrl.u32 %s1017, 3
      %s1032 = sand.u32 %s1017, 7
      %s1033 = smul.u32 %s1031, 16
      %s1034 = sadd.s32 %s1032, %s1033
      %s1035 = scalar_lea.vmem %s3, %s1034
      %s1036 = scalar_lea.vmem [#allocation3], %s1024
      %p1038 = scmp.lt.u32.totalorder 1, 8
      %p1039 = pneg %p1038
      // Predicated region
      $region452: #{ncf_forward.1} parent=300 // pred_check
        _
      $region453: #{ncf_forward.1} parent=300 // pred_check_branch
        %1041 = sbr.rel (%p1038) target = $region455
      $region454: #{ncf_forward.1} parent=300 // pred_region
        %s1058 = sand.u32 1, 7
        %p1059 = scmp.eq.s32.totalorder %s1058, 0
        %p1060 = pneg %p1059
        // Predicated region
        $region467: #{ncf_forward.1} parent=454 // pred_check
          _
        $region468: #{ncf_forward.1} parent=454 // pred_check_branch
          %1062 = sbr.rel (%p1059) target = $region470
        $region469: #{ncf_forward.1} parent=454 // pred_region
          %s1063 = sand.u32 1, 7
          %s1064 = ssub.s32 1, %s1063
          %s1065 = scalar_lea.vmem %s1035, %s1064
          %s1066 = ssub.s32 1, %s1063
          %s1067 = scalar_lea.vmem %s1036, %s1066 [#allocation3]
          %s1068 = sshllo.u32 0, %s1063
          loop: start=0, step=1, limit=1
          $region471: #{ncf_forward.1} parent=469 // loop_pre_header
            _
          $region472: #{ncf_forward.1} parent=469 // loop_header
            %s1070 = sphi 0, %s1074
            %p1071 = scmp.ge.s32.totalorder %s1070, 1
            %s1075 = sphi %s1065, %s1065
            %s1076 = sphi %s1067, %s1067
          $region473: #{ncf_forward.1} parent=469 // loop_header_branch
            %1073 = sbr.rel (%p1071) target = $region477
          $region474: #{ncf_forward.1} parent=469 // loop_body
            %v1077 = vld [vmem:[%s1075] sm:%s1068]
            %1078 = vst [vmem:[%s1076] sm:%s1068] %v1077
            %v1079 = vld [vmem:[%s1075 + $0x8] sm:%s1068]
            %1080 = vst [vmem:[%s1076 + $0x8] sm:%s1068] %v1079
          $region475: #{ncf_forward.1} parent=469 // loop_footer
            %s1074 = sadd.s32 1, %s1070
          $region476: #{ncf_forward.1} parent=469 // loop_footer_branch
            %1069 = sbr.rel target = $region472
          $region477: #{ncf_forward.1} parent=469 // loop_exit
            _
        $region470: #{ncf_forward.1} parent=454 // pred_fallthru
          _
      $region455: #{ncf_forward.1} parent=300 // pred_fallthru
        _
      // Predicated region
      $region456: #{ncf_forward.1} parent=300 // pred_check
        %p1042 = pneg %p1038
      $region457: #{ncf_forward.1} parent=300 // pred_check_branch
        %1044 = sbr.rel (%p1042) target = $region459
      $region458: #{ncf_forward.1} parent=300 // pred_region
        %s1045 = sshllo.u32 0, 1
        loop: start=0, step=1, limit=1
        $region460: #{ncf_forward.1} parent=458 // loop_pre_header
          _
        $region461: #{ncf_forward.1} parent=458 // loop_header
          %s1047 = sphi 0, %s1051
          %p1048 = scmp.ge.s32.totalorder %s1047, 1
          %s1052 = sphi %s1035, %s1035
          %s1053 = sphi %s1036, %s1036
        $region462: #{ncf_forward.1} parent=458 // loop_header_branch
          %1050 = sbr.rel (%p1048) target = $region466
        $region463: #{ncf_forward.1} parent=458 // loop_body
          %v1054 = vld [vmem:[%s1052] sm:%s1045]
          %1055 = vst [vmem:[%s1053] sm:%s1045] %v1054
          %v1056 = vld [vmem:[%s1052 + $0x8] sm:%s1045]
          %1057 = vst [vmem:[%s1053 + $0x8] sm:%s1045] %v1056
        $region464: #{ncf_forward.1} parent=458 // loop_footer
          %s1051 = sadd.s32 1, %s1047
        $region465: #{ncf_forward.1} parent=458 // loop_footer_branch
          %1046 = sbr.rel target = $region461
        $region466: #{ncf_forward.1} parent=458 // loop_exit
          _
      $region459: #{ncf_forward.1} parent=300 // pred_fallthru
        _
      // Predicated region
      $region478: #{ncf_forward.1} parent=300 // pred_check
        _
      $region479: #{ncf_forward.1} parent=300 // pred_check_branch
        %1083 = sbr.rel (0) target = $region481
      $region480: #{ncf_forward.1} parent=300 // pred_region
        %1084 = vsyncadd %s686, 32
      $region481: #{ncf_forward.1} parent=300 // pred_fallthru
        _
      %s1085 = sadd.s32 %s662, 6
      %s1086 = sld [smem:[#allocation6 + %s1085]]
      %s1087 = sld [smem:[#allocation7 + %s1085]]
      %s1088 = sshrl.u32 %s1086, 3
      %s1089 = sand.u32 %s1086, 7
      %s1090 = smul.u32 %s1088, 16
      %s1091 = sadd.s32 %s1089, %s1090
      %s1092 = smul.addr %s1091, 16
      %s1093 = scalar_lea.hbm %s2, %s1092
      %s1094 = sadd.s32 6, %s671
      %s1095 = scalar_lea.vmem [#allocation2], %s1094
      %s1097 = sshll.u32 %s1095, 4
      %s1098 = int_to_ptr.vmem [resolvable:$true] %s1097
      %1100 = dma.hbm_to_vmem [thread:$0]  %s1093, 32, %s1098, %s673, 128, 128, 1
      %s1101 = sshrl.u32 %s1087, 3
      %s1102 = sand.u32 %s1087, 7
      %s1103 = smul.u32 %s1101, 16
      %s1104 = sadd.s32 %s1102, %s1103
      %s1105 = scalar_lea.vmem %s3, %s1104
      %s1106 = scalar_lea.vmem [#allocation3], %s1094
      %p1108 = scmp.lt.u32.totalorder 1, 8
      %p1109 = pneg %p1108
      // Predicated region
      $region482: #{ncf_forward.1} parent=300 // pred_check
        _
      $region483: #{ncf_forward.1} parent=300 // pred_check_branch
        %1111 = sbr.rel (%p1108) target = $region485
      $region484: #{ncf_forward.1} parent=300 // pred_region
        %s1128 = sand.u32 1, 7
        %p1129 = scmp.eq.s32.totalorder %s1128, 0
        %p1130 = pneg %p1129
        // Predicated region
        $region497: #{ncf_forward.1} parent=484 // pred_check
          _
        $region498: #{ncf_forward.1} parent=484 // pred_check_branch
          %1132 = sbr.rel (%p1129) target = $region500
        $region499: #{ncf_forward.1} parent=484 // pred_region
          %s1133 = sand.u32 1, 7
          %s1134 = ssub.s32 1, %s1133
          %s1135 = scalar_lea.vmem %s1105, %s1134
          %s1136 = ssub.s32 1, %s1133
          %s1137 = scalar_lea.vmem %s1106, %s1136 [#allocation3]
          %s1138 = sshllo.u32 0, %s1133
          loop: start=0, step=1, limit=1
          $region501: #{ncf_forward.1} parent=499 // loop_pre_header
            _
          $region502: #{ncf_forward.1} parent=499 // loop_header
            %s1140 = sphi 0, %s1144
            %p1141 = scmp.ge.s32.totalorder %s1140, 1
            %s1145 = sphi %s1135, %s1135
            %s1146 = sphi %s1137, %s1137
          $region503: #{ncf_forward.1} parent=499 // loop_header_branch
            %1143 = sbr.rel (%p1141) target = $region507
          $region504: #{ncf_forward.1} parent=499 // loop_body
            %v1147 = vld [vmem:[%s1145] sm:%s1138]
            %1148 = vst [vmem:[%s1146] sm:%s1138] %v1147
            %v1149 = vld [vmem:[%s1145 + $0x8] sm:%s1138]
            %1150 = vst [vmem:[%s1146 + $0x8] sm:%s1138] %v1149
          $region505: #{ncf_forward.1} parent=499 // loop_footer
            %s1144 = sadd.s32 1, %s1140
          $region506: #{ncf_forward.1} parent=499 // loop_footer_branch
            %1139 = sbr.rel target = $region502
          $region507: #{ncf_forward.1} parent=499 // loop_exit
            _
        $region500: #{ncf_forward.1} parent=484 // pred_fallthru
          _
      $region485: #{ncf_forward.1} parent=300 // pred_fallthru
        _
      // Predicated region
      $region486: #{ncf_forward.1} parent=300 // pred_check
        %p1112 = pneg %p1108
      $region487: #{ncf_forward.1} parent=300 // pred_check_branch
        %1114 = sbr.rel (%p1112) target = $region489
      $region488: #{ncf_forward.1} parent=300 // pred_region
        %s1115 = sshllo.u32 0, 1
        loop: start=0, step=1, limit=1
        $region490: #{ncf_forward.1} parent=488 // loop_pre_header
          _
        $region491: #{ncf_forward.1} parent=488 // loop_header
          %s1117 = sphi 0, %s1121
          %p1118 = scmp.ge.s32.totalorder %s1117, 1
          %s1122 = sphi %s1105, %s1105
          %s1123 = sphi %s1106, %s1106
        $region492: #{ncf_forward.1} parent=488 // loop_header_branch
          %1120 = sbr.rel (%p1118) target = $region496
        $region493: #{ncf_forward.1} parent=488 // loop_body
          %v1124 = vld [vmem:[%s1122] sm:%s1115]
          %1125 = vst [vmem:[%s1123] sm:%s1115] %v1124
          %v1126 = vld [vmem:[%s1122 + $0x8] sm:%s1115]
          %1127 = vst [vmem:[%s1123 + $0x8] sm:%s1115] %v1126
        $region494: #{ncf_forward.1} parent=488 // loop_footer
          %s1121 = sadd.s32 1, %s1117
        $region495: #{ncf_forward.1} parent=488 // loop_footer_branch
          %1116 = sbr.rel target = $region491
        $region496: #{ncf_forward.1} parent=488 // loop_exit
          _
      $region489: #{ncf_forward.1} parent=300 // pred_fallthru
        _
      // Predicated region
      $region508: #{ncf_forward.1} parent=300 // pred_check
        _
      $region509: #{ncf_forward.1} parent=300 // pred_check_branch
        %1153 = sbr.rel (0) target = $region511
      $region510: #{ncf_forward.1} parent=300 // pred_region
        %1154 = vsyncadd %s686, 32
      $region511: #{ncf_forward.1} parent=300 // pred_fallthru
        _
      %s1155 = sadd.s32 %s662, 7
      %s1156 = sld [smem:[#allocation6 + %s1155]]
      %s1157 = sld [smem:[#allocation7 + %s1155]]
      %s1158 = sshrl.u32 %s1156, 3
      %s1159 = sand.u32 %s1156, 7
      %s1160 = smul.u32 %s1158, 16
      %s1161 = sadd.s32 %s1159, %s1160
      %s1162 = smul.addr %s1161, 16
      %s1163 = scalar_lea.hbm %s2, %s1162
      %s1164 = sadd.s32 7, %s671
      %s1165 = scalar_lea.vmem [#allocation2], %s1164
      %s1167 = sshll.u32 %s1165, 4
      %s1168 = int_to_ptr.vmem [resolvable:$true] %s1167
      %1170 = dma.hbm_to_vmem [thread:$0]  %s1163, 32, %s1168, %s673, 128, 128, 1
      %s1171 = sshrl.u32 %s1157, 3
      %s1172 = sand.u32 %s1157, 7
      %s1173 = smul.u32 %s1171, 16
      %s1174 = sadd.s32 %s1172, %s1173
      %s1175 = scalar_lea.vmem %s3, %s1174
      %s1176 = scalar_lea.vmem [#allocation3], %s1164
      %p1178 = scmp.lt.u32.totalorder 1, 8
      %p1179 = pneg %p1178
      // Predicated region
      $region512: #{ncf_forward.1} parent=300 // pred_check
        _
      $region513: #{ncf_forward.1} parent=300 // pred_check_branch
        %1181 = sbr.rel (%p1178) target = $region515
      $region514: #{ncf_forward.1} parent=300 // pred_region
        %s1198 = sand.u32 1, 7
        %p1199 = scmp.eq.s32.totalorder %s1198, 0
        %p1200 = pneg %p1199
        // Predicated region
        $region527: #{ncf_forward.1} parent=514 // pred_check
          _
        $region528: #{ncf_forward.1} parent=514 // pred_check_branch
          %1202 = sbr.rel (%p1199) target = $region530
        $region529: #{ncf_forward.1} parent=514 // pred_region
          %s1203 = sand.u32 1, 7
          %s1204 = ssub.s32 1, %s1203
          %s1205 = scalar_lea.vmem %s1175, %s1204
          %s1206 = ssub.s32 1, %s1203
          %s1207 = scalar_lea.vmem %s1176, %s1206 [#allocation3]
          %s1208 = sshllo.u32 0, %s1203
          loop: start=0, step=1, limit=1
          $region531: #{ncf_forward.1} parent=529 // loop_pre_header
            _
          $region532: #{ncf_forward.1} parent=529 // loop_header
            %s1210 = sphi 0, %s1214
            %p1211 = scmp.ge.s32.totalorder %s1210, 1
            %s1215 = sphi %s1205, %s1205
            %s1216 = sphi %s1207, %s1207
          $region533: #{ncf_forward.1} parent=529 // loop_header_branch
            %1213 = sbr.rel (%p1211) target = $region537
          $region534: #{ncf_forward.1} parent=529 // loop_body
            %v1217 = vld [vmem:[%s1215] sm:%s1208]
            %1218 = vst [vmem:[%s1216] sm:%s1208] %v1217
            %v1219 = vld [vmem:[%s1215 + $0x8] sm:%s1208]
            %1220 = vst [vmem:[%s1216 + $0x8] sm:%s1208] %v1219
          $region535: #{ncf_forward.1} parent=529 // loop_footer
            %s1214 = sadd.s32 1, %s1210
          $region536: #{ncf_forward.1} parent=529 // loop_footer_branch
            %1209 = sbr.rel target = $region532
          $region537: #{ncf_forward.1} parent=529 // loop_exit
            _
        $region530: #{ncf_forward.1} parent=514 // pred_fallthru
          _
      $region515: #{ncf_forward.1} parent=300 // pred_fallthru
        _
      // Predicated region
      $region516: #{ncf_forward.1} parent=300 // pred_check
        %p1182 = pneg %p1178
      $region517: #{ncf_forward.1} parent=300 // pred_check_branch
        %1184 = sbr.rel (%p1182) target = $region519
      $region518: #{ncf_forward.1} parent=300 // pred_region
        %s1185 = sshllo.u32 0, 1
        loop: start=0, step=1, limit=1
        $region520: #{ncf_forward.1} parent=518 // loop_pre_header
          _
        $region521: #{ncf_forward.1} parent=518 // loop_header
          %s1187 = sphi 0, %s1191
          %p1188 = scmp.ge.s32.totalorder %s1187, 1
          %s1192 = sphi %s1175, %s1175
          %s1193 = sphi %s1176, %s1176
        $region522: #{ncf_forward.1} parent=518 // loop_header_branch
          %1190 = sbr.rel (%p1188) target = $region526
        $region523: #{ncf_forward.1} parent=518 // loop_body
          %v1194 = vld [vmem:[%s1192] sm:%s1185]
          %1195 = vst [vmem:[%s1193] sm:%s1185] %v1194
          %v1196 = vld [vmem:[%s1192 + $0x8] sm:%s1185]
          %1197 = vst [vmem:[%s1193 + $0x8] sm:%s1185] %v1196
        $region524: #{ncf_forward.1} parent=518 // loop_footer
          %s1191 = sadd.s32 1, %s1187
        $region525: #{ncf_forward.1} parent=518 // loop_footer_branch
          %1186 = sbr.rel target = $region521
        $region526: #{ncf_forward.1} parent=518 // loop_exit
          _
      $region519: #{ncf_forward.1} parent=300 // pred_fallthru
        _
      // Predicated region
      $region538: #{ncf_forward.1} parent=300 // pred_check
        _
      $region539: #{ncf_forward.1} parent=300 // pred_check_branch
        %1223 = sbr.rel (0) target = $region541
      $region540: #{ncf_forward.1} parent=300 // pred_region
        %1224 = vsyncadd %s686, 32
      $region541: #{ncf_forward.1} parent=300 // pred_fallthru
        _
    $region301: #{ncf_forward.1} parent=1 // pred_fallthru
      _
    %s1225 = smul.u32 %s86, 2
    %s1226 = smul.addr %s1225, 8
    %s1227 = scalar_lea.vmem [#allocation3], %s1226
    %s1228 = smul.addr %s1225, 8
    %s1229 = scalar_lea.vmem [#allocation2], %s1228
    %s1230 = scalar_lea.sflag [#allocation4], %s86
    %s1231 = smul.u32 8, 1
    %s1232 = smul.u32 %s1231, 2
    %s1233 = sshll.u32 %s1232, 4
    %1234 = dma.done %s1230, %s1233
    %s1235 = sadd.s32 %s86, 2
    %s1236 = scalar_lea.sflag [#allocation4], %s1235
    %s1237 = sshll.u32 %s1232, 4
    %1238 = dma.done %s1236, %s1237
    %v1239 = vld [vmem:[%s1229] sm:$0xff]
    %v1240 = vld [vmem:[%s1229 + $0x8] sm:$0xff]
    %v1241 = vld [vmem:[%s1227] sm:$0xff]
    %v1242 = vld [vmem:[%s1227 + $0x8] sm:$0xff]
    %v1243 = vmul.f32 %v1239, %v1241
    %v1244 = vld [vmem:[%s4] sm:$0x1]
    %v1246 = vlaneseq
    %v1247 = vshrl.u32 %v1246, 7
    %v1248 = vsub.s32 0, %v1247
    %v1249 = vrot.slane %v1244, %v1248
    %v1251 = vmul.f32 %v1243, %v1249
    %1252 = vadd.xlane.f32.xlu0 %v1251
    %v1253 = vpop.xlane.xlu0 %1252
    %s1254 = sld [smem:[#allocation8]]
    %v1255 = vstv %s1254
    %v1256 = vadd.f32 %v1253, %v1255
    %v1257 = vld [vmem:[%s5] sm:$0xff]
    %v1258 = vld [vmem:[%s5 + $0x8] sm:$0xff]
    %v1259 = vld [vmem:[%s5 + $0x10] sm:$0xff]
    %v1260 = vld [vmem:[%s5 + $0x18] sm:$0xff]
    %v1261 = vld [vmem:[%s5 + $0x20] sm:$0xff]
    %v1262 = vld [vmem:[%s5 + $0x28] sm:$0xff]
    %v1263 = vld [vmem:[%s5 + $0x30] sm:$0xff]
    %v1264 = vld [vmem:[%s5 + $0x38] sm:$0xff]
    %v1265 = vld [vmem:[%s5 + $0x40] sm:$0xff]
    %v1266 = vld [vmem:[%s5 + $0x48] sm:$0xff]
    %v1267 = vld [vmem:[%s5 + $0x50] sm:$0xff]
    %v1268 = vld [vmem:[%s5 + $0x58] sm:$0xff]
    %v1269 = vld [vmem:[%s5 + $0x60] sm:$0xff]
    %v1270 = vld [vmem:[%s5 + $0x68] sm:$0xff]
    %v1271 = vld [vmem:[%s5 + $0x70] sm:$0xff]
    %v1272 = vld [vmem:[%s5 + $0x78] sm:$0xff]
    %v1273 = vld [vmem:[%s6] sm:$0xff]
    %v1274 = vld [vmem:[%s6 + $0x8] sm:$0xff]
    %v1275 = vld [vmem:[%s6 + $0x10] sm:$0xff]
    %v1276 = vld [vmem:[%s6 + $0x18] sm:$0xff]
    %v1277 = vld [vmem:[%s6 + $0x20] sm:$0xff]
    %v1278 = vld [vmem:[%s6 + $0x28] sm:$0xff]
    %v1279 = vld [vmem:[%s6 + $0x30] sm:$0xff]
    %v1280 = vld [vmem:[%s6 + $0x38] sm:$0xff]
    %v1281 = vld [vmem:[%s6 + $0x40] sm:$0xff]
    %v1282 = vld [vmem:[%s6 + $0x48] sm:$0xff]
    %v1283 = vld [vmem:[%s6 + $0x50] sm:$0xff]
    %v1284 = vld [vmem:[%s6 + $0x58] sm:$0xff]
    %v1285 = vld [vmem:[%s6 + $0x60] sm:$0xff]
    %v1286 = vld [vmem:[%s6 + $0x68] sm:$0xff]
    %v1287 = vld [vmem:[%s6 + $0x70] sm:$0xff]
    %v1288 = vld [vmem:[%s6 + $0x78] sm:$0xff]
    %1289 = vmatprep.subr.mxu0 0.0
    %1290 = vmatpush1.msra.mxu0 %v1273
    %1291 = vmatprep.subr.mxu0 0.0
    %1292 = vmatpush1.msra.mxu0 %v1274
    %1293 = vmatprep.subr.mxu0 0.0
    %1294 = vmatpush1.msra.mxu0 %v1275
    %1295 = vmatprep.subr.mxu0 0.0
    %1296 = vmatpush1.msra.mxu0 %v1276
    %1297 = vmatprep.subr.mxu0 0.0
    %1298 = vmatpush1.msra.mxu0 %v1277
    %1299 = vmatprep.subr.mxu0 0.0
    %1300 = vmatpush1.msra.mxu0 %v1278
    %1301 = vmatprep.subr.mxu0 0.0
    %1302 = vmatpush1.msra.mxu0 %v1279
    %1303 = vmatprep.subr.mxu0 0.0
    %1304 = vmatpush1.msra.mxu0 %v1280
    %1305 = vmatprep.subr.mxu0 0.0
    %1306 = vmatpush1.msra.mxu0 %v1281
    %1307 = vmatprep.subr.mxu0 0.0
    %1308 = vmatpush1.msra.mxu0 %v1282
    %1309 = vmatprep.subr.mxu0 0.0
    %1310 = vmatpush1.msra.mxu0 %v1283
    %1311 = vmatprep.subr.mxu0 0.0
    %1312 = vmatpush1.msra.mxu0 %v1284
    %1313 = vmatprep.subr.mxu0 0.0
    %1314 = vmatpush1.msra.mxu0 %v1285
    %1315 = vmatprep.subr.mxu0 0.0
    %1316 = vmatpush1.msra.mxu0 %v1286
    %1317 = vmatprep.subr.mxu0 0.0
    %1318 = vmatpush1.msra.mxu0 %v1287
    %1319 = vmatprep.subr.mxu0 0.0
    %1320 = vmatpush1.msra.mxu0 %v1288
    %1321 = vmatprep.subr.mxu0 0.0
    %1322 = vmatpush1.msra.mxu0 0.0
    %1323 = vmatprep.subr.mxu0 0.0
    %1324 = vmatpush1.msra.mxu0 0.0
    %1325 = vmatprep.subr.mxu0 0.0
    %1326 = vmatpush1.msra.mxu0 0.0
    %1327 = vmatprep.subr.mxu0 0.0
    %1328 = vmatpush1.msra.mxu0 0.0
    %1329 = vmatprep.subr.mxu0 0.0
    %1330 = vmatpush1.msra.mxu0 0.0
    %1331 = vmatprep.subr.mxu0 0.0
    %1332 = vmatpush1.msra.mxu0 0.0
    %1333 = vmatprep.subr.mxu0 0.0
    %1334 = vmatpush1.msra.mxu0 0.0
    %1335 = vmatprep.subr.mxu0 0.0
    %1336 = vmatpush1.msra.mxu0 0.0
    %1337 = vmatprep.subr.mxu0 0.0
    %1338 = vmatpush1.msra.mxu0 0.0
    %1339 = vmatprep.subr.mxu0 0.0
    %1340 = vmatpush1.msra.mxu0 0.0
    %1341 = vmatprep.subr.mxu0 0.0
    %1342 = vmatpush1.msra.mxu0 0.0
    %1343 = vmatprep.subr.mxu0 0.0
    %1344 = vmatpush1.msra.mxu0 0.0
    %1345 = vmatprep.subr.mxu0 0.0
    %1346 = vmatpush1.msra.mxu0 0.0
    %1347 = vmatprep.subr.mxu0 0.0
    %1348 = vmatpush1.msra.mxu0 0.0
    %1349 = vmatprep.subr.mxu0 0.0
    %1350 = vmatpush1.msra.mxu0 0.0
    %1351 = vmatprep.subr.mxu0 0.0
    %1352 = vmatpush1.msra.mxu0 0.0
    %1353 = vmatprep.mubr.f32.mxu0 0.0
    %1354 = vmatmul.mubr.f32.gmra.mrb[0].mxu0 %v1242
    %v1355 = vpop.f32.mrb[0].mxu0
    %v1356 = vadd.f32 0.0, %v1355
    %v1357 = vpop.f32.mrb[0].mxu0
    %1358 = vdwg.mxu0
    %1359 = vmatprep.subr.mxu0 0.0
    %1360 = vmatpush1.msra.mxu0 %v1257
    %1361 = vmatprep.subr.mxu0 0.0
    %1362 = vmatpush1.msra.mxu0 %v1258
    %1363 = vmatprep.subr.mxu0 0.0
    %1364 = vmatpush1.msra.mxu0 %v1259
    %1365 = vmatprep.subr.mxu0 0.0
    %1366 = vmatpush1.msra.mxu0 %v1260
    %1367 = vmatprep.subr.mxu0 0.0
    %1368 = vmatpush1.msra.mxu0 %v1261
    %1369 = vmatprep.subr.mxu0 0.0
    %1370 = vmatpush1.msra.mxu0 %v1262
    %1371 = vmatprep.subr.mxu0 0.0
    %1372 = vmatpush1.msra.mxu0 %v1263
    %1373 = vmatprep.subr.mxu0 0.0
    %1374 = vmatpush1.msra.mxu0 %v1264
    %1375 = vmatprep.subr.mxu0 0.0
    %1376 = vmatpush1.msra.mxu0 %v1265
    %1377 = vmatprep.subr.mxu0 0.0
    %1378 = vmatpush1.msra.mxu0 %v1266
    %1379 = vmatprep.subr.mxu0 0.0
    %1380 = vmatpush1.msra.mxu0 %v1267
    %1381 = vmatprep.subr.mxu0 0.0
    %1382 = vmatpush1.msra.mxu0 %v1268
    %1383 = vmatprep.subr.mxu0 0.0
    %1384 = vmatpush1.msra.mxu0 %v1269
    %1385 = vmatprep.subr.mxu0 0.0
    %1386 = vmatpush1.msra.mxu0 %v1270
    %1387 = vmatprep.subr.mxu0 0.0
    %1388 = vmatpush1.msra.mxu0 %v1271
    %1389 = vmatprep.subr.mxu0 0.0
    %1390 = vmatpush1.msra.mxu0 %v1272
    %1391 = vmatprep.subr.mxu0 0.0
    %1392 = vmatpush1.msra.mxu0 0.0
    %1393 = vmatprep.subr.mxu0 0.0
    %1394 = vmatpush1.msra.mxu0 0.0
    %1395 = vmatprep.subr.mxu0 0.0
    %1396 = vmatpush1.msra.mxu0 0.0
    %1397 = vmatprep.subr.mxu0 0.0
    %1398 = vmatpush1.msra.mxu0 0.0
    %1399 = vmatprep.subr.mxu0 0.0
    %1400 = vmatpush1.msra.mxu0 0.0
    %1401 = vmatprep.subr.mxu0 0.0
    %1402 = vmatpush1.msra.mxu0 0.0
    %1403 = vmatprep.subr.mxu0 0.0
    %1404 = vmatpush1.msra.mxu0 0.0
    %1405 = vmatprep.subr.mxu0 0.0
    %1406 = vmatpush1.msra.mxu0 0.0
    %1407 = vmatprep.subr.mxu0 0.0
    %1408 = vmatpush1.msra.mxu0 0.0
    %1409 = vmatprep.subr.mxu0 0.0
    %1410 = vmatpush1.msra.mxu0 0.0
    %1411 = vmatprep.subr.mxu0 0.0
    %1412 = vmatpush1.msra.mxu0 0.0
    %1413 = vmatprep.subr.mxu0 0.0
    %1414 = vmatpush1.msra.mxu0 0.0
    %1415 = vmatprep.subr.mxu0 0.0
    %1416 = vmatpush1.msra.mxu0 0.0
    %1417 = vmatprep.subr.mxu0 0.0
    %1418 = vmatpush1.msra.mxu0 0.0
    %1419 = vmatprep.subr.mxu0 0.0
    %1420 = vmatpush1.msra.mxu0 0.0
    %1421 = vmatprep.subr.mxu0 0.0
    %1422 = vmatpush1.msra.mxu0 0.0
    %1423 = vmatprep.mubr.f32.mxu0 0.0
    %1424 = vmatmul.mubr.f32.gmra.mrb[0].mxu0 %v1240
    %v1425 = vpop.f32.mrb[0].mxu0
    %v1426 = vadd.f32 %v1356, %v1425
    %v1427 = vpop.f32.mrb[0].mxu0
    %1428 = vdwg.mxu0
    %v1429 = vld [vmem:[%s7] sm:$0x1]
    %v1431 = vlaneseq
    %v1432 = vshrl.u32 %v1431, 7
    %v1433 = vsub.s32 0, %v1432
    %v1434 = vrot.slane %v1429, %v1433
    %v1436 = vadd.f32 %v1426, %v1434
    %v1437 = vmax.f32 %v1436, 0.0
    %v1438 = vld [vmem:[%s8] sm:$0xff]
    %v1439 = vld [vmem:[%s8 + $0x8] sm:$0xff]
    %v1440 = vld [vmem:[%s8 + $0x10] sm:$0xff]
    %v1441 = vld [vmem:[%s8 + $0x18] sm:$0xff]
    %v1442 = vld [vmem:[%s8 + $0x20] sm:$0xff]
    %v1443 = vld [vmem:[%s8 + $0x28] sm:$0xff]
    %v1444 = vld [vmem:[%s8 + $0x30] sm:$0xff]
    %v1445 = vld [vmem:[%s8 + $0x38] sm:$0xff]
    %v1446 = vld [vmem:[%s9] sm:$0x1]
    %v1448 = vlaneseq
    %v1449 = vshrl.u32 %v1448, 7
    %v1450 = vsub.s32 0, %v1449
    %v1451 = vrot.slane %v1446, %v1450
    %vm1453 = vcmask 523264
    %v1455 = vsel %vm1453, %v1437, 0
    %1457 = vmatprep.subr.mxu0 0.0
    %1458 = vmatpush1.msra.mxu0 %v1438
    %1459 = vmatprep.subr.mxu0 0.0
    %1460 = vmatpush1.msra.mxu0 %v1439
    %1461 = vmatprep.subr.mxu0 0.0
    %1462 = vmatpush1.msra.mxu0 %v1440
    %1463 = vmatprep.subr.mxu0 0.0
    %1464 = vmatpush1.msra.mxu0 %v1441
    %1465 = vmatprep.subr.mxu0 0.0
    %1466 = vmatpush1.msra.mxu0 %v1442
    %1467 = vmatprep.subr.mxu0 0.0
    %1468 = vmatpush1.msra.mxu0 %v1443
    %1469 = vmatprep.subr.mxu0 0.0
    %1470 = vmatpush1.msra.mxu0 %v1444
    %1471 = vmatprep.subr.mxu0 0.0
    %1472 = vmatpush1.msra.mxu0 %v1445
    %1473 = vmatprep.subr.mxu0 0.0
    %1474 = vmatpush1.msra.mxu0 0.0
    %1475 = vmatprep.subr.mxu0 0.0
    %1476 = vmatpush1.msra.mxu0 0.0
    %1477 = vmatprep.subr.mxu0 0.0
    %1478 = vmatpush1.msra.mxu0 0.0
    %1479 = vmatprep.subr.mxu0 0.0
    %1480 = vmatpush1.msra.mxu0 0.0
    %1481 = vmatprep.subr.mxu0 0.0
    %1482 = vmatpush1.msra.mxu0 0.0
    %1483 = vmatprep.subr.mxu0 0.0
    %1484 = vmatpush1.msra.mxu0 0.0
    %1485 = vmatprep.subr.mxu0 0.0
    %1486 = vmatpush1.msra.mxu0 0.0
    %1487 = vmatprep.subr.mxu0 0.0
    %1488 = vmatpush1.msra.mxu0 0.0
    %1489 = vmatprep.subr.mxu0 0.0
    %1490 = vmatpush1.msra.mxu0 0.0
    %1491 = vmatprep.subr.mxu0 0.0
    %1492 = vmatpush1.msra.mxu0 0.0
    %1493 = vmatprep.subr.mxu0 0.0
    %1494 = vmatpush1.msra.mxu0 0.0
    %1495 = vmatprep.subr.mxu0 0.0
    %1496 = vmatpush1.msra.mxu0 0.0
    %1497 = vmatprep.subr.mxu0 0.0
    %1498 = vmatpush1.msra.mxu0 0.0
    %1499 = vmatprep.subr.mxu0 0.0
    %1500 = vmatpush1.msra.mxu0 0.0
    %1501 = vmatprep.subr.mxu0 0.0
    %1502 = vmatpush1.msra.mxu0 0.0
    %1503 = vmatprep.subr.mxu0 0.0
    %1504 = vmatpush1.msra.mxu0 0.0
    %1505 = vmatprep.subr.mxu0 0.0
    %1506 = vmatpush1.msra.mxu0 0.0
    %1507 = vmatprep.subr.mxu0 0.0
    %1508 = vmatpush1.msra.mxu0 0.0
    %1509 = vmatprep.subr.mxu0 0.0
    %1510 = vmatpush1.msra.mxu0 0.0
    %1511 = vmatprep.subr.mxu0 0.0
    %1512 = vmatpush1.msra.mxu0 0.0
    %1513 = vmatprep.subr.mxu0 0.0
    %1514 = vmatpush1.msra.mxu0 0.0
    %1515 = vmatprep.subr.mxu0 0.0
    %1516 = vmatpush1.msra.mxu0 0.0
    %1517 = vmatprep.subr.mxu0 0.0
    %1518 = vmatpush1.msra.mxu0 0.0
    %1519 = vmatprep.subr.mxu0 0.0
    %1520 = vmatpush1.msra.mxu0 0.0
    %1521 = vmatprep.mubr.f32.mxu0 0.0
    %1522 = vmatmul.mubr.f32.gmra.mrb[0].mxu0 %v1455
    %v1523 = vpop.f32.mrb[0].mxu0
    %v1524 = vadd.f32 %v1451, %v1523
    %v1525 = vpop.f32.mrb[0].mxu0
    %1526 = vdwg.mxu0
    %v1527 = vmax.f32 %v1524, 0.0
    %v1528 = vld [vmem:[%s10] sm:$0xff]
    %v1529 = vld [vmem:[%s10 + $0x8] sm:$0xff]
    %v1530 = vld [vmem:[%s10 + $0x10] sm:$0xff]
    %v1531 = vld [vmem:[%s10 + $0x18] sm:$0xff]
    %v1532 = vld [vmem:[%s11] sm:$0x1]
    %v1534 = vlaneseq
    %v1535 = vshrl.u32 %v1534, 7
    %v1536 = vsub.s32 0, %v1535
    %v1537 = vrot.slane %v1532, %v1536
    %vm1539 = vcmask 261120
    %v1541 = vsel %vm1539, %v1527, 0
    %1543 = vmatprep.subr.mxu0 0.0
    %1544 = vmatpush1.msra.mxu0 %v1528
    %1545 = vmatprep.subr.mxu0 0.0
    %1546 = vmatpush1.msra.mxu0 %v1529
    %1547 = vmatprep.subr.mxu0 0.0
    %1548 = vmatpush1.msra.mxu0 %v1530
    %1549 = vmatprep.subr.mxu0 0.0
    %1550 = vmatpush1.msra.mxu0 %v1531
    %1551 = vmatprep.subr.mxu0 0.0
    %1552 = vmatpush1.msra.mxu0 0.0
    %1553 = vmatprep.subr.mxu0 0.0
    %1554 = vmatpush1.msra.mxu0 0.0
    %1555 = vmatprep.subr.mxu0 0.0
    %1556 = vmatpush1.msra.mxu0 0.0
    %1557 = vmatprep.subr.mxu0 0.0
    %1558 = vmatpush1.msra.mxu0 0.0
    %1559 = vmatprep.subr.mxu0 0.0
    %1560 = vmatpush1.msra.mxu0 0.0
    %1561 = vmatprep.subr.mxu0 0.0
    %1562 = vmatpush1.msra.mxu0 0.0
    %1563 = vmatprep.subr.mxu0 0.0
    %1564 = vmatpush1.msra.mxu0 0.0
    %1565 = vmatprep.subr.mxu0 0.0
    %1566 = vmatpush1.msra.mxu0 0.0
    %1567 = vmatprep.subr.mxu0 0.0
    %1568 = vmatpush1.msra.mxu0 0.0
    %1569 = vmatprep.subr.mxu0 0.0
    %1570 = vmatpush1.msra.mxu0 0.0
    %1571 = vmatprep.subr.mxu0 0.0
    %1572 = vmatpush1.msra.mxu0 0.0
    %1573 = vmatprep.subr.mxu0 0.0
    %1574 = vmatpush1.msra.mxu0 0.0
    %1575 = vmatprep.subr.mxu0 0.0
    %1576 = vmatpush1.msra.mxu0 0.0
    %1577 = vmatprep.subr.mxu0 0.0
    %1578 = vmatpush1.msra.mxu0 0.0
    %1579 = vmatprep.subr.mxu0 0.0
    %1580 = vmatpush1.msra.mxu0 0.0
    %1581 = vmatprep.subr.mxu0 0.0
    %1582 = vmatpush1.msra.mxu0 0.0
    %1583 = vmatprep.subr.mxu0 0.0
    %1584 = vmatpush1.msra.mxu0 0.0
    %1585 = vmatprep.subr.mxu0 0.0
    %1586 = vmatpush1.msra.mxu0 0.0
    %1587 = vmatprep.subr.mxu0 0.0
    %1588 = vmatpush1.msra.mxu0 0.0
    %1589 = vmatprep.subr.mxu0 0.0
    %1590 = vmatpush1.msra.mxu0 0.0
    %1591 = vmatprep.subr.mxu0 0.0
    %1592 = vmatpush1.msra.mxu0 0.0
    %1593 = vmatprep.subr.mxu0 0.0
    %1594 = vmatpush1.msra.mxu0 0.0
    %1595 = vmatprep.subr.mxu0 0.0
    %1596 = vmatpush1.msra.mxu0 0.0
    %1597 = vmatprep.subr.mxu0 0.0
    %1598 = vmatpush1.msra.mxu0 0.0
    %1599 = vmatprep.subr.mxu0 0.0
    %1600 = vmatpush1.msra.mxu0 0.0
    %1601 = vmatprep.subr.mxu0 0.0
    %1602 = vmatpush1.msra.mxu0 0.0
    %1603 = vmatprep.subr.mxu0 0.0
    %1604 = vmatpush1.msra.mxu0 0.0
    %1605 = vmatprep.subr.mxu0 0.0
    %1606 = vmatpush1.msra.mxu0 0.0
    %1607 = vmatprep.mubr.f32.mxu0 0.0
    %1608 = vmatmul.mubr.f32.gmra.mrb[0].mxu0 %v1541
    %v1609 = vpop.f32.mrb[0].mxu0
    %v1610 = vadd.f32 %v1537, %v1609
    %v1611 = vpop.f32.mrb[0].mxu0
    %1612 = vdwg.mxu0
    %v1613 = vmax.f32 %v1610, 0.0
    %v1614 = vld [vmem:[%s12] sm:$0xff]
    %v1615 = vld [vmem:[%s12 + $0x8] sm:$0xff]
    %v1616 = vld [vmem:[%s13] sm:$0x1]
    %v1618 = vlaneseq
    %v1619 = vshrl.u32 %v1618, 7
    %v1620 = vsub.s32 0, %v1619
    %v1621 = vrot.slane %v1616, %v1620
    %vm1623 = vcmask 130048
    %v1625 = vsel %vm1623, %v1613, 0
    %1627 = vmatprep.subr.mxu0 0.0
    %1628 = vmatpush1.msra.mxu0 %v1614
    %1629 = vmatprep.subr.mxu0 0.0
    %1630 = vmatpush1.msra.mxu0 %v1615
    %1631 = vmatprep.subr.mxu0 0.0
    %1632 = vmatpush1.msra.mxu0 0.0
    %1633 = vmatprep.subr.mxu0 0.0
    %1634 = vmatpush1.msra.mxu0 0.0
    %1635 = vmatprep.subr.mxu0 0.0
    %1636 = vmatpush1.msra.mxu0 0.0
    %1637 = vmatprep.subr.mxu0 0.0
    %1638 = vmatpush1.msra.mxu0 0.0
    %1639 = vmatprep.subr.mxu0 0.0
    %1640 = vmatpush1.msra.mxu0 0.0
    %1641 = vmatprep.subr.mxu0 0.0
    %1642 = vmatpush1.msra.mxu0 0.0
    %1643 = vmatprep.subr.mxu0 0.0
    %1644 = vmatpush1.msra.mxu0 0.0
    %1645 = vmatprep.subr.mxu0 0.0
    %1646 = vmatpush1.msra.mxu0 0.0
    %1647 = vmatprep.subr.mxu0 0.0
    %1648 = vmatpush1.msra.mxu0 0.0
    %1649 = vmatprep.subr.mxu0 0.0
    %1650 = vmatpush1.msra.mxu0 0.0
    %1651 = vmatprep.subr.mxu0 0.0
    %1652 = vmatpush1.msra.mxu0 0.0
    %1653 = vmatprep.subr.mxu0 0.0
    %1654 = vmatpush1.msra.mxu0 0.0
    %1655 = vmatprep.subr.mxu0 0.0
    %1656 = vmatpush1.msra.mxu0 0.0
    %1657 = vmatprep.subr.mxu0 0.0
    %1658 = vmatpush1.msra.mxu0 0.0
    %1659 = vmatprep.subr.mxu0 0.0
    %1660 = vmatpush1.msra.mxu0 0.0
    %1661 = vmatprep.subr.mxu0 0.0
    %1662 = vmatpush1.msra.mxu0 0.0
    %1663 = vmatprep.subr.mxu0 0.0
    %1664 = vmatpush1.msra.mxu0 0.0
    %1665 = vmatprep.subr.mxu0 0.0
    %1666 = vmatpush1.msra.mxu0 0.0
    %1667 = vmatprep.subr.mxu0 0.0
    %1668 = vmatpush1.msra.mxu0 0.0
    %1669 = vmatprep.subr.mxu0 0.0
    %1670 = vmatpush1.msra.mxu0 0.0
    %1671 = vmatprep.subr.mxu0 0.0
    %1672 = vmatpush1.msra.mxu0 0.0
    %1673 = vmatprep.subr.mxu0 0.0
    %1674 = vmatpush1.msra.mxu0 0.0
    %1675 = vmatprep.subr.mxu0 0.0
    %1676 = vmatpush1.msra.mxu0 0.0
    %1677 = vmatprep.subr.mxu0 0.0
    %1678 = vmatpush1.msra.mxu0 0.0
    %1679 = vmatprep.subr.mxu0 0.0
    %1680 = vmatpush1.msra.mxu0 0.0
    %1681 = vmatprep.subr.mxu0 0.0
    %1682 = vmatpush1.msra.mxu0 0.0
    %1683 = vmatprep.subr.mxu0 0.0
    %1684 = vmatpush1.msra.mxu0 0.0
    %1685 = vmatprep.subr.mxu0 0.0
    %1686 = vmatpush1.msra.mxu0 0.0
    %1687 = vmatprep.subr.mxu0 0.0
    %1688 = vmatpush1.msra.mxu0 0.0
    %1689 = vmatprep.subr.mxu0 0.0
    %1690 = vmatpush1.msra.mxu0 0.0
    %1691 = vmatprep.mubr.f32.mxu0 0.0
    %1692 = vmatmul.mubr.f32.gmra.mrb[0].mxu0 %v1625
    %v1693 = vpop.f32.mrb[0].mxu0
    %v1694 = vadd.f32 %v1621, %v1693
    %v1695 = vpop.f32.mrb[0].mxu0
    %1696 = vdwg.mxu0
    %v1697 = vmax.f32 %v1694, 0.0
    %v1698 = vld [vmem:[%s14] sm:$0x1]
    %v1700 = vlaneseq
    %v1701 = vshrl.u32 %v1700, 7
    %v1702 = vsub.s32 0, %v1701
    %v1703 = vrot.slane %v1698, %v1702
    %v1705 = vmul.f32 %v1697, %v1703
    %vm1706 = vcmask 64512
    %v1707 = vsel %vm1706, %v1705, 0.0
    %1708 = vadd.xlane.f32.xlu0 %v1707
    %v1709 = vpop.xlane.xlu0 %1708
    %s1710 = sld [smem:[#allocation8 + $0x1]]
    %v1711 = vstv %s1710
    %v1712 = vadd.f32 %v1709, %v1711
    %s1713 = sld [smem:[#allocation8 + $0x3]]
    %v1714 = vstv %s1713
    %v1715 = vmul.f32 %v1714, %v1256
    %s1716 = sld [smem:[#allocation8 + $0x4]]
    %v1717 = vstv %s1716
    %v1718 = vmul.f32 %v1717, %v1712
    %v1719 = vadd.f32 %v1715, %v1718
    %s1720 = sld [smem:[#allocation8 + $0x2]]
    %v1721 = vstv %s1720
    %v1722 = vadd.f32 %v1719, %v1721
    %vm1723 = vcmask 7168
    %1724 = vst.msk [vmem:[%s77] sm:$0xff] %vm1723, %v1722
    %s1725 = sadd.s32 0, 0
    %p1726 = scmp.lt.s32.totalorder %s1725, 0
    %s1727 = scalar_select %p1726, %s1725, 0
    %s1728 = smul.addr %s1727, 8
    %s1729 = scalar_lea.vmem %s16, %s1728
    // Predicated region
    $region542: #{ncf_forward.1} parent=1 // pred_check
      _
    $region543: #{ncf_forward.1} parent=1 // pred_check_branch
      %1731 = sbr.rel (0) target = $region545
    $region544: #{ncf_forward.1} parent=1 // pred_region
      %s1732 = sadd.s32 0, 0
    $region545: #{ncf_forward.1} parent=1 // pred_fallthru
      _
    // Predicated region
    $region546: #{ncf_forward.1} parent=1 // pred_check
      _
    $region547: #{ncf_forward.1} parent=1 // pred_check_branch
      %1734 = sbr.rel (0) target = $region549
    $region548: #{ncf_forward.1} parent=1 // pred_region
      %s1735 = sadd.s32 0, 0
      %p1736 = scmp.lt.s32.totalorder %s1735, 0
      %s1737 = scalar_select %p1736, %s1735, 0
      %s1738 = smul.addr %s1737, 8
      %s1739 = scalar_lea.vmem %s16, %s1738
    $region549: #{ncf_forward.1} parent=1 // pred_fallthru
      _
    %1740 = vsyncpa [#allocation9], 1
  %1741 = vsyncmov [#allocation4]
  %s1742 = vpop.sfrf %1741
  %p1743 = scmp.eq.s32.totalorder %s1742, 0
  %p1744 = pneg %p1743
  %1746 = shalt.err (%p1744)
  %s1747 = scalar_lea.sflag [#allocation4], 1
  %1748 = vsyncmov %s1747
  %s1749 = vpop.sfrf %1748
  %p1750 = scmp.eq.s32.totalorder %s1749, 0
  %p1751 = pneg %p1750
  %1753 = shalt.err (%p1751)
  %s1754 = scalar_lea.sflag [#allocation4], 2
  %1755 = vsyncmov %s1754
  %s1756 = vpop.sfrf %1755
  %p1757 = scmp.eq.s32.totalorder %s1756, 0
  %p1758 = pneg %p1757
  %1760 = shalt.err (%p1758)
  %s1761 = scalar_lea.sflag [#allocation4], 3
  %1762 = vsyncmov %s1761
  %s1763 = vpop.sfrf %1762
  %p1764 = scmp.eq.s32.totalorder %s1763, 0
  %p1765 = pneg %p1764
  %1767 = shalt.err (%p1765)

</llo_original>
